<compile_context>
chip_gen: v5e
topology: v5e:2x2
jax: 0.10.0
libtpu: 0.0.40
codegen_flags: <defaults>
</compile_context>

<pallas_src>
import math
import functools

import jax
import jax.numpy as jnp
from jax import lax
from jax.experimental import pallas as pl
from jax.experimental.pallas import tpu as pltpu

RMS_EPS = 1e-6
MLP_EXPANSION_FACTOR = 4
MASK_VALUE = -1e30                      # large finite negative (NaN-safe)
VMEM_LIMIT_BYTES = 40 * 1024 * 1024     # fits v7x 64 MiB/TC with headroom


def _cparams(sem):
    return pltpu.CompilerParams(dimension_semantics=sem,
                                vmem_limit_bytes=VMEM_LIMIT_BYTES)


def _tile(dim, pref, align):
    """Largest tile <= pref dividing dim, preferring (sublane/lane)-aligned.

    Returns the full dim when it already fits in the preference.
    """
    if dim <= pref:
        return dim
    t = (pref // align) * align
    while t >= align:                    # prefer aligned divisors
        if dim % t == 0:
            return t
        t -= align
    t = pref                             # fallback: any divisor (masked stores)
    while dim % t:
        t -= 1
    # TODO(synk): for awkward dims (e.g. vocab 50257) pad once at init to a
    # multiple of 128 instead of falling back to an unaligned divisor.
    return t


# --------------------------- streamed linear kernel ---------------------------
# One kernel covering every projection in the model:
#   optional fused input RMSNorm (requires tk == K),
#   streamed K-tiled matmul with f32 VMEM accumulator,
#   finalize: + bias, + residual, or SwiGLU gate, optional fused output RMSNorm
#   (requires tn == N).

def linear_kernel(*refs, has_bias, in_norm, out_norm, epilogue, eps):
    it = iter(refs)
    x_ref = next(it)
    w_ref = next(it)
    g_in_ref = next(it) if in_norm else None
    b_ref = next(it) if has_bias else None
    e_ref = next(it) if epilogue in ("residual", "swiglu") else None
    g_out_ref = next(it) if out_norm else None
    o_ref = next(it)
    acc_ref = next(it)

    k = pl.program_id(2)

    @pl.when(k == 0)
    def _init():
        acc_ref[...] = jnp.zeros_like(acc_ref)

    x = x_ref[...]
    if in_norm:
        xf = x.astype(jnp.float32)
        ms = jnp.mean(xf * xf, axis=-1, keepdims=True)
        x = (xf * lax.rsqrt(ms + eps)
             * g_in_ref[...].astype(jnp.float32)).astype(w_ref.dtype)

    acc_ref[...] += jnp.dot(x, w_ref[...], preferred_element_type=jnp.float32)

    @pl.when(k == pl.num_programs(2) - 1)
    def _finalize():
        y = acc_ref[...]
        if has_bias:
            y = y + b_ref[...].astype(jnp.float32)
        if epilogue == "residual":
            y = y + e_ref[...].astype(jnp.float32)
        elif epilogue == "swiglu":
            y = jax.nn.silu(y) * e_ref[...].astype(jnp.float32)
        if out_norm:
            ms = jnp.mean(y * y, axis=-1, keepdims=True)
            y = y * lax.rsqrt(ms + eps) * g_out_ref[...].astype(jnp.float32)
        o_ref[...] = y.astype(o_ref.dtype)


def pallas_linear(x, w, b=None, extra=None, in_gamma=None, out_gamma=None,
                  epilogue="plain", out_dtype=jnp.bfloat16,
                  tm_pref=512, tn_pref=512, tk_pref=1024):
    M, K = x.shape
    _, N = w.shape

    if in_gamma is not None:
        tk = K                              # fused input norm needs full rows
        tm_pref = min(tm_pref, 256)         # keep VMEM modest with tk = K
    else:
        tk = _tile(K, tk_pref, 128)
    if out_gamma is not None:
        tn = N                              # fused output norm needs full rows
        tm_pref = min(tm_pref, 128)
        if in_gamma is None:
            tk = _tile(K, min(tk_pref, 512), 128)
    else:
        tn = _tile(N, tn_pref, 128)
    tm = _tile(M, tm_pref, 8)

    grid = (M // tm, N // tn, K // tk)

    in_specs = [pl.BlockSpec((tm, tk), lambda i, j, k: (i, k)),
                pl.BlockSpec((tk, tn), lambda i, j, k: (k, j))]
    args = [x, w]
    if in_gamma is not None:
        in_specs.append(pl.BlockSpec((1, tk), lambda i, j, k: (0, 0)))
        args.append(in_gamma)
    if b is not None:
        in_specs.append(pl.BlockSpec((1, tn), lambda i, j, k: (0, j)))
        args.append(b)
    if extra is not None:
        in_specs.append(pl.BlockSpec((tm, tn), lambda i, j, k: (i, j)))
        args.append(extra)
    if out_gamma is not None:
        in_specs.append(pl.BlockSpec((1, tn), lambda i, j, k: (0, 0)))
        args.append(out_gamma)

    kernel = functools.partial(
        linear_kernel,
        has_bias=b is not None,
        in_norm=in_gamma is not None,
        out_norm=out_gamma is not None,
        epilogue=epilogue,
        eps=RMS_EPS)

    return pl.pallas_call(
        kernel,
        out_shape=jax.ShapeDtypeStruct((M, N), out_dtype),
        grid=grid,
        in_specs=in_specs,
        out_specs=pl.BlockSpec((tm, tn), lambda i, j, k: (i, j)),
        scratch_shapes=[pltpu.VMEM((tm, tn), jnp.float32)],
        compiler_params=_cparams(("parallel", "parallel", "arbitrary")),
    )(*args)


# ---------------------------- flash causal attention --------------------------

def flash_attn_kernel(q_ref, k_ref, v_ref, o_ref, m_ref, l_ref, acc_ref,
                      *, scale, tq, tk):
    qi = pl.program_id(1)
    ki = pl.program_id(2)

    @pl.when(ki == 0)
    def _init():
        m_ref[...] = jnp.full(m_ref.shape, MASK_VALUE, m_ref.dtype)
        l_ref[...] = jnp.zeros_like(l_ref)
        acc_ref[...] = jnp.zeros_like(acc_ref)

    def scores():
        # heads batched into one MXU-friendly einsum; contraction on hd for
        # both operands => no explicit K transpose.
        return jnp.einsum("hqd,hkd->hqk", q_ref[...], k_ref[...],
                          preferred_element_type=jnp.float32) * scale

    def online_update(s):
        m_prev = m_ref[...]
        m_new = jnp.maximum(m_prev, jnp.max(s, axis=-1, keepdims=True))
        alpha = jnp.exp(m_prev - m_new)
        p = jnp.exp(s - m_new)
        l_ref[...] = alpha * l_ref[...] + jnp.sum(p, axis=-1, keepdims=True)
        acc_ref[...] = alpha * acc_ref[...] + jnp.einsum(
            "hqk,hkd->hqd", p.astype(v_ref.dtype), v_ref[...],
            preferred_element_type=jnp.float32)
        m_ref[...] = m_new

    # Below-diagonal kv tiles are fully visible: no mask work at all.
    @pl.when(ki < qi)
    def _off_diag():
        online_update(scores())

    # Diagonal tile: apply the (tq, tk) causal mask and finalize. Tiles with
    # ki > qi never run compute and (thanks to the clamped kv index_map) never
    # trigger a DMA.
    @pl.when(ki == qi)
    def _diag_and_finalize():
        s = scores()
        rows = qi * tq + lax.broadcasted_iota(jnp.int32, (tq, tk), 0)
        cols = ki * tk + lax.broadcasted_iota(jnp.int32, (tq, tk), 1)
        s = jnp.where((rows >= cols)[None, :, :], s, MASK_VALUE)
        online_update(s)
        inv_l = pl.reciprocal(l_ref[...], approx=True)
        o_ref[...] = (acc_ref[...] * inv_l).astype(o_ref.dtype)


def pallas_flash_attention(q, k, v, *, tq_pref=128):
    # q, k, v: (B, n_heads, S, head_dim)
    B, nH, S, hd = q.shape
    tq = _tile(S, tq_pref, 8)
    tk = tq
    scale = 1.0 / math.sqrt(hd)

    q_spec = pl.BlockSpec((pl.Squeezed(), nH, tq, hd),
                          lambda b, qi, ki: (b, 0, qi, 0))
    # Clamp the kv block index to the diagonal: ki > qi reuses the previous
    # block index so Pallas issues no DMA for the skipped upper-triangle tiles.
    kv_spec = pl.BlockSpec((pl.Squeezed(), nH, tk, hd),
                           lambda b, qi, ki: (b, 0, jnp.minimum(ki, qi), 0))
    o_spec = pl.BlockSpec((pl.Squeezed(), nH, tq, hd),
                          lambda b, qi, ki: (b, 0, qi, 0))

    return pl.pallas_call(
        functools.partial(flash_attn_kernel, scale=scale, tq=tq, tk=tk),
        out_shape=jax.ShapeDtypeStruct((B, nH, S, hd), q.dtype),
        grid=(B, S // tq, S // tk),
        in_specs=[q_spec, kv_spec, kv_spec],
        out_specs=o_spec,
        scratch_shapes=[pltpu.VMEM((nH, tq, 1), jnp.float32),
                        pltpu.VMEM((nH, tq, 1), jnp.float32),
                        pltpu.VMEM((nH, tq, hd), jnp.float32)],
        compiler_params=_cparams(("parallel", "parallel", "arbitrary")),
    )(q, k, v)


# --------------------------------- parameters ---------------------------------

def init_params(key, vocab, block_size, H, n_layers):
    I = MLP_EXPANSION_FACTOR * H
    keys = iter(jax.random.split(key, 4 + 16 * n_layers))

    def w(shape, scale=0.02):           # MXU weights in bf16
        return (scale * jax.random.normal(next(keys), shape,
                                          jnp.float32)).astype(jnp.bfloat16)

    def bias(shape, scale=0.02):        # biases / gammas stay f32
        return scale * jax.random.normal(next(keys), shape, jnp.float32)

    def gamma():
        return 1.0 + 0.1 * jax.random.normal(next(keys), (1, H), jnp.float32)

    embed = w((vocab, H), 0.05)
    pos_enc = w((1, block_size, H), 0.02)
    final_gamma = gamma()

    layers = []
    for _ in range(n_layers):
        layers.append(dict(
            g1=gamma(),
            # Q/K/V projections packed once at init (same math as three
            # separate nn.Linear layers, never re-concatenated per forward).
            w_qkv=w((H, 3 * H)), b_qkv=bias((1, 3 * H)),
            wo=w((H, H)), bo=bias((1, H)),
            g2=gamma(),
            w1=w((H, I)), b1=bias((1, I)),
            # TODO(synk): the reference SwiGLU class is not given; using the
            # dim-preserving gated form silu(W_g h + b_g) * h so that the
            # Linear(4H, H) second layer's shapes match.
            wg=w((I, I)), bg=bias((1, I)),
            w2=w((I, H)), b2=bias((1, H)),
        ))
    return dict(embed=embed,
                embed_T=jnp.asarray(embed.T),   # one-time (H, V) copy for head
                pos_enc=pos_enc, final_gamma=final_gamma, layers=layers)


# ----------------------------------- forward -----------------------------------

def slopgpt_forward(input_idxs, params, n_heads):
    B, S = input_idxs.shape
    embed = params["embed"]
    H = embed.shape[1]
    hd = H // n_heads
    n_layers = len(params["layers"])

    # Embedding gather + positional add: XLA glue.
    x = embed[input_idxs] + params["pos_enc"][:, :S, :]
    x = x.reshape(B * S, H)

    for li, lp in enumerate(params["layers"]):
        last = li == n_layers - 1

        # --- attention sub-block (rmsnorm1 fused into the QKV projection) ---
        qkv = pallas_linear(x, lp["w_qkv"], lp["b_qkv"], in_gamma=lp["g1"])
        q, k, v = jnp.split(qkv, 3, axis=-1)

        # TODO(synk): head split/merge kept as XLA layout glue; fold into the
        # attention BlockSpecs once head_dim is a lane-aligned (>=128) slice.
        def to_heads(t):
            return t.reshape(B, S, n_heads, hd).transpose(0, 2, 1, 3)

        attn = pallas_flash_attention(to_heads(q), to_heads(k), to_heads(v))
        attn = attn.transpose(0, 2, 1, 3).reshape(B * S, H)
        attn_x = pallas_linear(attn, lp["wo"], lp["bo"],
                               extra=x, epilogue="residual")

        # --- MLP sub-block (pre-norm fused into w1; gate fused into wg;
        #     residual + (on last layer) final RMSNorm fused into w2) ---
        h1 = pallas_linear(attn_x, lp["w1"], lp["b1"], in_gamma=lp["g2"])
        act = pallas_linear(h1, lp["wg"], lp["bg"], extra=h1,
                            epilogue="swiglu")
        x = pallas_linear(act, lp["w2"], lp["b2"], extra=attn_x,
                          epilogue="residual",
                          out_gamma=params["final_gamma"] if last else None)

    # Tied LM head against the pre-transposed (H, V) embedding copy.
    logits = pallas_linear(x, params["embed_T"], out_dtype=jnp.float32)
    return logits.reshape(B, S, -1)
    # TODO(synk): kv-cache (use_cache=True) decode path not implemented.


# ------------------------------ pure-JAX reference ------------------------------

def _ref_rms(x, g):
    return x * lax.rsqrt(jnp.mean(x * x, -1, keepdims=True) + RMS_EPS) * g


def ref_forward(input_idxs, params, n_heads):
    f32 = lambda t: t.astype(jnp.float32)
    B, S = input_idxs.shape
    embed = f32(params["embed"])
    x = embed[input_idxs] + f32(params["pos_enc"])[:, :S, :]
    H = x.shape[-1]
    hd = H // n_heads
    causal = jnp.tril(jnp.ones((S, S), dtype=bool))
    for lp in params["layers"]:
        xn = _ref_rms(x, f32(lp["g1"]))
        qkv = xn @ f32(lp["w_qkv"]) + f32(lp["b_qkv"])
        q, k, v = jnp.split(qkv, 3, axis=-1)
        q = q.reshape(B, S, n_heads, hd).transpose(0, 2, 1, 3)
        k = k.reshape(B, S, n_heads, hd).transpose(0, 2, 1, 3)
        v = v.reshape(B, S, n_heads, hd).transpose(0, 2, 1, 3)
        s = jnp.einsum("bhqd,bhkd->bhqk", q, k) / math.sqrt(hd)
        s = jnp.where(causal[None, None], s, -jnp.inf)
        p = jax.nn.softmax(s, axis=-1)
        a = jnp.einsum("bhqk,bhkd->bhqd", p, v)
        a = a.transpose(0, 2, 1, 3).reshape(B, S, H)
        attn_x = x + a @ f32(lp["wo"]) + f32(lp["bo"])
        xn2 = _ref_rms(attn_x, f32(lp["g2"]))
        h1 = xn2 @ f32(lp["w1"]) + f32(lp["b1"])
        act = jax.nn.silu(h1 @ f32(lp["wg"]) + f32(lp["bg"])) * h1
        x = attn_x + act @ f32(lp["w2"]) + f32(lp["b2"])
    x = _ref_rms(x, f32(params["final_gamma"]))
    return x @ embed.T


# ------------------------------------- main -------------------------------------

if __name__ == "__main__":
    B, S = 2, 8
    H, n_heads, n_layers = 32, 4, 2
    vocab, block_size = 64, 16

    key = jax.random.PRNGKey(0)
    k_tok, k_par = jax.random.split(key)
    params = init_params(k_par, vocab, block_size, H, n_layers)
    input_idxs = jax.random.randint(k_tok, (B, S), 0, vocab, dtype=jnp.int32)

    fwd = jax.jit(functools.partial(slopgpt_forward, n_heads=n_heads))
    logits = jax.block_until_ready(fwd(input_idxs, params))

    ref = ref_forward(input_idxs, params, n_heads)
    assert logits.shape == (B, S, vocab)
    err = float(jnp.max(jnp.abs(logits.astype(jnp.float32) - ref)))
    assert jnp.allclose(logits.astype(jnp.float32), ref,
                        atol=3e-2, rtol=3e-2), f"mismatch vs reference: {err}"

    print("KERNEL_OK")
</pallas_src>

<mosaic_0001>
module attributes {stable_mosaic.version = 11 : i64} {
  func.func @flash_attn_kernel(%arg0: i32, %arg1: i32, %arg2: i32, %arg3: memref<1x4x8x8xbf16, #tpu.memory_space<vmem>>, %arg4: memref<1x4x8x8xbf16, #tpu.memory_space<vmem>>, %arg5: memref<1x4x8x8xbf16, #tpu.memory_space<vmem>>, %arg6: memref<1x4x8x8xbf16, #tpu.memory_space<vmem>>, %arg7: memref<4x8x1xf32, #tpu.memory_space<vmem>>, %arg8: memref<4x8x1xf32, #tpu.memory_space<vmem>>, %arg9: memref<4x8x8xf32, #tpu.memory_space<vmem>>) attributes {dimension_semantics = [#tpu.dimension_semantics<parallel>, #tpu.dimension_semantics<parallel>, #tpu.dimension_semantics<arbitrary>], iteration_bounds = array<i64: 2, 1, 1>, scalar_prefetch = 0 : i64, scratch_operands = 3 : i64, tpu.core_type = #tpu.core_type<tc>, window_params = [{transform_indices = @transform_0, window_bounds = array<i64: 1, 4, 8, 8>}, {transform_indices = @transform_1, window_bounds = array<i64: 1, 4, 8, 8>}, {transform_indices = @transform_2, window_bounds = array<i64: 1, 4, 8, 8>}, {transform_indices = @transform_3, window_bounds = array<i64: 1, 4, 8, 8>}]} {
    %c0_i32 = arith.constant 0 : i32
    %0 = arith.cmpi eq, %arg2, %c0_i32 : i32
    %1 = arith.extui %0 : i1 to i32
    %c0_i32_0 = arith.constant 0 : i32
    %2 = arith.cmpi ne, %1, %c0_i32_0 : i32
    scf.if %2 {
      %cst = arith.constant -1.000000e+30 : f32
      %9 = vector.broadcast %cst : f32 to vector<4x8x1xf32>
      %c0 = arith.constant 0 : index
      %c0_3 = arith.constant 0 : index
      %c0_4 = arith.constant 0 : index
      %10 = vector.load %arg7[%c0, %c0_3, %c0_4] : memref<4x8x1xf32, #tpu.memory_space<vmem>>, vector<4x8x1xf32>
      tpu.vector_store %arg7[%c0, %c0_3, %c0_4], %9 {strides = array<i32>} : memref<4x8x1xf32, #tpu.memory_space<vmem>>, vector<4x8x1xf32>,
      %cst_5 = arith.constant 0.000000e+00 : f32
      %11 = vector.broadcast %cst_5 : f32 to vector<4x8x1xf32>
      %c0_6 = arith.constant 0 : index
      %c0_7 = arith.constant 0 : index
      %c0_8 = arith.constant 0 : index
      %12 = vector.load %arg8[%c0_6, %c0_7, %c0_8] : memref<4x8x1xf32, #tpu.memory_space<vmem>>, vector<4x8x1xf32>
      tpu.vector_store %arg8[%c0_6, %c0_7, %c0_8], %11 {strides = array<i32>} : memref<4x8x1xf32, #tpu.memory_space<vmem>>, vector<4x8x1xf32>,
      %cst_9 = arith.constant 0.000000e+00 : f32
      %13 = vector.broadcast %cst_9 : f32 to vector<4x8x8xf32>
      %c0_10 = arith.constant 0 : index
      %c0_11 = arith.constant 0 : index
      %c0_12 = arith.constant 0 : index
      %14 = vector.load %arg9[%c0_10, %c0_11, %c0_12] : memref<4x8x8xf32, #tpu.memory_space<vmem>>, vector<4x8x8xf32>
      tpu.vector_store %arg9[%c0_10, %c0_11, %c0_12], %13 {strides = array<i32>} : memref<4x8x8xf32, #tpu.memory_space<vmem>>, vector<4x8x8xf32>,
    } else {
    }
    %3 = arith.cmpi slt, %arg2, %arg1 : i32
    %4 = arith.extui %3 : i1 to i32
    %c0_i32_1 = arith.constant 0 : i32
    %5 = arith.cmpi ne, %4, %c0_i32_1 : i32
    scf.if %5 {
      %c0 = arith.constant 0 : index
      %c0_3 = arith.constant 0 : index
      %c0_4 = arith.constant 0 : index
      %c0_5 = arith.constant 0 : index
      %9 = vector.load %arg3[%c0, %c0_3, %c0_4, %c0_5] : memref<1x4x8x8xbf16, #tpu.memory_space<vmem>>, vector<1x4x8x8xbf16>
      %10 = vector.shape_cast %9 : vector<1x4x8x8xbf16> to vector<4x8x8xbf16>
      %c0_6 = arith.constant 0 : index
      %c0_7 = arith.constant 0 : index
      %c0_8 = arith.constant 0 : index
      %c0_9 = arith.constant 0 : index
      %11 = vector.load %arg4[%c0_6, %c0_7, %c0_8, %c0_9] : memref<1x4x8x8xbf16, #tpu.memory_space<vmem>>, vector<1x4x8x8xbf16>
      %12 = vector.shape_cast %11 : vector<1x4x8x8xbf16> to vector<4x8x8xbf16>
      "tpu.trace_start"() <{level = 10 : i32, message = "hqd,hkd->hqk"}> : () -> ()
      %cst = arith.constant dense<0.000000e+00> : vector<4x8x8xf32>
      %13 = tpu.matmul %10, %12, %cst {dimension_numbers = #tpu.dot_dimension_numbers<[2], [2], [1], [1], [0, 0, 0, 1, 1, 1], [0], [0]>} : vector<4x8x8xbf16>, vector<4x8x8xbf16>, vector<4x8x8xf32> -> vector<4x8x8xf32>
      "tpu.trace_stop"() : () -> ()
      %cst_10 = arith.constant 0.353553385 : f32
      %14 = vector.broadcast %cst_10 : f32 to vector<4x8x8xf32>
      %15 = arith.mulf %13, %14 : vector<4x8x8xf32>
      %c0_11 = arith.constant 0 : index
      %c0_12 = arith.constant 0 : index
      %c0_13 = arith.constant 0 : index
      %16 = vector.load %arg7[%c0_11, %c0_12, %c0_13] : memref<4x8x1xf32, #tpu.memory_space<vmem>>, vector<4x8x1xf32>
      %cst_14 = arith.constant dense<0xFF800000> : vector<4x8xf32>
      %17 = vector.multi_reduction <maximumf>, %15, %cst_14 [2] : vector<4x8x8xf32> to vector<4x8xf32>
      %18 = vector.shape_cast %17 : vector<4x8xf32> to vector<4x8x1xf32>
      %19 = arith.maximumf %16, %18 : vector<4x8x1xf32>
      %20 = arith.subf %16, %19 : vector<4x8x1xf32>
      %21 = math.exp %20 : vector<4x8x1xf32>
      %22 = vector.broadcast %19 : vector<4x8x1xf32> to vector<4x8x8xf32>
      %23 = arith.subf %15, %22 : vector<4x8x8xf32>
      %24 = math.exp %23 : vector<4x8x8xf32>
      %c0_15 = arith.constant 0 : index
      %c0_16 = arith.constant 0 : index
      %c0_17 = arith.constant 0 : index
      %25 = vector.load %arg8[%c0_15, %c0_16, %c0_17] : memref<4x8x1xf32, #tpu.memory_space<vmem>>, vector<4x8x1xf32>
      %26 = arith.mulf %21, %25 : vector<4x8x1xf32>
      %cst_18 = arith.constant dense<0.000000e+00> : vector<4x8xf32>
      %27 = vector.multi_reduction <add>, %24, %cst_18 [2] : vector<4x8x8xf32> to vector<4x8xf32>
      %28 = vector.shape_cast %27 : vector<4x8xf32> to vector<4x8x1xf32>
      %29 = arith.addf %26, %28 : vector<4x8x1xf32>
      %c0_19 = arith.constant 0 : index
      %c0_20 = arith.constant 0 : index
      %c0_21 = arith.constant 0 : index
      %30 = vector.load %arg8[%c0_19, %c0_20, %c0_21] : memref<4x8x1xf32, #tpu.memory_space<vmem>>, vector<4x8x1xf32>
      tpu.vector_store %arg8[%c0_19, %c0_20, %c0_21], %29 {strides = array<i32>} : memref<4x8x1xf32, #tpu.memory_space<vmem>>, vector<4x8x1xf32>,
      %c0_22 = arith.constant 0 : index
      %c0_23 = arith.constant 0 : index
      %c0_24 = arith.constant 0 : index
      %31 = vector.load %arg9[%c0_22, %c0_23, %c0_24] : memref<4x8x8xf32, #tpu.memory_space<vmem>>, vector<4x8x8xf32>
      %32 = vector.broadcast %21 : vector<4x8x1xf32> to vector<4x8x8xf32>
      %33 = arith.mulf %32, %31 : vector<4x8x8xf32>
      %34 = arith.truncf %24 : vector<4x8x8xf32> to vector<4x8x8xbf16>
      %c0_25 = arith.constant 0 : index
      %c0_26 = arith.constant 0 : index
      %c0_27 = arith.constant 0 : index
      %c0_28 = arith.constant 0 : index
      %35 = vector.load %arg5[%c0_25, %c0_26, %c0_27, %c0_28] : memref<1x4x8x8xbf16, #tpu.memory_space<vmem>>, vector<1x4x8x8xbf16>
      %36 = vector.shape_cast %35 : vector<1x4x8x8xbf16> to vector<4x8x8xbf16>
      "tpu.trace_start"() <{level = 10 : i32, message = "hqk,hkd->hqd"}> : () -> ()
      %cst_29 = arith.constant dense<0.000000e+00> : vector<4x8x8xf32>
      %37 = tpu.matmul %34, %36, %cst_29 {dimension_numbers = #tpu.dot_dimension_numbers<[2], [1], [1], [2], [0, 0, 0, 1, 1, 2], [0], [0]>} : vector<4x8x8xbf16>, vector<4x8x8xbf16>, vector<4x8x8xf32> -> vector<4x8x8xf32>
      "tpu.trace_stop"() : () -> ()
      %38 = arith.addf %33, %37 : vector<4x8x8xf32>
      %c0_30 = arith.constant 0 : index
      %c0_31 = arith.constant 0 : index
      %c0_32 = arith.constant 0 : index
      %39 = vector.load %arg9[%c0_30, %c0_31, %c0_32] : memref<4x8x8xf32, #tpu.memory_space<vmem>>, vector<4x8x8xf32>
      tpu.vector_store %arg9[%c0_30, %c0_31, %c0_32], %38 {strides = array<i32>} : memref<4x8x8xf32, #tpu.memory_space<vmem>>, vector<4x8x8xf32>,
      %c0_33 = arith.constant 0 : index
      %c0_34 = arith.constant 0 : index
      %c0_35 = arith.constant 0 : index
      %40 = vector.load %arg7[%c0_33, %c0_34, %c0_35] : memref<4x8x1xf32, #tpu.memory_space<vmem>>, vector<4x8x1xf32>
      tpu.vector_store %arg7[%c0_33, %c0_34, %c0_35], %19 {strides = array<i32>} : memref<4x8x1xf32, #tpu.memory_space<vmem>>, vector<4x8x1xf32>,
    } else {
    }
    %6 = arith.cmpi eq, %arg2, %arg1 : i32
    %7 = arith.extui %6 : i1 to i32
    %c0_i32_2 = arith.constant 0 : i32
    %8 = arith.cmpi ne, %7, %c0_i32_2 : i32
    scf.if %8 {
      %c0 = arith.constant 0 : index
      %c0_3 = arith.constant 0 : index
      %c0_4 = arith.constant 0 : index
      %c0_5 = arith.constant 0 : index
      %9 = vector.load %arg3[%c0, %c0_3, %c0_4, %c0_5] : memref<1x4x8x8xbf16, #tpu.memory_space<vmem>>, vector<1x4x8x8xbf16>
      %10 = vector.shape_cast %9 : vector<1x4x8x8xbf16> to vector<4x8x8xbf16>
      %c0_6 = arith.constant 0 : index
      %c0_7 = arith.constant 0 : index
      %c0_8 = arith.constant 0 : index
      %c0_9 = arith.constant 0 : index
      %11 = vector.load %arg4[%c0_6, %c0_7, %c0_8, %c0_9] : memref<1x4x8x8xbf16, #tpu.memory_space<vmem>>, vector<1x4x8x8xbf16>
      %12 = vector.shape_cast %11 : vector<1x4x8x8xbf16> to vector<4x8x8xbf16>
      "tpu.trace_start"() <{level = 10 : i32, message = "hqd,hkd->hqk"}> : () -> ()
      %cst = arith.constant dense<0.000000e+00> : vector<4x8x8xf32>
      %13 = tpu.matmul %10, %12, %cst {dimension_numbers = #tpu.dot_dimension_numbers<[2], [2], [1], [1], [0, 0, 0, 1, 1, 1], [0], [0]>} : vector<4x8x8xbf16>, vector<4x8x8xbf16>, vector<4x8x8xf32> -> vector<4x8x8xf32>
      "tpu.trace_stop"() : () -> ()
      %cst_10 = arith.constant 0.353553385 : f32
      %14 = vector.broadcast %cst_10 : f32 to vector<4x8x8xf32>
      %15 = arith.mulf %13, %14 : vector<4x8x8xf32>
      %c8_i32 = arith.constant 8 : i32
      %16 = arith.muli %arg1, %c8_i32 : i32
      %17 = tpu.iota {dimensions = array<i32: 0>} : vector<8x8xi32>
      %18 = vector.broadcast %16 : i32 to vector<8x8xi32>
      %19 = arith.addi %18, %17 : vector<8x8xi32>
      %c8_i32_11 = arith.constant 8 : i32
      %20 = arith.muli %arg2, %c8_i32_11 : i32
      %21 = tpu.iota {dimensions = array<i32: 1>} : vector<8x8xi32>
      %22 = vector.broadcast %20 : i32 to vector<8x8xi32>
      %23 = arith.addi %22, %21 : vector<8x8xi32>
      %24 = arith.cmpi sge, %19, %23 : vector<8x8xi32>
      %25 = vector.shape_cast %24 : vector<8x8xi1> to vector<1x8x8xi1>
      %cst_12 = arith.constant -1.000000e+30 : f32
      %26 = vector.shape_cast %25 : vector<1x8x8xi1> to vector<1x8x8xi1>
      %27 = vector.broadcast %26 : vector<1x8x8xi1> to vector<4x8x8xi1>
      %28 = vector.broadcast %cst_12 : f32 to vector<4x8x8xf32>
      %29 = arith.select %27, %15, %28 : vector<4x8x8xi1>, vector<4x8x8xf32>
      %c0_13 = arith.constant 0 : index
      %c0_14 = arith.constant 0 : index
      %c0_15 = arith.constant 0 : index
      %30 = vector.load %arg7[%c0_13, %c0_14, %c0_15] : memref<4x8x1xf32, #tpu.memory_space<vmem>>, vector<4x8x1xf32>
      %cst_16 = arith.constant dense<0xFF800000> : vector<4x8xf32>
      %31 = vector.multi_reduction <maximumf>, %29, %cst_16 [2] : vector<4x8x8xf32> to vector<4x8xf32>
      %32 = vector.shape_cast %31 : vector<4x8xf32> to vector<4x8x1xf32>
      %33 = arith.maximumf %30, %32 : vector<4x8x1xf32>
      %34 = arith.subf %30, %33 : vector<4x8x1xf32>
      %35 = math.exp %34 : vector<4x8x1xf32>
      %36 = vector.broadcast %33 : vector<4x8x1xf32> to vector<4x8x8xf32>
      %37 = arith.subf %29, %36 : vector<4x8x8xf32>
      %38 = math.exp %37 : vector<4x8x8xf32>
      %c0_17 = arith.constant 0 : index
      %c0_18 = arith.constant 0 : index
      %c0_19 = arith.constant 0 : index
      %39 = vector.load %arg8[%c0_17, %c0_18, %c0_19] : memref<4x8x1xf32, #tpu.memory_space<vmem>>, vector<4x8x1xf32>
      %40 = arith.mulf %35, %39 : vector<4x8x1xf32>
      %cst_20 = arith.constant dense<0.000000e+00> : vector<4x8xf32>
      %41 = vector.multi_reduction <add>, %38, %cst_20 [2] : vector<4x8x8xf32> to vector<4x8xf32>
      %42 = vector.shape_cast %41 : vector<4x8xf32> to vector<4x8x1xf32>
      %43 = arith.addf %40, %42 : vector<4x8x1xf32>
      %c0_21 = arith.constant 0 : index
      %c0_22 = arith.constant 0 : index
      %c0_23 = arith.constant 0 : index
      %44 = vector.load %arg8[%c0_21, %c0_22, %c0_23] : memref<4x8x1xf32, #tpu.memory_space<vmem>>, vector<4x8x1xf32>
      tpu.vector_store %arg8[%c0_21, %c0_22, %c0_23], %43 {strides = array<i32>} : memref<4x8x1xf32, #tpu.memory_space<vmem>>, vector<4x8x1xf32>,
      %c0_24 = arith.constant 0 : index
      %c0_25 = arith.constant 0 : index
      %c0_26 = arith.constant 0 : index
      %45 = vector.load %arg9[%c0_24, %c0_25, %c0_26] : memref<4x8x8xf32, #tpu.memory_space<vmem>>, vector<4x8x8xf32>
      %46 = vector.broadcast %35 : vector<4x8x1xf32> to vector<4x8x8xf32>
      %47 = arith.mulf %46, %45 : vector<4x8x8xf32>
      %48 = arith.truncf %38 : vector<4x8x8xf32> to vector<4x8x8xbf16>
      %c0_27 = arith.constant 0 : index
      %c0_28 = arith.constant 0 : index
      %c0_29 = arith.constant 0 : index
      %c0_30 = arith.constant 0 : index
      %49 = vector.load %arg5[%c0_27, %c0_28, %c0_29, %c0_30] : memref<1x4x8x8xbf16, #tpu.memory_space<vmem>>, vector<1x4x8x8xbf16>
      %50 = vector.shape_cast %49 : vector<1x4x8x8xbf16> to vector<4x8x8xbf16>
      "tpu.trace_start"() <{level = 10 : i32, message = "hqk,hkd->hqd"}> : () -> ()
      %cst_31 = arith.constant dense<0.000000e+00> : vector<4x8x8xf32>
      %51 = tpu.matmul %48, %50, %cst_31 {dimension_numbers = #tpu.dot_dimension_numbers<[2], [1], [1], [2], [0, 0, 0, 1, 1, 2], [0], [0]>} : vector<4x8x8xbf16>, vector<4x8x8xbf16>, vector<4x8x8xf32> -> vector<4x8x8xf32>
      "tpu.trace_stop"() : () -> ()
      %52 = arith.addf %47, %51 : vector<4x8x8xf32>
      %c0_32 = arith.constant 0 : index
      %c0_33 = arith.constant 0 : index
      %c0_34 = arith.constant 0 : index
      %53 = vector.load %arg9[%c0_32, %c0_33, %c0_34] : memref<4x8x8xf32, #tpu.memory_space<vmem>>, vector<4x8x8xf32>
      tpu.vector_store %arg9[%c0_32, %c0_33, %c0_34], %52 {strides = array<i32>} : memref<4x8x8xf32, #tpu.memory_space<vmem>>, vector<4x8x8xf32>,
      %c0_35 = arith.constant 0 : index
      %c0_36 = arith.constant 0 : index
      %c0_37 = arith.constant 0 : index
      %54 = vector.load %arg7[%c0_35, %c0_36, %c0_37] : memref<4x8x1xf32, #tpu.memory_space<vmem>>, vector<4x8x1xf32>
      tpu.vector_store %arg7[%c0_35, %c0_36, %c0_37], %33 {strides = array<i32>} : memref<4x8x1xf32, #tpu.memory_space<vmem>>, vector<4x8x1xf32>,
      %c0_38 = arith.constant 0 : index
      %c0_39 = arith.constant 0 : index
      %c0_40 = arith.constant 0 : index
      %55 = vector.load %arg8[%c0_38, %c0_39, %c0_40] : memref<4x8x1xf32, #tpu.memory_space<vmem>>, vector<4x8x1xf32>
      %56 = tpu.reciprocal %55 {approx = true} : vector<4x8x1xf32> -> vector<4x8x1xf32>
      %c0_41 = arith.constant 0 : index
      %c0_42 = arith.constant 0 : index
      %c0_43 = arith.constant 0 : index
      %57 = vector.load %arg9[%c0_41, %c0_42, %c0_43] : memref<4x8x8xf32, #tpu.memory_space<vmem>>, vector<4x8x8xf32>
      %58 = vector.broadcast %56 : vector<4x8x1xf32> to vector<4x8x8xf32>
      %59 = arith.mulf %57, %58 : vector<4x8x8xf32>
      %60 = arith.truncf %59 : vector<4x8x8xf32> to vector<4x8x8xbf16>
      %c0_44 = arith.constant 0 : index
      %c0_45 = arith.constant 0 : index
      %c0_46 = arith.constant 0 : index
      %c0_47 = arith.constant 0 : index
      %61 = vector.load %arg6[%c0_44, %c0_45, %c0_46, %c0_47] : memref<1x4x8x8xbf16, #tpu.memory_space<vmem>>, vector<1x4x8x8xbf16>
      %62 = vector.shape_cast %61 : vector<1x4x8x8xbf16> to vector<4x8x8xbf16>
      %63 = vector.shape_cast %60 : vector<4x8x8xbf16> to vector<1x4x8x8xbf16>
      tpu.vector_store %arg6[%c0_44, %c0_45, %c0_46, %c0_47], %63 {strides = array<i32>} : memref<1x4x8x8xbf16, #tpu.memory_space<vmem>>, vector<1x4x8x8xbf16>,
    } else {
    }
    return
  }
  func.func @transform_0(%arg0: i32, %arg1: i32, %arg2: i32) -> (i32, i32, i32, i32) {
    %c0_i32 = arith.constant 0 : i32
    %c0_i32_0 = arith.constant 0 : i32
    %c0_i32_1 = arith.constant 0 : i32
    return %arg0, %c0_i32, %arg1, %c0_i32_0 : i32, i32, i32, i32
  }
  func.func @transform_1(%arg0: i32, %arg1: i32, %arg2: i32) -> (i32, i32, i32, i32) {
    %0 = arith.minsi %arg2, %arg1 : i32
    %c0_i32 = arith.constant 0 : i32
    %c0_i32_0 = arith.constant 0 : i32
    %c0_i32_1 = arith.constant 0 : i32
    return %arg0, %c0_i32, %0, %c0_i32_0 : i32, i32, i32, i32
  }
  func.func @transform_2(%arg0: i32, %arg1: i32, %arg2: i32) -> (i32, i32, i32, i32) {
    %0 = arith.minsi %arg2, %arg1 : i32
    %c0_i32 = arith.constant 0 : i32
    %c0_i32_0 = arith.constant 0 : i32
    %c0_i32_1 = arith.constant 0 : i32
    return %arg0, %c0_i32, %0, %c0_i32_0 : i32, i32, i32, i32
  }
  func.func @transform_3(%arg0: i32, %arg1: i32, %arg2: i32) -> (i32, i32, i32, i32) {
    %c0_i32 = arith.constant 0 : i32
    %c0_i32_0 = arith.constant 0 : i32
    %c0_i32_1 = arith.constant 0 : i32
    return %arg0, %c0_i32, %arg1, %c0_i32_0 : i32, i32, i32, i32
  }
}

module attributes {stable_mosaic.version = 11 : i64} {
  func.func @linear_kernel(%arg0: i32, %arg1: i32, %arg2: i32, %arg3: memref<16x32xbf16, #tpu.memory_space<vmem>>, %arg4: memref<32x96xbf16, #tpu.memory_space<vmem>>, %arg5: memref<1x32xf32, #tpu.memory_space<vmem>>, %arg6: memref<1x96xf32, #tpu.memory_space<vmem>>, %arg7: memref<16x96xbf16, #tpu.memory_space<vmem>>, %arg8: memref<16x96xf32, #tpu.memory_space<vmem>>) attributes {dimension_semantics = [#tpu.dimension_semantics<parallel>, #tpu.dimension_semantics<parallel>, #tpu.dimension_semantics<arbitrary>], iteration_bounds = array<i64: 1, 1, 1>, scalar_prefetch = 0 : i64, scratch_operands = 1 : i64, tpu.core_type = #tpu.core_type<tc>, window_params = [{transform_indices = @transform_0, window_bounds = array<i64: 16, 32>}, {transform_indices = @transform_1, window_bounds = array<i64: 32, 96>}, {pipeline_mode = #tpu.pipeline_mode<synchronous>, transform_indices = @transform_2, window_bounds = array<i64: 1, 32>}, {transform_indices = @transform_3, window_bounds = array<i64: 1, 96>}, {transform_indices = @transform_4, window_bounds = array<i64: 16, 96>}]} {
    %c0_i32 = arith.constant 0 : i32
    %0 = arith.cmpi eq, %arg2, %c0_i32 : i32
    %1 = arith.extui %0 : i1 to i32
    %c0_i32_0 = arith.constant 0 : i32
    %2 = arith.cmpi ne, %1, %c0_i32_0 : i32
    scf.if %2 {
      %cst_15 = arith.constant 0.000000e+00 : f32
      %27 = vector.broadcast %cst_15 : f32 to vector<16x96xf32>
      %c0_16 = arith.constant 0 : index
      %c0_17 = arith.constant 0 : index
      %28 = vector.load %arg8[%c0_16, %c0_17] : memref<16x96xf32, #tpu.memory_space<vmem>>, vector<16x96xf32>
      tpu.vector_store %arg8[%c0_16, %c0_17], %27 {strides = array<i32>} : memref<16x96xf32, #tpu.memory_space<vmem>>, vector<16x96xf32>,
    } else {
    }
    %c0 = arith.constant 0 : index
    %c0_1 = arith.constant 0 : index
    %3 = vector.load %arg3[%c0, %c0_1] : memref<16x32xbf16, #tpu.memory_space<vmem>>, vector<16x32xbf16>
    %4 = arith.extf %3 : vector<16x32xbf16> to vector<16x32xf32>
    %5 = arith.mulf %4, %4 : vector<16x32xf32>
    %cst = arith.constant dense<0.000000e+00> : vector<16xf32>
    %6 = vector.multi_reduction <add>, %5, %cst [1] : vector<16x32xf32> to vector<16xf32>
    %7 = vector.shape_cast %6 : vector<16xf32> to vector<16x1xf32>
    %cst_2 = arith.constant 3.200000e+01 : f32
    %8 = vector.broadcast %cst_2 : f32 to vector<16x1xf32>
    %9 = arith.divf %7, %8 : vector<16x1xf32>
    %cst_3 = arith.constant 9.99999997E-7 : f32
    %10 = vector.broadcast %cst_3 : f32 to vector<16x1xf32>
    %11 = arith.addf %9, %10 : vector<16x1xf32>
    %12 = math.rsqrt %11 : vector<16x1xf32>
    %13 = vector.broadcast %12 : vector<16x1xf32> to vector<16x32xf32>
    %14 = arith.mulf %4, %13 : vector<16x32xf32>
    %c0_4 = arith.constant 0 : index
    %c0_5 = arith.constant 0 : index
    %15 = vector.load %arg5[%c0_4, %c0_5] : memref<1x32xf32, #tpu.memory_space<vmem>>, vector<1x32xf32>
    %16 = vector.broadcast %15 : vector<1x32xf32> to vector<16x32xf32>
    %17 = arith.mulf %14, %16 : vector<16x32xf32>
    %18 = arith.truncf %17 : vector<16x32xf32> to vector<16x32xbf16>
    %c0_6 = arith.constant 0 : index
    %c0_7 = arith.constant 0 : index
    %19 = vector.load %arg8[%c0_6, %c0_7] : memref<16x96xf32, #tpu.memory_space<vmem>>, vector<16x96xf32>
    %c0_8 = arith.constant 0 : index
    %c0_9 = arith.constant 0 : index
    %20 = vector.load %arg4[%c0_8, %c0_9] : memref<32x96xbf16, #tpu.memory_space<vmem>>, vector<32x96xbf16>
    %cst_10 = arith.constant dense<0.000000e+00> : vector<16x96xf32>
    %21 = tpu.matmul %18, %20, %cst_10 {dimension_numbers = #tpu.dot_dimension_numbers<[1], [0], [0], [1], [0, 0, 1, 1], [], []>} : vector<16x32xbf16>, vector<32x96xbf16>, vector<16x96xf32> -> vector<16x96xf32>
    %22 = arith.addf %19, %21 : vector<16x96xf32>
    %c0_11 = arith.constant 0 : index
    %c0_12 = arith.constant 0 : index
    %23 = vector.load %arg8[%c0_11, %c0_12] : memref<16x96xf32, #tpu.memory_space<vmem>>, vector<16x96xf32>
    tpu.vector_store %arg8[%c0_11, %c0_12], %22 {strides = array<i32>} : memref<16x96xf32, #tpu.memory_space<vmem>>, vector<16x96xf32>,
    %c0_i32_13 = arith.constant 0 : i32
    %24 = arith.cmpi eq, %arg2, %c0_i32_13 : i32
    %25 = arith.extui %24 : i1 to i32
    %c0_i32_14 = arith.constant 0 : i32
    %26 = arith.cmpi ne, %25, %c0_i32_14 : i32
    scf.if %26 {
      %c0_15 = arith.constant 0 : index
      %c0_16 = arith.constant 0 : index
      %27 = vector.load %arg8[%c0_15, %c0_16] : memref<16x96xf32, #tpu.memory_space<vmem>>, vector<16x96xf32>
      %c0_17 = arith.constant 0 : index
      %c0_18 = arith.constant 0 : index
      %28 = vector.load %arg6[%c0_17, %c0_18] : memref<1x96xf32, #tpu.memory_space<vmem>>, vector<1x96xf32>
      %29 = vector.broadcast %28 : vector<1x96xf32> to vector<16x96xf32>
      %30 = arith.addf %27, %29 : vector<16x96xf32>
      %31 = arith.truncf %30 : vector<16x96xf32> to vector<16x96xbf16>
      %c0_19 = arith.constant 0 : index
      %c0_20 = arith.constant 0 : index
      %32 = vector.load %arg7[%c0_19, %c0_20] : memref<16x96xbf16, #tpu.memory_space<vmem>>, vector<16x96xbf16>
      tpu.vector_store %arg7[%c0_19, %c0_20], %31 {strides = array<i32>} : memref<16x96xbf16, #tpu.memory_space<vmem>>, vector<16x96xbf16>,
    } else {
    }
    return
  }
  func.func @transform_0(%arg0: i32, %arg1: i32, %arg2: i32) -> (i32, i32) {
    %c0_i32 = arith.constant 0 : i32
    return %arg0, %arg2 : i32, i32
  }
  func.func @transform_1(%arg0: i32, %arg1: i32, %arg2: i32) -> (i32, i32) {
    %c0_i32 = arith.constant 0 : i32
    return %arg2, %arg1 : i32, i32
  }
  func.func @transform_2(%arg0: i32, %arg1: i32, %arg2: i32) -> (i32, i32) {
    %c0_i32 = arith.constant 0 : i32
    %c0_i32_0 = arith.constant 0 : i32
    %c0_i32_1 = arith.constant 0 : i32
    return %c0_i32, %c0_i32_0 : i32, i32
  }
  func.func @transform_3(%arg0: i32, %arg1: i32, %arg2: i32) -> (i32, i32) {
    %c0_i32 = arith.constant 0 : i32
    %c0_i32_0 = arith.constant 0 : i32
    return %c0_i32, %arg1 : i32, i32
  }
  func.func @transform_4(%arg0: i32, %arg1: i32, %arg2: i32) -> (i32, i32) {
    %c0_i32 = arith.constant 0 : i32
    return %arg0, %arg1 : i32, i32
  }
}

module attributes {stable_mosaic.version = 11 : i64} {
  func.func @linear_kernel(%arg0: i32, %arg1: i32, %arg2: i32, %arg3: memref<16x32xbf16, #tpu.memory_space<vmem>>, %arg4: memref<32x32xbf16, #tpu.memory_space<vmem>>, %arg5: memref<1x32xf32, #tpu.memory_space<vmem>>, %arg6: memref<16x32xbf16, #tpu.memory_space<vmem>>, %arg7: memref<16x32xbf16, #tpu.memory_space<vmem>>, %arg8: memref<16x32xf32, #tpu.memory_space<vmem>>) attributes {dimension_semantics = [#tpu.dimension_semantics<parallel>, #tpu.dimension_semantics<parallel>, #tpu.dimension_semantics<arbitrary>], iteration_bounds = array<i64: 1, 1, 1>, scalar_prefetch = 0 : i64, scratch_operands = 1 : i64, tpu.core_type = #tpu.core_type<tc>, window_params = [{transform_indices = @transform_0, window_bounds = array<i64: 16, 32>}, {transform_indices = @transform_1, window_bounds = array<i64: 32, 32>}, {transform_indices = @transform_2, window_bounds = array<i64: 1, 32>}, {transform_indices = @transform_3, window_bounds = array<i64: 16, 32>}, {transform_indices = @transform_4, window_bounds = array<i64: 16, 32>}]} {
    %c0_i32 = arith.constant 0 : i32
    %0 = arith.cmpi eq, %arg2, %c0_i32 : i32
    %1 = arith.extui %0 : i1 to i32
    %c0_i32_0 = arith.constant 0 : i32
    %2 = arith.cmpi ne, %1, %c0_i32_0 : i32
    scf.if %2 {
      %cst_10 = arith.constant 0.000000e+00 : f32
      %12 = vector.broadcast %cst_10 : f32 to vector<16x32xf32>
      %c0_11 = arith.constant 0 : index
      %c0_12 = arith.constant 0 : index
      %13 = vector.load %arg8[%c0_11, %c0_12] : memref<16x32xf32, #tpu.memory_space<vmem>>, vector<16x32xf32>
      tpu.vector_store %arg8[%c0_11, %c0_12], %12 {strides = array<i32>} : memref<16x32xf32, #tpu.memory_space<vmem>>, vector<16x32xf32>,
    } else {
    }
    %c0 = arith.constant 0 : index
    %c0_1 = arith.constant 0 : index
    %3 = vector.load %arg3[%c0, %c0_1] : memref<16x32xbf16, #tpu.memory_space<vmem>>, vector<16x32xbf16>
    %c0_2 = arith.constant 0 : index
    %c0_3 = arith.constant 0 : index
    %4 = vector.load %arg8[%c0_2, %c0_3] : memref<16x32xf32, #tpu.memory_space<vmem>>, vector<16x32xf32>
    %c0_4 = arith.constant 0 : index
    %c0_5 = arith.constant 0 : index
    %5 = vector.load %arg4[%c0_4, %c0_5] : memref<32x32xbf16, #tpu.memory_space<vmem>>, vector<32x32xbf16>
    %cst = arith.constant dense<0.000000e+00> : vector<16x32xf32>
    %6 = tpu.matmul %3, %5, %cst {dimension_numbers = #tpu.dot_dimension_numbers<[1], [0], [0], [1], [0, 0, 1, 1], [], []>} : vector<16x32xbf16>, vector<32x32xbf16>, vector<16x32xf32> -> vector<16x32xf32>
    %7 = arith.addf %4, %6 : vector<16x32xf32>
    %c0_6 = arith.constant 0 : index
    %c0_7 = arith.constant 0 : index
    %8 = vector.load %arg8[%c0_6, %c0_7] : memref<16x32xf32, #tpu.memory_space<vmem>>, vector<16x32xf32>
    tpu.vector_store %arg8[%c0_6, %c0_7], %7 {strides = array<i32>} : memref<16x32xf32, #tpu.memory_space<vmem>>, vector<16x32xf32>,
    %c0_i32_8 = arith.constant 0 : i32
    %9 = arith.cmpi eq, %arg2, %c0_i32_8 : i32
    %10 = arith.extui %9 : i1 to i32
    %c0_i32_9 = arith.constant 0 : i32
    %11 = arith.cmpi ne, %10, %c0_i32_9 : i32
    scf.if %11 {
      %c0_10 = arith.constant 0 : index
      %c0_11 = arith.constant 0 : index
      %12 = vector.load %arg8[%c0_10, %c0_11] : memref<16x32xf32, #tpu.memory_space<vmem>>, vector<16x32xf32>
      %c0_12 = arith.constant 0 : index
      %c0_13 = arith.constant 0 : index
      %13 = vector.load %arg5[%c0_12, %c0_13] : memref<1x32xf32, #tpu.memory_space<vmem>>, vector<1x32xf32>
      %14 = vector.broadcast %13 : vector<1x32xf32> to vector<16x32xf32>
      %15 = arith.addf %12, %14 : vector<16x32xf32>
      %c0_14 = arith.constant 0 : index
      %c0_15 = arith.constant 0 : index
      %16 = vector.load %arg6[%c0_14, %c0_15] : memref<16x32xbf16, #tpu.memory_space<vmem>>, vector<16x32xbf16>
      %17 = arith.extf %16 : vector<16x32xbf16> to vector<16x32xf32>
      %18 = arith.addf %15, %17 : vector<16x32xf32>
      %19 = arith.truncf %18 : vector<16x32xf32> to vector<16x32xbf16>
      %c0_16 = arith.constant 0 : index
      %c0_17 = arith.constant 0 : index
      %20 = vector.load %arg7[%c0_16, %c0_17] : memref<16x32xbf16, #tpu.memory_space<vmem>>, vector<16x32xbf16>
      tpu.vector_store %arg7[%c0_16, %c0_17], %19 {strides = array<i32>} : memref<16x32xbf16, #tpu.memory_space<vmem>>, vector<16x32xbf16>,
    } else {
    }
    return
  }
  func.func @transform_0(%arg0: i32, %arg1: i32, %arg2: i32) -> (i32, i32) {
    %c0_i32 = arith.constant 0 : i32
    return %arg0, %arg2 : i32, i32
  }
  func.func @transform_1(%arg0: i32, %arg1: i32, %arg2: i32) -> (i32, i32) {
    %c0_i32 = arith.constant 0 : i32
    return %arg2, %arg1 : i32, i32
  }
  func.func @transform_2(%arg0: i32, %arg1: i32, %arg2: i32) -> (i32, i32) {
    %c0_i32 = arith.constant 0 : i32
    %c0_i32_0 = arith.constant 0 : i32
    return %c0_i32, %arg1 : i32, i32
  }
  func.func @transform_3(%arg0: i32, %arg1: i32, %arg2: i32) -> (i32, i32) {
    %c0_i32 = arith.constant 0 : i32
    return %arg0, %arg1 : i32, i32
  }
  func.func @transform_4(%arg0: i32, %arg1: i32, %arg2: i32) -> (i32, i32) {
    %c0_i32 = arith.constant 0 : i32
    return %arg0, %arg1 : i32, i32
  }
}

module attributes {stable_mosaic.version = 11 : i64} {
  func.func @linear_kernel(%arg0: i32, %arg1: i32, %arg2: i32, %arg3: memref<16x32xbf16, #tpu.memory_space<vmem>>, %arg4: memref<32x128xbf16, #tpu.memory_space<vmem>>, %arg5: memref<1x32xf32, #tpu.memory_space<vmem>>, %arg6: memref<1x128xf32, #tpu.memory_space<vmem>>, %arg7: memref<16x128xbf16, #tpu.memory_space<vmem>>, %arg8: memref<16x128xf32, #tpu.memory_space<vmem>>) attributes {dimension_semantics = [#tpu.dimension_semantics<parallel>, #tpu.dimension_semantics<parallel>, #tpu.dimension_semantics<arbitrary>], iteration_bounds = array<i64: 1, 1, 1>, scalar_prefetch = 0 : i64, scratch_operands = 1 : i64, tpu.core_type = #tpu.core_type<tc>, window_params = [{transform_indices = @transform_0, window_bounds = array<i64: 16, 32>}, {transform_indices = @transform_1, window_bounds = array<i64: 32, 128>}, {pipeline_mode = #tpu.pipeline_mode<synchronous>, transform_indices = @transform_2, window_bounds = array<i64: 1, 32>}, {transform_indices = @transform_3, window_bounds = array<i64: 1, 128>}, {transform_indices = @transform_4, window_bounds = array<i64: 16, 128>}]} {
    %c0_i32 = arith.constant 0 : i32
    %0 = arith.cmpi eq, %arg2, %c0_i32 : i32
    %1 = arith.extui %0 : i1 to i32
    %c0_i32_0 = arith.constant 0 : i32
    %2 = arith.cmpi ne, %1, %c0_i32_0 : i32
    scf.if %2 {
      %cst_15 = arith.constant 0.000000e+00 : f32
      %27 = vector.broadcast %cst_15 : f32 to vector<16x128xf32>
      %c0_16 = arith.constant 0 : index
      %c0_17 = arith.constant 0 : index
      %28 = vector.load %arg8[%c0_16, %c0_17] : memref<16x128xf32, #tpu.memory_space<vmem>>, vector<16x128xf32>
      tpu.vector_store %arg8[%c0_16, %c0_17], %27 {strides = array<i32>} : memref<16x128xf32, #tpu.memory_space<vmem>>, vector<16x128xf32>,
    } else {
    }
    %c0 = arith.constant 0 : index
    %c0_1 = arith.constant 0 : index
    %3 = vector.load %arg3[%c0, %c0_1] : memref<16x32xbf16, #tpu.memory_space<vmem>>, vector<16x32xbf16>
    %4 = arith.extf %3 : vector<16x32xbf16> to vector<16x32xf32>
    %5 = arith.mulf %4, %4 : vector<16x32xf32>
    %cst = arith.constant dense<0.000000e+00> : vector<16xf32>
    %6 = vector.multi_reduction <add>, %5, %cst [1] : vector<16x32xf32> to vector<16xf32>
    %7 = vector.shape_cast %6 : vector<16xf32> to vector<16x1xf32>
    %cst_2 = arith.constant 3.200000e+01 : f32
    %8 = vector.broadcast %cst_2 : f32 to vector<16x1xf32>
    %9 = arith.divf %7, %8 : vector<16x1xf32>
    %cst_3 = arith.constant 9.99999997E-7 : f32
    %10 = vector.broadcast %cst_3 : f32 to vector<16x1xf32>
    %11 = arith.addf %9, %10 : vector<16x1xf32>
    %12 = math.rsqrt %11 : vector<16x1xf32>
    %13 = vector.broadcast %12 : vector<16x1xf32> to vector<16x32xf32>
    %14 = arith.mulf %4, %13 : vector<16x32xf32>
    %c0_4 = arith.constant 0 : index
    %c0_5 = arith.constant 0 : index
    %15 = vector.load %arg5[%c0_4, %c0_5] : memref<1x32xf32, #tpu.memory_space<vmem>>, vector<1x32xf32>
    %16 = vector.broadcast %15 : vector<1x32xf32> to vector<16x32xf32>
    %17 = arith.mulf %14, %16 : vector<16x32xf32>
    %18 = arith.truncf %17 : vector<16x32xf32> to vector<16x32xbf16>
    %c0_6 = arith.constant 0 : index
    %c0_7 = arith.constant 0 : index
    %19 = vector.load %arg8[%c0_6, %c0_7] : memref<16x128xf32, #tpu.memory_space<vmem>>, vector<16x128xf32>
    %c0_8 = arith.constant 0 : index
    %c0_9 = arith.constant 0 : index
    %20 = vector.load %arg4[%c0_8, %c0_9] : memref<32x128xbf16, #tpu.memory_space<vmem>>, vector<32x128xbf16>
    %cst_10 = arith.constant dense<0.000000e+00> : vector<16x128xf32>
    %21 = tpu.matmul %18, %20, %cst_10 {dimension_numbers = #tpu.dot_dimension_numbers<[1], [0], [0], [1], [0, 0, 1, 1], [], []>} : vector<16x32xbf16>, vector<32x128xbf16>, vector<16x128xf32> -> vector<16x128xf32>
    %22 = arith.addf %19, %21 : vector<16x128xf32>
    %c0_11 = arith.constant 0 : index
    %c0_12 = arith.constant 0 : index
    %23 = vector.load %arg8[%c0_11, %c0_12] : memref<16x128xf32, #tpu.memory_space<vmem>>, vector<16x128xf32>
    tpu.vector_store %arg8[%c0_11, %c0_12], %22 {strides = array<i32>} : memref<16x128xf32, #tpu.memory_space<vmem>>, vector<16x128xf32>,
    %c0_i32_13 = arith.constant 0 : i32
    %24 = arith.cmpi eq, %arg2, %c0_i32_13 : i32
    %25 = arith.extui %24 : i1 to i32
    %c0_i32_14 = arith.constant 0 : i32
    %26 = arith.cmpi ne, %25, %c0_i32_14 : i32
    scf.if %26 {
      %c0_15 = arith.constant 0 : index
      %c0_16 = arith.constant 0 : index
      %27 = vector.load %arg8[%c0_15, %c0_16] : memref<16x128xf32, #tpu.memory_space<vmem>>, vector<16x128xf32>
      %c0_17 = arith.constant 0 : index
      %c0_18 = arith.constant 0 : index
      %28 = vector.load %arg6[%c0_17, %c0_18] : memref<1x128xf32, #tpu.memory_space<vmem>>, vector<1x128xf32>
      %29 = vector.broadcast %28 : vector<1x128xf32> to vector<16x128xf32>
      %30 = arith.addf %27, %29 : vector<16x128xf32>
      %31 = arith.truncf %30 : vector<16x128xf32> to vector<16x128xbf16>
      %c0_19 = arith.constant 0 : index
      %c0_20 = arith.constant 0 : index
      %32 = vector.load %arg7[%c0_19, %c0_20] : memref<16x128xbf16, #tpu.memory_space<vmem>>, vector<16x128xbf16>
      tpu.vector_store %arg7[%c0_19, %c0_20], %31 {strides = array<i32>} : memref<16x128xbf16, #tpu.memory_space<vmem>>, vector<16x128xbf16>,
    } else {
    }
    return
  }
  func.func @transform_0(%arg0: i32, %arg1: i32, %arg2: i32) -> (i32, i32) {
    %c0_i32 = arith.constant 0 : i32
    return %arg0, %arg2 : i32, i32
  }
  func.func @transform_1(%arg0: i32, %arg1: i32, %arg2: i32) -> (i32, i32) {
    %c0_i32 = arith.constant 0 : i32
    return %arg2, %arg1 : i32, i32
  }
  func.func @transform_2(%arg0: i32, %arg1: i32, %arg2: i32) -> (i32, i32) {
    %c0_i32 = arith.constant 0 : i32
    %c0_i32_0 = arith.constant 0 : i32
    %c0_i32_1 = arith.constant 0 : i32
    return %c0_i32, %c0_i32_0 : i32, i32
  }
  func.func @transform_3(%arg0: i32, %arg1: i32, %arg2: i32) -> (i32, i32) {
    %c0_i32 = arith.constant 0 : i32
    %c0_i32_0 = arith.constant 0 : i32
    return %c0_i32, %arg1 : i32, i32
  }
  func.func @transform_4(%arg0: i32, %arg1: i32, %arg2: i32) -> (i32, i32) {
    %c0_i32 = arith.constant 0 : i32
    return %arg0, %arg1 : i32, i32
  }
}

module attributes {stable_mosaic.version = 11 : i64} {
  func.func @linear_kernel(%arg0: i32, %arg1: i32, %arg2: i32, %arg3: memref<16x128xbf16, #tpu.memory_space<vmem>>, %arg4: memref<128x128xbf16, #tpu.memory_space<vmem>>, %arg5: memref<1x128xf32, #tpu.memory_space<vmem>>, %arg6: memref<16x128xbf16, #tpu.memory_space<vmem>>, %arg7: memref<16x128xbf16, #tpu.memory_space<vmem>>, %arg8: memref<16x128xf32, #tpu.memory_space<vmem>>) attributes {dimension_semantics = [#tpu.dimension_semantics<parallel>, #tpu.dimension_semantics<parallel>, #tpu.dimension_semantics<arbitrary>], iteration_bounds = array<i64: 1, 1, 1>, scalar_prefetch = 0 : i64, scratch_operands = 1 : i64, tpu.core_type = #tpu.core_type<tc>, window_params = [{transform_indices = @transform_0, window_bounds = array<i64: 16, 128>}, {transform_indices = @transform_1, window_bounds = array<i64: 128, 128>}, {transform_indices = @transform_2, window_bounds = array<i64: 1, 128>}, {transform_indices = @transform_3, window_bounds = array<i64: 16, 128>}, {transform_indices = @transform_4, window_bounds = array<i64: 16, 128>}]} {
    %c0_i32 = arith.constant 0 : i32
    %0 = arith.cmpi eq, %arg2, %c0_i32 : i32
    %1 = arith.extui %0 : i1 to i32
    %c0_i32_0 = arith.constant 0 : i32
    %2 = arith.cmpi ne, %1, %c0_i32_0 : i32
    scf.if %2 {
      %cst_10 = arith.constant 0.000000e+00 : f32
      %12 = vector.broadcast %cst_10 : f32 to vector<16x128xf32>
      %c0_11 = arith.constant 0 : index
      %c0_12 = arith.constant 0 : index
      %13 = vector.load %arg8[%c0_11, %c0_12] : memref<16x128xf32, #tpu.memory_space<vmem>>, vector<16x128xf32>
      tpu.vector_store %arg8[%c0_11, %c0_12], %12 {strides = array<i32>} : memref<16x128xf32, #tpu.memory_space<vmem>>, vector<16x128xf32>,
    } else {
    }
    %c0 = arith.constant 0 : index
    %c0_1 = arith.constant 0 : index
    %3 = vector.load %arg3[%c0, %c0_1] : memref<16x128xbf16, #tpu.memory_space<vmem>>, vector<16x128xbf16>
    %c0_2 = arith.constant 0 : index
    %c0_3 = arith.constant 0 : index
    %4 = vector.load %arg8[%c0_2, %c0_3] : memref<16x128xf32, #tpu.memory_space<vmem>>, vector<16x128xf32>
    %c0_4 = arith.constant 0 : index
    %c0_5 = arith.constant 0 : index
    %5 = vector.load %arg4[%c0_4, %c0_5] : memref<128x128xbf16, #tpu.memory_space<vmem>>, vector<128x128xbf16>
    %cst = arith.constant dense<0.000000e+00> : vector<16x128xf32>
    %6 = tpu.matmul %3, %5, %cst {dimension_numbers = #tpu.dot_dimension_numbers<[1], [0], [0], [1], [0, 0, 1, 1], [], []>} : vector<16x128xbf16>, vector<128x128xbf16>, vector<16x128xf32> -> vector<16x128xf32>
    %7 = arith.addf %4, %6 : vector<16x128xf32>
    %c0_6 = arith.constant 0 : index
    %c0_7 = arith.constant 0 : index
    %8 = vector.load %arg8[%c0_6, %c0_7] : memref<16x128xf32, #tpu.memory_space<vmem>>, vector<16x128xf32>
    tpu.vector_store %arg8[%c0_6, %c0_7], %7 {strides = array<i32>} : memref<16x128xf32, #tpu.memory_space<vmem>>, vector<16x128xf32>,
    %c0_i32_8 = arith.constant 0 : i32
    %9 = arith.cmpi eq, %arg2, %c0_i32_8 : i32
    %10 = arith.extui %9 : i1 to i32
    %c0_i32_9 = arith.constant 0 : i32
    %11 = arith.cmpi ne, %10, %c0_i32_9 : i32
    scf.if %11 {
      %c0_10 = arith.constant 0 : index
      %c0_11 = arith.constant 0 : index
      %12 = vector.load %arg8[%c0_10, %c0_11] : memref<16x128xf32, #tpu.memory_space<vmem>>, vector<16x128xf32>
      %c0_12 = arith.constant 0 : index
      %c0_13 = arith.constant 0 : index
      %13 = vector.load %arg5[%c0_12, %c0_13] : memref<1x128xf32, #tpu.memory_space<vmem>>, vector<1x128xf32>
      %14 = vector.broadcast %13 : vector<1x128xf32> to vector<16x128xf32>
      %15 = arith.addf %12, %14 : vector<16x128xf32>
      %16 = arith.negf %15 : vector<16x128xf32>
      %17 = math.exp %16 : vector<16x128xf32>
      %cst_14 = arith.constant 1.000000e+00 : f32
      %18 = vector.broadcast %cst_14 : f32 to vector<16x128xf32>
      %19 = arith.addf %18, %17 : vector<16x128xf32>
      %20 = arith.divf %18, %19 : vector<16x128xf32>
      %21 = arith.mulf %15, %20 : vector<16x128xf32>
      %c0_15 = arith.constant 0 : index
      %c0_16 = arith.constant 0 : index
      %22 = vector.load %arg6[%c0_15, %c0_16] : memref<16x128xbf16, #tpu.memory_space<vmem>>, vector<16x128xbf16>
      %23 = arith.extf %22 : vector<16x128xbf16> to vector<16x128xf32>
      %24 = arith.mulf %21, %23 : vector<16x128xf32>
      %25 = arith.truncf %24 : vector<16x128xf32> to vector<16x128xbf16>
      %c0_17 = arith.constant 0 : index
      %c0_18 = arith.constant 0 : index
      %26 = vector.load %arg7[%c0_17, %c0_18] : memref<16x128xbf16, #tpu.memory_space<vmem>>, vector<16x128xbf16>
      tpu.vector_store %arg7[%c0_17, %c0_18], %25 {strides = array<i32>} : memref<16x128xbf16, #tpu.memory_space<vmem>>, vector<16x128xbf16>,
    } else {
    }
    return
  }
  func.func @transform_0(%arg0: i32, %arg1: i32, %arg2: i32) -> (i32, i32) {
    %c0_i32 = arith.constant 0 : i32
    return %arg0, %arg2 : i32, i32
  }
  func.func @transform_1(%arg0: i32, %arg1: i32, %arg2: i32) -> (i32, i32) {
    %c0_i32 = arith.constant 0 : i32
    return %arg2, %arg1 : i32, i32
  }
  func.func @transform_2(%arg0: i32, %arg1: i32, %arg2: i32) -> (i32, i32) {
    %c0_i32 = arith.constant 0 : i32
    %c0_i32_0 = arith.constant 0 : i32
    return %c0_i32, %arg1 : i32, i32
  }
  func.func @transform_3(%arg0: i32, %arg1: i32, %arg2: i32) -> (i32, i32) {
    %c0_i32 = arith.constant 0 : i32
    return %arg0, %arg1 : i32, i32
  }
  func.func @transform_4(%arg0: i32, %arg1: i32, %arg2: i32) -> (i32, i32) {
    %c0_i32 = arith.constant 0 : i32
    return %arg0, %arg1 : i32, i32
  }
}

module attributes {stable_mosaic.version = 11 : i64} {
  func.func @linear_kernel(%arg0: i32, %arg1: i32, %arg2: i32, %arg3: memref<16x128xbf16, #tpu.memory_space<vmem>>, %arg4: memref<128x32xbf16, #tpu.memory_space<vmem>>, %arg5: memref<1x32xf32, #tpu.memory_space<vmem>>, %arg6: memref<16x32xbf16, #tpu.memory_space<vmem>>, %arg7: memref<16x32xbf16, #tpu.memory_space<vmem>>, %arg8: memref<16x32xf32, #tpu.memory_space<vmem>>) attributes {dimension_semantics = [#tpu.dimension_semantics<parallel>, #tpu.dimension_semantics<parallel>, #tpu.dimension_semantics<arbitrary>], iteration_bounds = array<i64: 1, 1, 1>, scalar_prefetch = 0 : i64, scratch_operands = 1 : i64, tpu.core_type = #tpu.core_type<tc>, window_params = [{transform_indices = @transform_0, window_bounds = array<i64: 16, 128>}, {transform_indices = @transform_1, window_bounds = array<i64: 128, 32>}, {transform_indices = @transform_2, window_bounds = array<i64: 1, 32>}, {transform_indices = @transform_3, window_bounds = array<i64: 16, 32>}, {transform_indices = @transform_4, window_bounds = array<i64: 16, 32>}]} {
    %c0_i32 = arith.constant 0 : i32
    %0 = arith.cmpi eq, %arg2, %c0_i32 : i32
    %1 = arith.extui %0 : i1 to i32
    %c0_i32_0 = arith.constant 0 : i32
    %2 = arith.cmpi ne, %1, %c0_i32_0 : i32
    scf.if %2 {
      %cst_10 = arith.constant 0.000000e+00 : f32
      %12 = vector.broadcast %cst_10 : f32 to vector<16x32xf32>
      %c0_11 = arith.constant 0 : index
      %c0_12 = arith.constant 0 : index
      %13 = vector.load %arg8[%c0_11, %c0_12] : memref<16x32xf32, #tpu.memory_space<vmem>>, vector<16x32xf32>
      tpu.vector_store %arg8[%c0_11, %c0_12], %12 {strides = array<i32>} : memref<16x32xf32, #tpu.memory_space<vmem>>, vector<16x32xf32>,
    } else {
    }
    %c0 = arith.constant 0 : index
    %c0_1 = arith.constant 0 : index
    %3 = vector.load %arg3[%c0, %c0_1] : memref<16x128xbf16, #tpu.memory_space<vmem>>, vector<16x128xbf16>
    %c0_2 = arith.constant 0 : index
    %c0_3 = arith.constant 0 : index
    %4 = vector.load %arg8[%c0_2, %c0_3] : memref<16x32xf32, #tpu.memory_space<vmem>>, vector<16x32xf32>
    %c0_4 = arith.constant 0 : index
    %c0_5 = arith.constant 0 : index
    %5 = vector.load %arg4[%c0_4, %c0_5] : memref<128x32xbf16, #tpu.memory_space<vmem>>, vector<128x32xbf16>
    %cst = arith.constant dense<0.000000e+00> : vector<16x32xf32>
    %6 = tpu.matmul %3, %5, %cst {dimension_numbers = #tpu.dot_dimension_numbers<[1], [0], [0], [1], [0, 0, 1, 1], [], []>} : vector<16x128xbf16>, vector<128x32xbf16>, vector<16x32xf32> -> vector<16x32xf32>
    %7 = arith.addf %4, %6 : vector<16x32xf32>
    %c0_6 = arith.constant 0 : index
    %c0_7 = arith.constant 0 : index
    %8 = vector.load %arg8[%c0_6, %c0_7] : memref<16x32xf32, #tpu.memory_space<vmem>>, vector<16x32xf32>
    tpu.vector_store %arg8[%c0_6, %c0_7], %7 {strides = array<i32>} : memref<16x32xf32, #tpu.memory_space<vmem>>, vector<16x32xf32>,
    %c0_i32_8 = arith.constant 0 : i32
    %9 = arith.cmpi eq, %arg2, %c0_i32_8 : i32
    %10 = arith.extui %9 : i1 to i32
    %c0_i32_9 = arith.constant 0 : i32
    %11 = arith.cmpi ne, %10, %c0_i32_9 : i32
    scf.if %11 {
      %c0_10 = arith.constant 0 : index
      %c0_11 = arith.constant 0 : index
      %12 = vector.load %arg8[%c0_10, %c0_11] : memref<16x32xf32, #tpu.memory_space<vmem>>, vector<16x32xf32>
      %c0_12 = arith.constant 0 : index
      %c0_13 = arith.constant 0 : index
      %13 = vector.load %arg5[%c0_12, %c0_13] : memref<1x32xf32, #tpu.memory_space<vmem>>, vector<1x32xf32>
      %14 = vector.broadcast %13 : vector<1x32xf32> to vector<16x32xf32>
      %15 = arith.addf %12, %14 : vector<16x32xf32>
      %c0_14 = arith.constant 0 : index
      %c0_15 = arith.constant 0 : index
      %16 = vector.load %arg6[%c0_14, %c0_15] : memref<16x32xbf16, #tpu.memory_space<vmem>>, vector<16x32xbf16>
      %17 = arith.extf %16 : vector<16x32xbf16> to vector<16x32xf32>
      %18 = arith.addf %15, %17 : vector<16x32xf32>
      %19 = arith.truncf %18 : vector<16x32xf32> to vector<16x32xbf16>
      %c0_16 = arith.constant 0 : index
      %c0_17 = arith.constant 0 : index
      %20 = vector.load %arg7[%c0_16, %c0_17] : memref<16x32xbf16, #tpu.memory_space<vmem>>, vector<16x32xbf16>
      tpu.vector_store %arg7[%c0_16, %c0_17], %19 {strides = array<i32>} : memref<16x32xbf16, #tpu.memory_space<vmem>>, vector<16x32xbf16>,
    } else {
    }
    return
  }
  func.func @transform_0(%arg0: i32, %arg1: i32, %arg2: i32) -> (i32, i32) {
    %c0_i32 = arith.constant 0 : i32
    return %arg0, %arg2 : i32, i32
  }
  func.func @transform_1(%arg0: i32, %arg1: i32, %arg2: i32) -> (i32, i32) {
    %c0_i32 = arith.constant 0 : i32
    return %arg2, %arg1 : i32, i32
  }
  func.func @transform_2(%arg0: i32, %arg1: i32, %arg2: i32) -> (i32, i32) {
    %c0_i32 = arith.constant 0 : i32
    %c0_i32_0 = arith.constant 0 : i32
    return %c0_i32, %arg1 : i32, i32
  }
  func.func @transform_3(%arg0: i32, %arg1: i32, %arg2: i32) -> (i32, i32) {
    %c0_i32 = arith.constant 0 : i32
    return %arg0, %arg1 : i32, i32
  }
  func.func @transform_4(%arg0: i32, %arg1: i32, %arg2: i32) -> (i32, i32) {
    %c0_i32 = arith.constant 0 : i32
    return %arg0, %arg1 : i32, i32
  }
}

module attributes {stable_mosaic.version = 11 : i64} {
  func.func @linear_kernel(%arg0: i32, %arg1: i32, %arg2: i32, %arg3: memref<16x128xbf16, #tpu.memory_space<vmem>>, %arg4: memref<128x32xbf16, #tpu.memory_space<vmem>>, %arg5: memref<1x32xf32, #tpu.memory_space<vmem>>, %arg6: memref<16x32xbf16, #tpu.memory_space<vmem>>, %arg7: memref<1x32xf32, #tpu.memory_space<vmem>>, %arg8: memref<16x32xbf16, #tpu.memory_space<vmem>>, %arg9: memref<16x32xf32, #tpu.memory_space<vmem>>) attributes {dimension_semantics = [#tpu.dimension_semantics<parallel>, #tpu.dimension_semantics<parallel>, #tpu.dimension_semantics<arbitrary>], iteration_bounds = array<i64: 1, 1, 1>, scalar_prefetch = 0 : i64, scratch_operands = 1 : i64, tpu.core_type = #tpu.core_type<tc>, window_params = [{transform_indices = @transform_0, window_bounds = array<i64: 16, 128>}, {transform_indices = @transform_1, window_bounds = array<i64: 128, 32>}, {transform_indices = @transform_2, window_bounds = array<i64: 1, 32>}, {transform_indices = @transform_3, window_bounds = array<i64: 16, 32>}, {pipeline_mode = #tpu.pipeline_mode<synchronous>, transform_indices = @transform_4, window_bounds = array<i64: 1, 32>}, {transform_indices = @transform_5, window_bounds = array<i64: 16, 32>}]} {
    %c0_i32 = arith.constant 0 : i32
    %0 = arith.cmpi eq, %arg2, %c0_i32 : i32
    %1 = arith.extui %0 : i1 to i32
    %c0_i32_0 = arith.constant 0 : i32
    %2 = arith.cmpi ne, %1, %c0_i32_0 : i32
    scf.if %2 {
      %cst_10 = arith.constant 0.000000e+00 : f32
      %12 = vector.broadcast %cst_10 : f32 to vector<16x32xf32>
      %c0_11 = arith.constant 0 : index
      %c0_12 = arith.constant 0 : index
      %13 = vector.load %arg9[%c0_11, %c0_12] : memref<16x32xf32, #tpu.memory_space<vmem>>, vector<16x32xf32>
      tpu.vector_store %arg9[%c0_11, %c0_12], %12 {strides = array<i32>} : memref<16x32xf32, #tpu.memory_space<vmem>>, vector<16x32xf32>,
    } else {
    }
    %c0 = arith.constant 0 : index
    %c0_1 = arith.constant 0 : index
    %3 = vector.load %arg3[%c0, %c0_1] : memref<16x128xbf16, #tpu.memory_space<vmem>>, vector<16x128xbf16>
    %c0_2 = arith.constant 0 : index
    %c0_3 = arith.constant 0 : index
    %4 = vector.load %arg9[%c0_2, %c0_3] : memref<16x32xf32, #tpu.memory_space<vmem>>, vector<16x32xf32>
    %c0_4 = arith.constant 0 : index
    %c0_5 = arith.constant 0 : index
    %5 = vector.load %arg4[%c0_4, %c0_5] : memref<128x32xbf16, #tpu.memory_space<vmem>>, vector<128x32xbf16>
    %cst = arith.constant dense<0.000000e+00> : vector<16x32xf32>
    %6 = tpu.matmul %3, %5, %cst {dimension_numbers = #tpu.dot_dimension_numbers<[1], [0], [0], [1], [0, 0, 1, 1], [], []>} : vector<16x128xbf16>, vector<128x32xbf16>, vector<16x32xf32> -> vector<16x32xf32>
    %7 = arith.addf %4, %6 : vector<16x32xf32>
    %c0_6 = arith.constant 0 : index
    %c0_7 = arith.constant 0 : index
    %8 = vector.load %arg9[%c0_6, %c0_7] : memref<16x32xf32, #tpu.memory_space<vmem>>, vector<16x32xf32>
    tpu.vector_store %arg9[%c0_6, %c0_7], %7 {strides = array<i32>} : memref<16x32xf32, #tpu.memory_space<vmem>>, vector<16x32xf32>,
    %c0_i32_8 = arith.constant 0 : i32
    %9 = arith.cmpi eq, %arg2, %c0_i32_8 : i32
    %10 = arith.extui %9 : i1 to i32
    %c0_i32_9 = arith.constant 0 : i32
    %11 = arith.cmpi ne, %10, %c0_i32_9 : i32
    scf.if %11 {
      %c0_10 = arith.constant 0 : index
      %c0_11 = arith.constant 0 : index
      %12 = vector.load %arg9[%c0_10, %c0_11] : memref<16x32xf32, #tpu.memory_space<vmem>>, vector<16x32xf32>
      %c0_12 = arith.constant 0 : index
      %c0_13 = arith.constant 0 : index
      %13 = vector.load %arg5[%c0_12, %c0_13] : memref<1x32xf32, #tpu.memory_space<vmem>>, vector<1x32xf32>
      %14 = vector.broadcast %13 : vector<1x32xf32> to vector<16x32xf32>
      %15 = arith.addf %12, %14 : vector<16x32xf32>
      %c0_14 = arith.constant 0 : index
      %c0_15 = arith.constant 0 : index
      %16 = vector.load %arg6[%c0_14, %c0_15] : memref<16x32xbf16, #tpu.memory_space<vmem>>, vector<16x32xbf16>
      %17 = arith.extf %16 : vector<16x32xbf16> to vector<16x32xf32>
      %18 = arith.addf %15, %17 : vector<16x32xf32>
      %19 = arith.mulf %18, %18 : vector<16x32xf32>
      %cst_16 = arith.constant dense<0.000000e+00> : vector<16xf32>
      %20 = vector.multi_reduction <add>, %19, %cst_16 [1] : vector<16x32xf32> to vector<16xf32>
      %21 = vector.shape_cast %20 : vector<16xf32> to vector<16x1xf32>
      %cst_17 = arith.constant 3.200000e+01 : f32
      %22 = vector.broadcast %cst_17 : f32 to vector<16x1xf32>
      %23 = arith.divf %21, %22 : vector<16x1xf32>
      %cst_18 = arith.constant 9.99999997E-7 : f32
      %24 = vector.broadcast %cst_18 : f32 to vector<16x1xf32>
      %25 = arith.addf %23, %24 : vector<16x1xf32>
      %26 = math.rsqrt %25 : vector<16x1xf32>
      %27 = vector.broadcast %26 : vector<16x1xf32> to vector<16x32xf32>
      %28 = arith.mulf %18, %27 : vector<16x32xf32>
      %c0_19 = arith.constant 0 : index
      %c0_20 = arith.constant 0 : index
      %29 = vector.load %arg7[%c0_19, %c0_20] : memref<1x32xf32, #tpu.memory_space<vmem>>, vector<1x32xf32>
      %30 = vector.broadcast %29 : vector<1x32xf32> to vector<16x32xf32>
      %31 = arith.mulf %28, %30 : vector<16x32xf32>
      %32 = arith.truncf %31 : vector<16x32xf32> to vector<16x32xbf16>
      %c0_21 = arith.constant 0 : index
      %c0_22 = arith.constant 0 : index
      %33 = vector.load %arg8[%c0_21, %c0_22] : memref<16x32xbf16, #tpu.memory_space<vmem>>, vector<16x32xbf16>
      tpu.vector_store %arg8[%c0_21, %c0_22], %32 {strides = array<i32>} : memref<16x32xbf16, #tpu.memory_space<vmem>>, vector<16x32xbf16>,
    } else {
    }
    return
  }
  func.func @transform_0(%arg0: i32, %arg1: i32, %arg2: i32) -> (i32, i32) {
    %c0_i32 = arith.constant 0 : i32
    return %arg0, %arg2 : i32, i32
  }
  func.func @transform_1(%arg0: i32, %arg1: i32, %arg2: i32) -> (i32, i32) {
    %c0_i32 = arith.constant 0 : i32
    return %arg2, %arg1 : i32, i32
  }
  func.func @transform_2(%arg0: i32, %arg1: i32, %arg2: i32) -> (i32, i32) {
    %c0_i32 = arith.constant 0 : i32
    %c0_i32_0 = arith.constant 0 : i32
    return %c0_i32, %arg1 : i32, i32
  }
  func.func @transform_3(%arg0: i32, %arg1: i32, %arg2: i32) -> (i32, i32) {
    %c0_i32 = arith.constant 0 : i32
    return %arg0, %arg1 : i32, i32
  }
  func.func @transform_4(%arg0: i32, %arg1: i32, %arg2: i32) -> (i32, i32) {
    %c0_i32 = arith.constant 0 : i32
    %c0_i32_0 = arith.constant 0 : i32
    %c0_i32_1 = arith.constant 0 : i32
    return %c0_i32, %c0_i32_0 : i32, i32
  }
  func.func @transform_5(%arg0: i32, %arg1: i32, %arg2: i32) -> (i32, i32) {
    %c0_i32 = arith.constant 0 : i32
    return %arg0, %arg1 : i32, i32
  }
}

module attributes {stable_mosaic.version = 11 : i64} {
  func.func @linear_kernel(%arg0: i32, %arg1: i32, %arg2: i32, %arg3: memref<16x32xbf16, #tpu.memory_space<vmem>>, %arg4: memref<32x64xbf16, #tpu.memory_space<vmem>>, %arg5: memref<16x64xf32, #tpu.memory_space<vmem>>, %arg6: memref<16x64xf32, #tpu.memory_space<vmem>>) attributes {dimension_semantics = [#tpu.dimension_semantics<parallel>, #tpu.dimension_semantics<parallel>, #tpu.dimension_semantics<arbitrary>], iteration_bounds = array<i64: 1, 1, 1>, scalar_prefetch = 0 : i64, scratch_operands = 1 : i64, tpu.core_type = #tpu.core_type<tc>, window_params = [{transform_indices = @transform_0, window_bounds = array<i64: 16, 32>}, {transform_indices = @transform_1, window_bounds = array<i64: 32, 64>}, {transform_indices = @transform_2, window_bounds = array<i64: 16, 64>}]} {
    %c0_i32 = arith.constant 0 : i32
    %0 = arith.cmpi eq, %arg2, %c0_i32 : i32
    %1 = arith.extui %0 : i1 to i32
    %c0_i32_0 = arith.constant 0 : i32
    %2 = arith.cmpi ne, %1, %c0_i32_0 : i32
    scf.if %2 {
      %cst_10 = arith.constant 0.000000e+00 : f32
      %12 = vector.broadcast %cst_10 : f32 to vector<16x64xf32>
      %c0_11 = arith.constant 0 : index
      %c0_12 = arith.constant 0 : index
      %13 = vector.load %arg6[%c0_11, %c0_12] : memref<16x64xf32, #tpu.memory_space<vmem>>, vector<16x64xf32>
      tpu.vector_store %arg6[%c0_11, %c0_12], %12 {strides = array<i32>} : memref<16x64xf32, #tpu.memory_space<vmem>>, vector<16x64xf32>,
    } else {
    }
    %c0 = arith.constant 0 : index
    %c0_1 = arith.constant 0 : index
    %3 = vector.load %arg3[%c0, %c0_1] : memref<16x32xbf16, #tpu.memory_space<vmem>>, vector<16x32xbf16>
    %c0_2 = arith.constant 0 : index
    %c0_3 = arith.constant 0 : index
    %4 = vector.load %arg6[%c0_2, %c0_3] : memref<16x64xf32, #tpu.memory_space<vmem>>, vector<16x64xf32>
    %c0_4 = arith.constant 0 : index
    %c0_5 = arith.constant 0 : index
    %5 = vector.load %arg4[%c0_4, %c0_5] : memref<32x64xbf16, #tpu.memory_space<vmem>>, vector<32x64xbf16>
    %cst = arith.constant dense<0.000000e+00> : vector<16x64xf32>
    %6 = tpu.matmul %3, %5, %cst {dimension_numbers = #tpu.dot_dimension_numbers<[1], [0], [0], [1], [0, 0, 1, 1], [], []>} : vector<16x32xbf16>, vector<32x64xbf16>, vector<16x64xf32> -> vector<16x64xf32>
    %7 = arith.addf %4, %6 : vector<16x64xf32>
    %c0_6 = arith.constant 0 : index
    %c0_7 = arith.constant 0 : index
    %8 = vector.load %arg6[%c0_6, %c0_7] : memref<16x64xf32, #tpu.memory_space<vmem>>, vector<16x64xf32>
    tpu.vector_store %arg6[%c0_6, %c0_7], %7 {strides = array<i32>} : memref<16x64xf32, #tpu.memory_space<vmem>>, vector<16x64xf32>,
    %c0_i32_8 = arith.constant 0 : i32
    %9 = arith.cmpi eq, %arg2, %c0_i32_8 : i32
    %10 = arith.extui %9 : i1 to i32
    %c0_i32_9 = arith.constant 0 : i32
    %11 = arith.cmpi ne, %10, %c0_i32_9 : i32
    scf.if %11 {
      %c0_10 = arith.constant 0 : index
      %c0_11 = arith.constant 0 : index
      %12 = vector.load %arg6[%c0_10, %c0_11] : memref<16x64xf32, #tpu.memory_space<vmem>>, vector<16x64xf32>
      %c0_12 = arith.constant 0 : index
      %c0_13 = arith.constant 0 : index
      %13 = vector.load %arg5[%c0_12, %c0_13] : memref<16x64xf32, #tpu.memory_space<vmem>>, vector<16x64xf32>
      tpu.vector_store %arg5[%c0_12, %c0_13], %12 {strides = array<i32>} : memref<16x64xf32, #tpu.memory_space<vmem>>, vector<16x64xf32>,
    } else {
    }
    return
  }
  func.func @transform_0(%arg0: i32, %arg1: i32, %arg2: i32) -> (i32, i32) {
    %c0_i32 = arith.constant 0 : i32
    return %arg0, %arg2 : i32, i32
  }
  func.func @transform_1(%arg0: i32, %arg1: i32, %arg2: i32) -> (i32, i32) {
    %c0_i32 = arith.constant 0 : i32
    return %arg2, %arg1 : i32, i32
  }
  func.func @transform_2(%arg0: i32, %arg1: i32, %arg2: i32) -> (i32, i32) {
    %c0_i32 = arith.constant 0 : i32
    return %arg0, %arg1 : i32, i32
  }
}

</mosaic_0001>

<llo_original>
// kernel: slopgpt_forward.15
$region0: #{slopgpt_forward.15}
  #allocation0 [shape = 'u32[]', space=smem, size = 0x4, offset = 0x4, fixed_abs, tag = 'smem constant byte address 0x4 - core index']
  #allocation1 [shape = 'u32[72,128]{1,0:T(1,128)}', space=vmem, size = 0x9000, scoped, tag = 'internal scratch']
  #allocation2 [shape = 'f32[16,32]{1,0:T(8,128)}', space=vmem, size = 0x2000, scoped, tag = 'scratch operand']
  %s0 = inlined_call_operand.vmem [shape: bf16[16,32], index: 0, kind: input, shape index: {}]
  %s1 = inlined_call_operand.vmem [shape: bf16[32,32], index: 1, kind: input, shape index: {}]
  %s2 = inlined_call_operand.vmem [shape: f32[1,32], index: 2, kind: input, shape index: {}]
  %s3 = inlined_call_operand.vmem [shape: bf16[16,32], index: 3, kind: input, shape index: {}]
  %s4 = inlined_call_operand.vmem [shape: bf16[16,32], index: 4, kind: output, shape index: {}]
  %s5 = sld [smem:[#allocation0]]
  $region34: #{slopgpt_forward.15} parent=0
    _
  %s7 = ssub.s32 1, %s5
  %s8 = scalar_select 0, %s7, %s5
  // Predicated region
  $region2: #{slopgpt_forward.15} parent=0 // pred_check
    _
  $region3: #{slopgpt_forward.15} parent=0 // pred_check_branch
    %10 = sbr.rel (0) target = $region5
  $region4: #{slopgpt_forward.15} parent=0 // pred_region
    _
  $region5: #{slopgpt_forward.15} parent=0 // pred_fallthru
    _
  // Predicated region
  $region6: #{slopgpt_forward.15} parent=0 // pred_check
    _
  $region7: #{slopgpt_forward.15} parent=0 // pred_check_branch
    %12 = sbr.rel (0) target = $region9
  $region8: #{slopgpt_forward.15} parent=0 // pred_region
    _
  $region9: #{slopgpt_forward.15} parent=0 // pred_fallthru
    _
  // Predicated region
  $region10: #{slopgpt_forward.15} parent=0 // pred_check
    _
  $region11: #{slopgpt_forward.15} parent=0 // pred_check_branch
    %14 = sbr.rel (0) target = $region13
  $region12: #{slopgpt_forward.15} parent=0 // pred_region
    _
  $region13: #{slopgpt_forward.15} parent=0 // pred_fallthru
    _
  // Predicated region
  $region14: #{slopgpt_forward.15} parent=0 // pred_check
    _
  $region15: #{slopgpt_forward.15} parent=0 // pred_check_branch
    %16 = sbr.rel (0) target = $region17
  $region16: #{slopgpt_forward.15} parent=0 // pred_region
    _
  $region17: #{slopgpt_forward.15} parent=0 // pred_fallthru
    _
  %p18 = scmp.eq.s32.totalorder 0, 0
  // Predicated region
  $region18: #{slopgpt_forward.15} parent=0 // pred_check
    %p19 = pneg %p18
  $region19: #{slopgpt_forward.15} parent=0 // pred_check_branch
    %21 = sbr.rel (%p19) target = $region21
  $region20: #{slopgpt_forward.15} parent=0 // pred_region
    %vm22 = vcmask 261120
    %23 = vst.msk [vmem:[#allocation2] sm:$0xff] %vm22, 0.0
    %24 = vst.msk [vmem:[#allocation2 + $0x8] sm:$0xff] %vm22, 0.0
  $region21: #{slopgpt_forward.15} parent=0 // pred_fallthru
    _
  %v25 = vld [vmem:[%s0] sm:$0xf]
  %v26 = vld [vmem:[%s0 + $0x4] sm:$0xf]
  %v27 = vld [vmem:[#allocation2] sm:$0xff]
  %v28 = vld [vmem:[#allocation2 + $0x8] sm:$0xff]
  %v29 = vld [vmem:[%s1] sm:$0xf]
  %v30 = vld [vmem:[%s1 + $0x4] sm:$0xf]
  %v31 = vld [vmem:[%s1 + $0x8] sm:$0xf]
  %v32 = vld [vmem:[%s1 + $0xc] sm:$0xf]
  %v35 = vunpack.c.l.b16 %v25
  %v36 = vunpack.c.l.b16 %v26
  %v37 = vpack.c.b16 %v36, %v35
  %v42 = vunpack.c.l.b16 %v29
  %v43 = vunpack.c.l.b16 %v30
  %v44 = vunpack.c.l.b16 %v31
  %v45 = vunpack.c.l.b16 %v32
  %v46 = vpack.c.b16 %v43, %v42
  %v47 = vpack.c.b16 %v45, %v44
  %vm50 = vcmask 261120
  %v52 = vsel %vm50, %v37, 0
  %54 = vmatpush.bf16.msra.mxu0 0
  %55 = vmatpush.bf16.msra.mxu0 0
  %56 = vmatpush.bf16.msra.mxu0 0
  %57 = vmatpush.bf16.msra.mxu0 0
  %58 = vmatpush.bf16.msra.mxu0 0
  %59 = vmatpush.bf16.msra.mxu0 0
  %60 = vmatpush.bf16.msra.mxu0 %v47
  %61 = vmatpush.bf16.msra.mxu0 %v46
  %62 = vmatmul.bf16.gmra.mxu0 %v52
  %v63 = vpop.f32.mrf.mxu0
  %v64 = vadd.f32 0.0, %v63
  %v65 = vpop.f32.mrf.mxu0
  %v66 = vadd.f32 0.0, %v65
  %67 = vdwg.mxu0
  %v68 = vadd.f32 %v27, %v64
  %v69 = vadd.f32 %v28, %v66
  %70 = vst.msk [vmem:[#allocation2] sm:$0xff] %vm50, %v68
  %71 = vst.msk [vmem:[#allocation2 + $0x8] sm:$0xff] %vm50, %v69
  // Predicated region
  $region22: #{slopgpt_forward.15} parent=0 // pred_check
    %p72 = pneg %p18
  $region23: #{slopgpt_forward.15} parent=0 // pred_check_branch
    %74 = sbr.rel (%p72) target = $region25
  $region24: #{slopgpt_forward.15} parent=0 // pred_region
    %v75 = vld [vmem:[#allocation2] sm:$0xff]
    %v76 = vld [vmem:[#allocation2 + $0x8] sm:$0xff]
    %v77 = vld [vmem:[%s2] sm:$0x1]
    %v79 = vperm.slane %v77, 0
    %v81 = vadd.f32 %v75, %v79
    %v82 = vadd.f32 %v76, %v79
    %v83 = vld [vmem:[%s3] sm:$0xf]
    %v84 = vld [vmem:[%s3 + $0x4] sm:$0xf]
    %v85 = vunpack.c.l.bf16 %v83
    %v86 = vunpack.c.l.bf16 %v84
    %v87 = vadd.f32 %v81, %v85
    %v88 = vadd.f32 %v82, %v86
    %v89 = vpack.c.bf16 %v87, %v87
    %v90 = vpack.c.bf16 %v88, %v88
    %vm91 = vcmask 257024
    %92 = vst.msk [vmem:[%s4] sm:$0xf] %vm91, %v89
    %93 = vst.msk [vmem:[%s4 + $0x4] sm:$0xf] %vm91, %v90
  $region25: #{slopgpt_forward.15} parent=0 // pred_fallthru
    _
  // Predicated region
  $region26: #{slopgpt_forward.15} parent=0 // pred_check
    _
  $region27: #{slopgpt_forward.15} parent=0 // pred_check_branch
    %95 = sbr.rel (0) target = $region29
  $region28: #{slopgpt_forward.15} parent=0 // pred_region
    _
  $region29: #{slopgpt_forward.15} parent=0 // pred_fallthru
    _
  // Predicated region
  $region30: #{slopgpt_forward.15} parent=0 // pred_check
    _
  $region31: #{slopgpt_forward.15} parent=0 // pred_check_branch
    %97 = sbr.rel (0) target = $region33
  $region32: #{slopgpt_forward.15} parent=0 // pred_region
    _
  $region33: #{slopgpt_forward.15} parent=0 // pred_fallthru
    _

// kernel: slopgpt_forward.13
$region0: #{slopgpt_forward.13}
  #allocation0 [shape = 'u32[]', space=smem, size = 0x4, offset = 0x4, fixed_abs, tag = 'smem constant byte address 0x4 - core index']
  #allocation1 [shape = 'u32[72,128]{1,0:T(1,128)}', space=vmem, size = 0x9000, scoped, tag = 'internal scratch']
  #allocation2 [shape = 'f32[16,96]{1,0:T(8,128)}', space=vmem, size = 0x2000, scoped, tag = 'scratch operand']
  %s0 = inlined_call_operand.vmem [shape: bf16[16,32], index: 0, kind: input, shape index: {}]
  %s1 = inlined_call_operand.vmem [shape: bf16[32,96], index: 1, kind: input, shape index: {}]
  %s2 = inlined_call_operand.vmem [shape: f32[1,32], index: 2, kind: input, shape index: {}]
  %s3 = inlined_call_operand.vmem [shape: f32[1,96], index: 3, kind: input, shape index: {}]
  %s4 = inlined_call_operand.vmem [shape: bf16[16,96], index: 4, kind: output, shape index: {}]
  %s5 = sld [smem:[#allocation0]]
  $region34: #{slopgpt_forward.13} parent=0
    _
  %s7 = ssub.s32 1, %s5
  %s8 = scalar_select 0, %s7, %s5
  // Predicated region
  $region2: #{slopgpt_forward.13} parent=0 // pred_check
    _
  $region3: #{slopgpt_forward.13} parent=0 // pred_check_branch
    %10 = sbr.rel (0) target = $region5
  $region4: #{slopgpt_forward.13} parent=0 // pred_region
    _
  $region5: #{slopgpt_forward.13} parent=0 // pred_fallthru
    _
  // Predicated region
  $region6: #{slopgpt_forward.13} parent=0 // pred_check
    _
  $region7: #{slopgpt_forward.13} parent=0 // pred_check_branch
    %12 = sbr.rel (0) target = $region9
  $region8: #{slopgpt_forward.13} parent=0 // pred_region
    _
  $region9: #{slopgpt_forward.13} parent=0 // pred_fallthru
    _
  // Predicated region
  $region10: #{slopgpt_forward.13} parent=0 // pred_check
    _
  $region11: #{slopgpt_forward.13} parent=0 // pred_check_branch
    %14 = sbr.rel (0) target = $region13
  $region12: #{slopgpt_forward.13} parent=0 // pred_region
    _
  $region13: #{slopgpt_forward.13} parent=0 // pred_fallthru
    _
  // Predicated region
  $region14: #{slopgpt_forward.13} parent=0 // pred_check
    _
  $region15: #{slopgpt_forward.13} parent=0 // pred_check_branch
    %16 = sbr.rel (0) target = $region17
  $region16: #{slopgpt_forward.13} parent=0 // pred_region
    _
  $region17: #{slopgpt_forward.13} parent=0 // pred_fallthru
    _
  %p18 = scmp.eq.s32.totalorder 0, 0
  // Predicated region
  $region18: #{slopgpt_forward.13} parent=0 // pred_check
    %p19 = pneg %p18
  $region19: #{slopgpt_forward.13} parent=0 // pred_check_branch
    %21 = sbr.rel (%p19) target = $region21
  $region20: #{slopgpt_forward.13} parent=0 // pred_region
    %vm22 = vcmask 785408
    %23 = vst.msk [vmem:[#allocation2] sm:$0xff] %vm22, 0.0
    %24 = vst.msk [vmem:[#allocation2 + $0x8] sm:$0xff] %vm22, 0.0
  $region21: #{slopgpt_forward.13} parent=0 // pred_fallthru
    _
  %v25 = vld [vmem:[%s0] sm:$0xf]
  %v26 = vld [vmem:[%s0 + $0x4] sm:$0xf]
  %v27 = vunpack.c.l.bf16 %v25
  %v28 = vunpack.c.l.bf16 %v26
  %v29 = vmul.f32 %v27, %v27
  %v30 = vmul.f32 %v28, %v28
  %vm31 = vcmask 261120
  %v32 = vsel %vm31, %v29, 0.0
  %33 = vadd.xlane.f32.xlu0 %v32
  %v34 = vpop.xlane.xlu0 %33
  %v35 = vsel %vm31, %v30, 0.0
  %36 = vadd.xlane.f32.xlu0 %v35
  %v37 = vpop.xlane.xlu0 %36
  %v38 = vrcp.pop 32.0
  %v39 = vmul.f32 32.0, %v38
  %v40 = vsub.f32 1.0, %v39
  %v41 = vmul.f32 %v38, %v40
  %v42 = vadd.f32 %v38, %v41
  %vm43 = vweird.f32 %v38
  %v44 = vsel %vm43, %v38, %v42
  %v45 = vmul.f32 %v34, %v44
  %v46 = vmul.f32 %v37, %v44
  %v47 = vadd.f32 %v45, 1e-06
  %v48 = vadd.f32 %v46, 1e-06
  %v49 = vrsqrt.pop %v47
  %v50 = vmul.f32 %v49, %v47
  %v51 = vmul.f32 %v50, %v49
  %v52 = vmul.f32 0.5, %v51
  %v53 = vsub.f32 1.5, %v52
  %v54 = vmul.f32 %v49, %v53
  %vm55 = vweird.f32 %v47
  %vm56 = vweird.f32 %v49
  %vm57 = vmor %vm55, %vm56
  %v58 = vsel %vm57, %v49, %v54
  %v59 = vrsqrt.pop %v48
  %v60 = vmul.f32 %v59, %v48
  %v61 = vmul.f32 %v60, %v59
  %v62 = vmul.f32 0.5, %v61
  %v63 = vsub.f32 1.5, %v62
  %v64 = vmul.f32 %v59, %v63
  %vm65 = vweird.f32 %v48
  %vm66 = vweird.f32 %v59
  %vm67 = vmor %vm65, %vm66
  %v68 = vsel %vm67, %v59, %v64
  %v69 = vmul.f32 %v27, %v58
  %v70 = vmul.f32 %v28, %v68
  %v71 = vld [vmem:[%s2] sm:$0x1]
  %v73 = vperm.slane %v71, 0
  %v75 = vmul.f32 %v69, %v73
  %v76 = vmul.f32 %v70, %v73
  %v77 = vpack.c.bf16 %v76, %v75
  %v78 = vld [vmem:[#allocation2] sm:$0xff]
  %v79 = vld [vmem:[#allocation2 + $0x8] sm:$0xff]
  %v80 = vld [vmem:[%s1] sm:$0xf]
  %v81 = vld [vmem:[%s1 + $0x4] sm:$0xf]
  %v82 = vld [vmem:[%s1 + $0x8] sm:$0xf]
  %v83 = vld [vmem:[%s1 + $0xc] sm:$0xf]
  %v88 = vunpack.c.l.b16 %v80
  %v89 = vunpack.c.l.b16 %v81
  %v90 = vunpack.c.l.b16 %v82
  %v91 = vunpack.c.l.b16 %v83
  %v92 = vpack.c.b16 %v89, %v88
  %v93 = vpack.c.b16 %v91, %v90
  %v97 = vsel %vm31, %v77, 0
  %99 = vmatpush.bf16.msra.mxu0 0
  %100 = vmatpush.bf16.msra.mxu0 0
  %101 = vmatpush.bf16.msra.mxu0 0
  %102 = vmatpush.bf16.msra.mxu0 0
  %103 = vmatpush.bf16.msra.mxu0 0
  %104 = vmatpush.bf16.msra.mxu0 0
  %105 = vmatpush.bf16.msra.mxu0 %v93
  %106 = vmatpush.bf16.msra.mxu0 %v92
  %107 = vmatmul.bf16.gmra.mxu0 %v97
  %v108 = vpop.f32.mrf.mxu0
  %v109 = vadd.f32 0.0, %v108
  %v110 = vpop.f32.mrf.mxu0
  %v111 = vadd.f32 0.0, %v110
  %112 = vdwg.mxu0
  %v113 = vadd.f32 %v78, %v109
  %v114 = vadd.f32 %v79, %v111
  %vm115 = vcmask 785408
  %116 = vst.msk [vmem:[#allocation2] sm:$0xff] %vm115, %v113
  %117 = vst.msk [vmem:[#allocation2 + $0x8] sm:$0xff] %vm115, %v114
  // Predicated region
  $region22: #{slopgpt_forward.13} parent=0 // pred_check
    %p118 = pneg %p18
  $region23: #{slopgpt_forward.13} parent=0 // pred_check_branch
    %120 = sbr.rel (%p118) target = $region25
  $region24: #{slopgpt_forward.13} parent=0 // pred_region
    %v121 = vld [vmem:[#allocation2] sm:$0xff]
    %v122 = vld [vmem:[#allocation2 + $0x8] sm:$0xff]
    %v123 = vld [vmem:[%s3] sm:$0x1]
    %v125 = vperm.slane %v123, 0
    %v127 = vadd.f32 %v121, %v125
    %v128 = vadd.f32 %v122, %v125
    %v129 = vpack.c.bf16 %v127, %v127
    %v130 = vpack.c.bf16 %v128, %v128
    %vm131 = vcmask 781312
    %132 = vst.msk [vmem:[%s4] sm:$0xf] %vm131, %v129
    %133 = vst.msk [vmem:[%s4 + $0x4] sm:$0xf] %vm131, %v130
  $region25: #{slopgpt_forward.13} parent=0 // pred_fallthru
    _
  // Predicated region
  $region26: #{slopgpt_forward.13} parent=0 // pred_check
    _
  $region27: #{slopgpt_forward.13} parent=0 // pred_check_branch
    %135 = sbr.rel (0) target = $region29
  $region28: #{slopgpt_forward.13} parent=0 // pred_region
    _
  $region29: #{slopgpt_forward.13} parent=0 // pred_fallthru
    _
  // Predicated region
  $region30: #{slopgpt_forward.13} parent=0 // pred_check
    _
  $region31: #{slopgpt_forward.13} parent=0 // pred_check_branch
    %137 = sbr.rel (0) target = $region33
  $region32: #{slopgpt_forward.13} parent=0 // pred_region
    _
  $region33: #{slopgpt_forward.13} parent=0 // pred_fallthru
    _

// kernel: slopgpt_forward.16
$region0: #{slopgpt_forward.16}
  #allocation0 [shape = 'u32[]', space=smem, size = 0x4, offset = 0x4, fixed_abs, tag = 'smem constant byte address 0x4 - core index']
  #allocation1 [shape = 'u32[72,128]{1,0:T(1,128)}', space=vmem, size = 0x9000, scoped, tag = 'internal scratch']
  #allocation2 [shape = 'f32[16,128]{1,0:T(8,128)}', space=vmem, size = 0x2000, scoped, tag = 'scratch operand']
  %s0 = inlined_call_operand.vmem [shape: bf16[16,32], index: 0, kind: input, shape index: {}]
  %s1 = inlined_call_operand.vmem [shape: bf16[32,128], index: 1, kind: input, shape index: {}]
  %s2 = inlined_call_operand.vmem [shape: f32[1,32], index: 2, kind: input, shape index: {}]
  %s3 = inlined_call_operand.vmem [shape: f32[1,128], index: 3, kind: input, shape index: {}]
  %s4 = inlined_call_operand.vmem [shape: bf16[16,128], index: 4, kind: output, shape index: {}]
  %s5 = sld [smem:[#allocation0]]
  $region34: #{slopgpt_forward.16} parent=0
    _
  %s7 = ssub.s32 1, %s5
  %s8 = scalar_select 0, %s7, %s5
  // Predicated region
  $region2: #{slopgpt_forward.16} parent=0 // pred_check
    _
  $region3: #{slopgpt_forward.16} parent=0 // pred_check_branch
    %10 = sbr.rel (0) target = $region5
  $region4: #{slopgpt_forward.16} parent=0 // pred_region
    _
  $region5: #{slopgpt_forward.16} parent=0 // pred_fallthru
    _
  // Predicated region
  $region6: #{slopgpt_forward.16} parent=0 // pred_check
    _
  $region7: #{slopgpt_forward.16} parent=0 // pred_check_branch
    %12 = sbr.rel (0) target = $region9
  $region8: #{slopgpt_forward.16} parent=0 // pred_region
    _
  $region9: #{slopgpt_forward.16} parent=0 // pred_fallthru
    _
  // Predicated region
  $region10: #{slopgpt_forward.16} parent=0 // pred_check
    _
  $region11: #{slopgpt_forward.16} parent=0 // pred_check_branch
    %14 = sbr.rel (0) target = $region13
  $region12: #{slopgpt_forward.16} parent=0 // pred_region
    _
  $region13: #{slopgpt_forward.16} parent=0 // pred_fallthru
    _
  // Predicated region
  $region14: #{slopgpt_forward.16} parent=0 // pred_check
    _
  $region15: #{slopgpt_forward.16} parent=0 // pred_check_branch
    %16 = sbr.rel (0) target = $region17
  $region16: #{slopgpt_forward.16} parent=0 // pred_region
    _
  $region17: #{slopgpt_forward.16} parent=0 // pred_fallthru
    _
  %p18 = scmp.eq.s32.totalorder 0, 0
  // Predicated region
  $region18: #{slopgpt_forward.16} parent=0 // pred_check
    %p19 = pneg %p18
  $region19: #{slopgpt_forward.16} parent=0 // pred_check_branch
    %21 = sbr.rel (%p19) target = $region21
  $region20: #{slopgpt_forward.16} parent=0 // pred_region
    %22 = vst [vmem:[#allocation2] sm:$0xff] 0.0
    %23 = vst [vmem:[#allocation2 + $0x8] sm:$0xff] 0.0
  $region21: #{slopgpt_forward.16} parent=0 // pred_fallthru
    _
  %v24 = vld [vmem:[%s0] sm:$0xf]
  %v25 = vld [vmem:[%s0 + $0x4] sm:$0xf]
  %v26 = vunpack.c.l.bf16 %v24
  %v27 = vunpack.c.l.bf16 %v25
  %v28 = vmul.f32 %v26, %v26
  %v29 = vmul.f32 %v27, %v27
  %vm30 = vcmask 261120
  %v31 = vsel %vm30, %v28, 0.0
  %32 = vadd.xlane.f32.xlu0 %v31
  %v33 = vpop.xlane.xlu0 %32
  %v34 = vsel %vm30, %v29, 0.0
  %35 = vadd.xlane.f32.xlu0 %v34
  %v36 = vpop.xlane.xlu0 %35
  %v37 = vrcp.pop 32.0
  %v38 = vmul.f32 32.0, %v37
  %v39 = vsub.f32 1.0, %v38
  %v40 = vmul.f32 %v37, %v39
  %v41 = vadd.f32 %v37, %v40
  %vm42 = vweird.f32 %v37
  %v43 = vsel %vm42, %v37, %v41
  %v44 = vmul.f32 %v33, %v43
  %v45 = vmul.f32 %v36, %v43
  %v46 = vadd.f32 %v44, 1e-06
  %v47 = vadd.f32 %v45, 1e-06
  %v48 = vrsqrt.pop %v46
  %v49 = vmul.f32 %v48, %v46
  %v50 = vmul.f32 %v49, %v48
  %v51 = vmul.f32 0.5, %v50
  %v52 = vsub.f32 1.5, %v51
  %v53 = vmul.f32 %v48, %v52
  %vm54 = vweird.f32 %v46
  %vm55 = vweird.f32 %v48
  %vm56 = vmor %vm54, %vm55
  %v57 = vsel %vm56, %v48, %v53
  %v58 = vrsqrt.pop %v47
  %v59 = vmul.f32 %v58, %v47
  %v60 = vmul.f32 %v59, %v58
  %v61 = vmul.f32 0.5, %v60
  %v62 = vsub.f32 1.5, %v61
  %v63 = vmul.f32 %v58, %v62
  %vm64 = vweird.f32 %v47
  %vm65 = vweird.f32 %v58
  %vm66 = vmor %vm64, %vm65
  %v67 = vsel %vm66, %v58, %v63
  %v68 = vmul.f32 %v26, %v57
  %v69 = vmul.f32 %v27, %v67
  %v70 = vld [vmem:[%s2] sm:$0x1]
  %v72 = vperm.slane %v70, 0
  %v74 = vmul.f32 %v68, %v72
  %v75 = vmul.f32 %v69, %v72
  %v76 = vpack.c.bf16 %v75, %v74
  %v77 = vld [vmem:[#allocation2] sm:$0xff]
  %v78 = vld [vmem:[#allocation2 + $0x8] sm:$0xff]
  %v79 = vld [vmem:[%s1] sm:$0xf]
  %v80 = vld [vmem:[%s1 + $0x4] sm:$0xf]
  %v81 = vld [vmem:[%s1 + $0x8] sm:$0xf]
  %v82 = vld [vmem:[%s1 + $0xc] sm:$0xf]
  %v87 = vunpack.c.l.b16 %v79
  %v88 = vunpack.c.l.b16 %v80
  %v89 = vunpack.c.l.b16 %v81
  %v90 = vunpack.c.l.b16 %v82
  %v91 = vpack.c.b16 %v88, %v87
  %v92 = vpack.c.b16 %v90, %v89
  %v96 = vsel %vm30, %v76, 0
  %98 = vmatpush.bf16.msra.mxu0 0
  %99 = vmatpush.bf16.msra.mxu0 0
  %100 = vmatpush.bf16.msra.mxu0 0
  %101 = vmatpush.bf16.msra.mxu0 0
  %102 = vmatpush.bf16.msra.mxu0 0
  %103 = vmatpush.bf16.msra.mxu0 0
  %104 = vmatpush.bf16.msra.mxu0 %v92
  %105 = vmatpush.bf16.msra.mxu0 %v91
  %106 = vmatmul.bf16.gmra.mxu0 %v96
  %v107 = vpop.f32.mrf.mxu0
  %v108 = vadd.f32 0.0, %v107
  %v109 = vpop.f32.mrf.mxu0
  %v110 = vadd.f32 0.0, %v109
  %111 = vdwg.mxu0
  %v112 = vadd.f32 %v77, %v108
  %v113 = vadd.f32 %v78, %v110
  %114 = vst [vmem:[#allocation2] sm:$0xff] %v112
  %115 = vst [vmem:[#allocation2 + $0x8] sm:$0xff] %v113
  // Predicated region
  $region22: #{slopgpt_forward.16} parent=0 // pred_check
    %p116 = pneg %p18
  $region23: #{slopgpt_forward.16} parent=0 // pred_check_branch
    %118 = sbr.rel (%p116) target = $region25
  $region24: #{slopgpt_forward.16} parent=0 // pred_region
    %v119 = vld [vmem:[#allocation2] sm:$0xff]
    %v120 = vld [vmem:[#allocation2 + $0x8] sm:$0xff]
    %v121 = vld [vmem:[%s3] sm:$0x1]
    %v123 = vperm.slane %v121, 0
    %v125 = vadd.f32 %v119, %v123
    %v126 = vadd.f32 %v120, %v123
    %v127 = vpack.c.bf16 %v125, %v125
    %v128 = vpack.c.bf16 %v126, %v126
    %129 = vst [vmem:[%s4] sm:$0xf] %v127
    %130 = vst [vmem:[%s4 + $0x4] sm:$0xf] %v128
  $region25: #{slopgpt_forward.16} parent=0 // pred_fallthru
    _
  // Predicated region
  $region26: #{slopgpt_forward.16} parent=0 // pred_check
    _
  $region27: #{slopgpt_forward.16} parent=0 // pred_check_branch
    %132 = sbr.rel (0) target = $region29
  $region28: #{slopgpt_forward.16} parent=0 // pred_region
    _
  $region29: #{slopgpt_forward.16} parent=0 // pred_fallthru
    _
  // Predicated region
  $region30: #{slopgpt_forward.16} parent=0 // pred_check
    _
  $region31: #{slopgpt_forward.16} parent=0 // pred_check_branch
    %134 = sbr.rel (0) target = $region33
  $region32: #{slopgpt_forward.16} parent=0 // pred_region
    _
  $region33: #{slopgpt_forward.16} parent=0 // pred_fallthru
    _

// kernel: slopgpt_forward.14
$region0: #{slopgpt_forward.14}
  #allocation0 [shape = 'u32[]', space=smem, size = 0x4, offset = 0x4, fixed_abs, tag = 'smem constant byte address 0x4 - core index']
  #allocation1 [shape = 'u32[72,128]{1,0:T(1,128)}', space=vmem, size = 0x9000, scoped, tag = 'internal scratch']
  #allocation2 [shape = 'f32[4,8,1]{2,1,0:T(8,128)}', space=vmem, size = 0x4000, scoped, tag = 'scratch operand']
  #allocation3 [shape = 'f32[4,8,1]{2,1,0:T(8,128)}', space=vmem, size = 0x4000, scoped, tag = 'scratch operand']
  #allocation4 [shape = 'f32[4,8,8]{2,1,0:T(8,128)}', space=vmem, size = 0x4000, scoped, tag = 'scratch operand']
  %s0 = inlined_call_operand.vmem [shape: bf16[2,4,8,8], index: 0, kind: input, shape index: {}]
  %s1 = inlined_call_operand.vmem [shape: bf16[2,4,8,8], index: 1, kind: input, shape index: {}]
  %s2 = inlined_call_operand.vmem [shape: bf16[2,4,8,8], index: 2, kind: input, shape index: {}]
  %s3 = inlined_call_operand.vmem [shape: bf16[2,4,8,8], index: 3, kind: output, shape index: {}]
  %s4 = sld [smem:[#allocation0]]
  $region57: #{slopgpt_forward.14} parent=0
    _
  %s6 = ssub.s32 1, %s4
  %s7 = scalar_select 0, %s6, %s4
  loop: start=0, step=1, limit=4
  $region2: #{slopgpt_forward.14} parent=0 // loop_pre_header
    _
  $region3: #{slopgpt_forward.14} parent=0 // loop_header
    %s9 = sphi 0, %s13
    %p10 = scmp.ge.s32.totalorder %s9, 4
    %s16 = sphi 0, %s35
    %s17 = sphi 0, %s31
    %s18 = sphi 0, %s27
    %s19 = sphi 0, %s16
    %s20 = sphi 0, %s17
    %s21 = sphi 0, %s18
    %s22 = sphi 0, %s19
    %s23 = sphi 0, %s20
    %s24 = sphi 0, %s21
    %s40 = sphi 0, %s42
    %s43 = sphi 0, %s40
    %s44 = sphi 0, %s43
    %s60 = sphi 0, %s44
    %s72 = sphi 0, %s74
    %s75 = sphi 0, %s72
    %s76 = sphi 0, %s75
    %s92 = sphi 0, %s76
    %s104 = sphi 0, %s106
    %s107 = sphi 0, %s104
    %s108 = sphi 0, %s107
    %s124 = sphi 0, %s108
    %s132 = sphi 0, %s134
    %s135 = sphi 0, %s132
    %s136 = sphi 0, %s135
    %s152 = sphi 0, %s136
  $region4: #{slopgpt_forward.14} parent=0 // loop_header_branch
    %12 = sbr.rel (%p10) target = $region8
  $region5: #{slopgpt_forward.14} parent=0 // loop_body
    %s14 = ssub.s32 %s9, 1
    %s15 = ssub.s32 %s9, 2
    %s25 = sadd.s32 1, %s18
    %p26 = scmp.ge.s32.totalorder %s25, 1
    %s27 = scalar_select %p26, 0, %s25
    %s28 = sadd.s32 1, %s17
    %s29 = scalar_select %p26, %s28, %s17
    %p30 = scmp.ge.s32.totalorder %s29, 1
    %s31 = scalar_select %p30, 0, %s29
    %s32 = sadd.s32 1, %s16
    %s33 = scalar_select %p30, %s32, %s16
    %p34 = scmp.ge.s32.totalorder %s33, 2
    %s35 = scalar_select %p34, 0, %s33
    %s36 = ssub.s32 %s16, %s35
    %s37 = ssub.s32 %s17, %s31
    %s38 = sor.u32 %s36, %s37
    %p39 = scmp.eq.s32.totalorder %s38, 0
    %s41 = sadd.s32 %s40, 1
    %s42 = scalar_select %p39, %s40, %s41
    %p45 = pneg %p39
    %p46 = scmp.eq.s32.totalorder %s9, 1
    %p47 = por %p45, %p46
    %p48 = scmp.ne.s32.totalorder %s40, %s43
    %p49 = scmp.eq.s32.totalorder %s9, 0
    %p50 = por %p48, %p49
    %p51 = scmp.ne.s32.totalorder %s40, %s43
    %p52 = scmp.eq.s32.totalorder %s14, 1
    %p53 = por %p51, %p52
    %p54 = scmp.ne.s32.totalorder %s43, %s44
    %p55 = scmp.eq.s32.totalorder %s14, 0
    %p56 = por %p54, %p55
    %p57 = scmp.ne.s32.totalorder %s43, %s44
    %p58 = scmp.eq.s32.totalorder %s15, 1
    %p59 = por %p57, %p58
    %p61 = scmp.ne.s32.totalorder %s44, %s60
    %p62 = scmp.eq.s32.totalorder %s15, 0
    %p63 = por %p61, %p62
    %p64 = scmp.lt.s32.totalorder %s18, %s17
    %s65 = scalar_select %p64, %s18, %s17
    %p66 = scmp.lt.s32.totalorder %s27, %s31
    %s67 = scalar_select %p66, %s27, %s31
    %s68 = ssub.s32 %s16, %s35
    %s69 = ssub.s32 %s65, %s67
    %s70 = sor.u32 %s68, %s69
    %p71 = scmp.eq.s32.totalorder %s70, 0
    %s73 = sadd.s32 %s72, 1
    %s74 = scalar_select %p71, %s72, %s73
    %p77 = pneg %p71
    %p78 = scmp.eq.s32.totalorder %s9, 1
    %p79 = por %p77, %p78
    %p80 = scmp.ne.s32.totalorder %s72, %s75
    %p81 = scmp.eq.s32.totalorder %s9, 0
    %p82 = por %p80, %p81
    %p83 = scmp.ne.s32.totalorder %s72, %s75
    %p84 = scmp.eq.s32.totalorder %s14, 1
    %p85 = por %p83, %p84
    %p86 = scmp.ne.s32.totalorder %s75, %s76
    %p87 = scmp.eq.s32.totalorder %s14, 0
    %p88 = por %p86, %p87
    %p89 = scmp.ne.s32.totalorder %s75, %s76
    %p90 = scmp.eq.s32.totalorder %s15, 1
    %p91 = por %p89, %p90
    %p93 = scmp.ne.s32.totalorder %s76, %s92
    %p94 = scmp.eq.s32.totalorder %s15, 0
    %p95 = por %p93, %p94
    %p96 = scmp.lt.s32.totalorder %s18, %s17
    %s97 = scalar_select %p96, %s18, %s17
    %p98 = scmp.lt.s32.totalorder %s27, %s31
    %s99 = scalar_select %p98, %s27, %s31
    %s100 = ssub.s32 %s16, %s35
    %s101 = ssub.s32 %s97, %s99
    %s102 = sor.u32 %s100, %s101
    %p103 = scmp.eq.s32.totalorder %s102, 0
    %s105 = sadd.s32 %s104, 1
    %s106 = scalar_select %p103, %s104, %s105
    %p109 = pneg %p103
    %p110 = scmp.eq.s32.totalorder %s9, 1
    %p111 = por %p109, %p110
    %p112 = scmp.ne.s32.totalorder %s104, %s107
    %p113 = scmp.eq.s32.totalorder %s9, 0
    %p114 = por %p112, %p113
    %p115 = scmp.ne.s32.totalorder %s104, %s107
    %p116 = scmp.eq.s32.totalorder %s14, 1
    %p117 = por %p115, %p116
    %p118 = scmp.ne.s32.totalorder %s107, %s108
    %p119 = scmp.eq.s32.totalorder %s14, 0
    %p120 = por %p118, %p119
    %p121 = scmp.ne.s32.totalorder %s107, %s108
    %p122 = scmp.eq.s32.totalorder %s15, 1
    %p123 = por %p121, %p122
    %p125 = scmp.ne.s32.totalorder %s108, %s124
    %p126 = scmp.eq.s32.totalorder %s15, 0
    %p127 = por %p125, %p126
    %s128 = ssub.s32 %s16, %s35
    %s129 = ssub.s32 %s17, %s31
    %s130 = sor.u32 %s128, %s129
    %p131 = scmp.eq.s32.totalorder %s130, 0
    %s133 = sadd.s32 %s132, 1
    %s134 = scalar_select %p131, %s132, %s133
    %p137 = pneg %p131
    %p138 = scmp.eq.s32.totalorder %s9, 1
    %p139 = por %p137, %p138
    %p140 = scmp.ne.s32.totalorder %s132, %s135
    %p141 = scmp.eq.s32.totalorder %s9, 0
    %p142 = por %p140, %p141
    %p143 = scmp.ne.s32.totalorder %s132, %s135
    %p144 = scmp.eq.s32.totalorder %s14, 1
    %p145 = por %p143, %p144
    %p146 = scmp.ne.s32.totalorder %s135, %s136
    %p147 = scmp.eq.s32.totalorder %s14, 0
    %p148 = por %p146, %p147
    %p149 = scmp.ne.s32.totalorder %s135, %s136
    %p150 = scmp.eq.s32.totalorder %s15, 1
    %p151 = por %p149, %p150
    %p153 = scmp.ne.s32.totalorder %s136, %s152
    %p154 = scmp.eq.s32.totalorder %s15, 0
    %p155 = por %p153, %p154
    %p156 = scmp.le.s32.totalorder 1, %s9
    %p157 = scmp.lt.s32.totalorder %s9, 3
    %p158 = pnand %p156, %p157
    %p159 = pneg %p158
    // Predicated region
    $region9: #{slopgpt_forward.14} parent=5 // pred_check
      _
    $region10: #{slopgpt_forward.14} parent=5 // pred_check_branch
      %161 = sbr.rel (%p158) target = $region12
    $region11: #{slopgpt_forward.14} parent=5 // pred_region
      %s162 = ssub.s32 %s9, 1
    $region12: #{slopgpt_forward.14} parent=5 // pred_fallthru
      _
    %p163 = scmp.lt.s32.totalorder %s9, 2
    // Predicated region
    $region13: #{slopgpt_forward.14} parent=5 // pred_check
      %p164 = pneg %p163
    $region14: #{slopgpt_forward.14} parent=5 // pred_check_branch
      %166 = sbr.rel (%p164) target = $region16
    $region15: #{slopgpt_forward.14} parent=5 // pred_region
      // Predicated region
      $region17: #{slopgpt_forward.14} parent=15 // pred_check
        %p167 = pneg %p50
      $region18: #{slopgpt_forward.14} parent=15 // pred_check_branch
        %169 = sbr.rel (%p167) target = $region20
      $region19: #{slopgpt_forward.14} parent=15 // pred_region
        %p170 = scmp.lt.s32.totalorder %s16, 1
        %s171 = scalar_select %p170, %s16, 1
        %p172 = scmp.lt.s32.totalorder %s17, 0
        %s173 = scalar_select %p172, %s17, 0
        %s174 = smul.addr %s171, 4
        %s175 = sadd.s32 %s173, %s174
        %s176 = smul.addr %s175, 4
        %s177 = scalar_lea.vmem %s0, %s176
      $region20: #{slopgpt_forward.14} parent=15 // pred_fallthru
        _
      // Predicated region
      $region21: #{slopgpt_forward.14} parent=15 // pred_check
        %p178 = pneg %p82
      $region22: #{slopgpt_forward.14} parent=15 // pred_check_branch
        %180 = sbr.rel (%p178) target = $region24
      $region23: #{slopgpt_forward.14} parent=15 // pred_region
        %p181 = scmp.lt.s32.totalorder %s18, %s17
        %s182 = scalar_select %p181, %s18, %s17
        %p183 = scmp.lt.s32.totalorder %s16, 1
        %s184 = scalar_select %p183, %s16, 1
        %p185 = scmp.lt.s32.totalorder %s182, 0
        %s186 = scalar_select %p185, %s182, 0
        %s187 = smul.addr %s184, 4
        %s188 = sadd.s32 %s186, %s187
        %s189 = smul.addr %s188, 4
        %s190 = scalar_lea.vmem %s1, %s189
        %p191 = scmp.lt.s32.totalorder %s18, %s17
        %s192 = scalar_select %p191, %s18, %s17
      $region24: #{slopgpt_forward.14} parent=15 // pred_fallthru
        _
      // Predicated region
      $region25: #{slopgpt_forward.14} parent=15 // pred_check
        %p193 = pneg %p114
      $region26: #{slopgpt_forward.14} parent=15 // pred_check_branch
        %195 = sbr.rel (%p193) target = $region28
      $region27: #{slopgpt_forward.14} parent=15 // pred_region
        %p196 = scmp.lt.s32.totalorder %s18, %s17
        %s197 = scalar_select %p196, %s18, %s17
        %p198 = scmp.lt.s32.totalorder %s16, 1
        %s199 = scalar_select %p198, %s16, 1
        %p200 = scmp.lt.s32.totalorder %s197, 0
        %s201 = scalar_select %p200, %s197, 0
        %s202 = smul.addr %s199, 4
        %s203 = sadd.s32 %s201, %s202
        %s204 = smul.addr %s203, 4
        %s205 = scalar_lea.vmem %s2, %s204
        %p206 = scmp.lt.s32.totalorder %s18, %s17
        %s207 = scalar_select %p206, %s18, %s17
      $region28: #{slopgpt_forward.14} parent=15 // pred_fallthru
        _
    $region16: #{slopgpt_forward.14} parent=5 // pred_fallthru
      _
    %p208 = scmp.le.s32.totalorder 1, %s9
    %p209 = scmp.lt.s32.totalorder %s9, 3
    %p210 = pnand %p208, %p209
    %p211 = pneg %p210
    // Predicated region
    $region29: #{slopgpt_forward.14} parent=5 // pred_check
      _
    $region30: #{slopgpt_forward.14} parent=5 // pred_check_branch
      %213 = sbr.rel (%p210) target = $region32
    $region31: #{slopgpt_forward.14} parent=5 // pred_region
      %s214 = ssub.s32 %s9, 1
      %p215 = scmp.lt.s32.totalorder %s19, 1
      %s216 = scalar_select %p215, %s19, 1
      %p217 = scmp.lt.s32.totalorder %s20, 0
      %s218 = scalar_select %p217, %s20, 0
      %s219 = smul.addr %s216, 4
      %s220 = sadd.s32 %s218, %s219
      %s221 = smul.addr %s220, 4
      %s222 = scalar_lea.vmem %s0, %s221
      %p223 = pneg %p56
      %p224 = pneg %p53
      %p225 = scmp.lt.s32.totalorder %s21, %s20
      %s226 = scalar_select %p225, %s21, %s20
      %p227 = scmp.lt.s32.totalorder %s19, 1
      %s228 = scalar_select %p227, %s19, 1
      %p229 = scmp.lt.s32.totalorder %s226, 0
      %s230 = scalar_select %p229, %s226, 0
      %s231 = smul.addr %s228, 4
      %s232 = sadd.s32 %s230, %s231
      %s233 = smul.addr %s232, 4
      %s234 = scalar_lea.vmem %s1, %s233
      %p235 = pneg %p88
      %p236 = pneg %p85
      %p237 = scmp.lt.s32.totalorder %s21, %s20
      %s238 = scalar_select %p237, %s21, %s20
      %p239 = scmp.lt.s32.totalorder %s19, 1
      %s240 = scalar_select %p239, %s19, 1
      %p241 = scmp.lt.s32.totalorder %s238, 0
      %s242 = scalar_select %p241, %s238, 0
      %s243 = smul.addr %s240, 4
      %s244 = sadd.s32 %s242, %s243
      %s245 = smul.addr %s244, 4
      %s246 = scalar_lea.vmem %s2, %s245
      %p247 = pneg %p120
      %p248 = pneg %p117
      %p249 = pneg %p148
      %p250 = pneg %p145
      %p251 = scmp.lt.s32.totalorder %s19, 1
      %s252 = scalar_select %p251, %s19, 1
      %p253 = scmp.lt.s32.totalorder %s20, 0
      %s254 = scalar_select %p253, %s20, 0
      %s255 = smul.addr %s252, 4
      %s256 = sadd.s32 %s254, %s255
      %s257 = smul.addr %s256, 4
      %s258 = scalar_lea.vmem %s3, %s257
      %p259 = scmp.lt.s32.totalorder %s19, 1
      %s260 = scalar_select %p259, %s19, 1
      %p261 = scmp.lt.s32.totalorder %s20, 0
      %s262 = scalar_select %p261, %s20, 0
      %s263 = smul.addr %s260, 4
      %s264 = sadd.s32 %s262, %s263
      %s265 = smul.addr %s264, 4
      %s266 = scalar_lea.vmem %s0, %s265
      %p267 = scmp.lt.s32.totalorder %s21, %s20
      %s268 = scalar_select %p267, %s21, %s20
      %p269 = scmp.lt.s32.totalorder %s19, 1
      %s270 = scalar_select %p269, %s19, 1
      %p271 = scmp.lt.s32.totalorder %s268, 0
      %s272 = scalar_select %p271, %s268, 0
      %s273 = smul.addr %s270, 4
      %s274 = sadd.s32 %s272, %s273
      %s275 = smul.addr %s274, 4
      %s276 = scalar_lea.vmem %s1, %s275
      %p277 = scmp.lt.s32.totalorder %s21, %s20
      %s278 = scalar_select %p277, %s21, %s20
      %p279 = scmp.lt.s32.totalorder %s21, %s20
      %s280 = scalar_select %p279, %s21, %s20
      %p281 = scmp.lt.s32.totalorder %s19, 1
      %s282 = scalar_select %p281, %s19, 1
      %p283 = scmp.lt.s32.totalorder %s280, 0
      %s284 = scalar_select %p283, %s280, 0
      %s285 = smul.addr %s282, 4
      %s286 = sadd.s32 %s284, %s285
      %s287 = smul.addr %s286, 4
      %s288 = scalar_lea.vmem %s2, %s287
      %p289 = scmp.lt.s32.totalorder %s21, %s20
      %s290 = scalar_select %p289, %s21, %s20
      %p291 = scmp.lt.s32.totalorder %s19, 1
      %s292 = scalar_select %p291, %s19, 1
      %p293 = scmp.lt.s32.totalorder %s20, 0
      %s294 = scalar_select %p293, %s20, 0
      %s295 = smul.addr %s292, 4
      %s296 = sadd.s32 %s294, %s295
      %s297 = smul.addr %s296, 4
      %s298 = scalar_lea.vmem %s3, %s297
      %p300 = scmp.eq.s32.totalorder %s21, 0
      // Predicated region
      $region33: #{slopgpt_forward.14} parent=31 // pred_check
        %p301 = pneg %p300
      $region34: #{slopgpt_forward.14} parent=31 // pred_check_branch
        %303 = sbr.rel (%p301) target = $region36
      $region35: #{slopgpt_forward.14} parent=31 // pred_region
        %vm304 = vcmask 7168
        %305 = vst.msk [vmem:[#allocation2] sm:$0xff] %vm304, -1e+30
        %306 = vst.msk [vmem:[#allocation2 + $0x8] sm:$0xff] %vm304, -1e+30
        %307 = vst.msk [vmem:[#allocation2 + $0x10] sm:$0xff] %vm304, -1e+30
        %308 = vst.msk [vmem:[#allocation2 + $0x18] sm:$0xff] %vm304, -1e+30
        %309 = vst.msk [vmem:[#allocation3] sm:$0xff] %vm304, 0.0
        %310 = vst.msk [vmem:[#allocation3 + $0x8] sm:$0xff] %vm304, 0.0
        %311 = vst.msk [vmem:[#allocation3 + $0x10] sm:$0xff] %vm304, 0.0
        %312 = vst.msk [vmem:[#allocation3 + $0x18] sm:$0xff] %vm304, 0.0
        %vm313 = vcmask 64512
        %314 = vst.msk [vmem:[#allocation4] sm:$0xff] %vm313, 0.0
        %315 = vst.msk [vmem:[#allocation4 + $0x8] sm:$0xff] %vm313, 0.0
        %316 = vst.msk [vmem:[#allocation4 + $0x10] sm:$0xff] %vm313, 0.0
        %317 = vst.msk [vmem:[#allocation4 + $0x18] sm:$0xff] %vm313, 0.0
      $region36: #{slopgpt_forward.14} parent=31 // pred_fallthru
        _
      %p318 = scmp.lt.s32.totalorder %s21, %s20
      // Predicated region
      $region37: #{slopgpt_forward.14} parent=31 // pred_check
        %p319 = pneg %p318
      $region38: #{slopgpt_forward.14} parent=31 // pred_check_branch
        %321 = sbr.rel (%p319) target = $region40
      $region39: #{slopgpt_forward.14} parent=31 // pred_region
        %v322 = vld [vmem:[%s266] sm:$0xf]
        %v323 = vld [vmem:[%s266 + $0x4] sm:$0xf]
        %v324 = vld [vmem:[%s266 + $0x8] sm:$0xf]
        %v325 = vld [vmem:[%s266 + $0xc] sm:$0xf]
        %v326 = vld [vmem:[%s276] sm:$0xf]
        %v327 = vld [vmem:[%s276 + $0x4] sm:$0xf]
        %v328 = vld [vmem:[%s276 + $0x8] sm:$0xf]
        %v329 = vld [vmem:[%s276 + $0xc] sm:$0xf]
        %vm330 = vcmask 64512
        %v332 = vsel %vm330, %v322, 0
        %v335 = vsel %vm330, %v326, 0
        %337 = vmatpush.bf16.xpose.msra.mxu0 0
        %338 = vmatpush.bf16.xpose.msra.mxu0 0
        %339 = vmatpush.bf16.xpose.msra.mxu0 0
        %340 = vmatpush.bf16.xpose.msra.mxu0 0
        %341 = vmatpush.bf16.xpose.msra.mxu0 0
        %342 = vmatpush.bf16.xpose.msra.mxu0 0
        %343 = vmatpush.bf16.xpose.msra.mxu0 0
        %344 = vmatpush.bf16.xpose.msra.mxu0 %v335
        %345 = vmatmul.bf16.gmra.mxu0 %v332
        %v346 = vpop.f32.mrf.mxu0
        %v347 = vadd.f32 0.0, %v346
        %v348 = vpop.f32.mrf.mxu0
        %349 = vdwg.mxu0
        %v351 = vsel %vm330, %v323, 0
        %v354 = vsel %vm330, %v327, 0
        %356 = vmatpush.bf16.xpose.msra.mxu0 0
        %357 = vmatpush.bf16.xpose.msra.mxu0 0
        %358 = vmatpush.bf16.xpose.msra.mxu0 0
        %359 = vmatpush.bf16.xpose.msra.mxu0 0
        %360 = vmatpush.bf16.xpose.msra.mxu0 0
        %361 = vmatpush.bf16.xpose.msra.mxu0 0
        %362 = vmatpush.bf16.xpose.msra.mxu0 0
        %363 = vmatpush.bf16.xpose.msra.mxu0 %v354
        %364 = vmatmul.bf16.gmra.mxu0 %v351
        %v365 = vpop.f32.mrf.mxu0
        %v366 = vadd.f32 0.0, %v365
        %v367 = vpop.f32.mrf.mxu0
        %368 = vdwg.mxu0
        %v370 = vsel %vm330, %v324, 0
        %v373 = vsel %vm330, %v328, 0
        %375 = vmatpush.bf16.xpose.msra.mxu0 0
        %376 = vmatpush.bf16.xpose.msra.mxu0 0
        %377 = vmatpush.bf16.xpose.msra.mxu0 0
        %378 = vmatpush.bf16.xpose.msra.mxu0 0
        %379 = vmatpush.bf16.xpose.msra.mxu0 0
        %380 = vmatpush.bf16.xpose.msra.mxu0 0
        %381 = vmatpush.bf16.xpose.msra.mxu0 0
        %382 = vmatpush.bf16.xpose.msra.mxu0 %v373
        %383 = vmatmul.bf16.gmra.mxu0 %v370
        %v384 = vpop.f32.mrf.mxu0
        %v385 = vadd.f32 0.0, %v384
        %v386 = vpop.f32.mrf.mxu0
        %387 = vdwg.mxu0
        %v389 = vsel %vm330, %v325, 0
        %v392 = vsel %vm330, %v329, 0
        %394 = vmatpush.bf16.xpose.msra.mxu0 0
        %395 = vmatpush.bf16.xpose.msra.mxu0 0
        %396 = vmatpush.bf16.xpose.msra.mxu0 0
        %397 = vmatpush.bf16.xpose.msra.mxu0 0
        %398 = vmatpush.bf16.xpose.msra.mxu0 0
        %399 = vmatpush.bf16.xpose.msra.mxu0 0
        %400 = vmatpush.bf16.xpose.msra.mxu0 0
        %401 = vmatpush.bf16.xpose.msra.mxu0 %v392
        %402 = vmatmul.bf16.gmra.mxu0 %v389
        %v403 = vpop.f32.mrf.mxu0
        %v404 = vadd.f32 0.0, %v403
        %v405 = vpop.f32.mrf.mxu0
        %406 = vdwg.mxu0
        %v407 = vmul.f32 %v347, 0.35355338
        %v408 = vmul.f32 %v366, 0.35355338
        %v409 = vmul.f32 %v385, 0.35355338
        %v410 = vmul.f32 %v404, 0.35355338
        %v411 = vld [vmem:[#allocation2] sm:$0xff]
        %v412 = vld [vmem:[#allocation2 + $0x8] sm:$0xff]
        %v413 = vld [vmem:[#allocation2 + $0x10] sm:$0xff]
        %v414 = vld [vmem:[#allocation2 + $0x18] sm:$0xff]
        %v415 = vsel %vm330, %v407, -inf
        %416 = vmax.xlane.f32.xlu0 %v415
        %v417 = vpop.xlane.xlu0 %416
        %v418 = vsel %vm330, %v408, -inf
        %419 = vmax.xlane.f32.xlu0 %v418
        %v420 = vpop.xlane.xlu0 %419
        %v421 = vsel %vm330, %v409, -inf
        %422 = vmax.xlane.f32.xlu0 %v421
        %v423 = vpop.xlane.xlu0 %422
        %v424 = vsel %vm330, %v410, -inf
        %425 = vmax.xlane.f32.xlu0 %v424
        %v426 = vpop.xlane.xlu0 %425
        %v427 = vmax.f32 %v411, %v417
        %v428 = vmax.f32 %v412, %v420
        %v429 = vmax.f32 %v413, %v423
        %v430 = vmax.f32 %v414, %v426
        %v431 = vsub.f32 %v411, %v427
        %v432 = vsub.f32 %v412, %v428
        %v433 = vsub.f32 %v413, %v429
        %v434 = vsub.f32 %v414, %v430
        %v435 = vmul.f32 %v431, 1.442695
        %v436 = vpow.pop %v435
        %v437 = vmul.f32 %v432, 1.442695
        %v438 = vpow.pop %v437
        %v439 = vmul.f32 %v433, 1.442695
        %v440 = vpow.pop %v439
        %v441 = vmul.f32 %v434, 1.442695
        %v442 = vpow.pop %v441
        %444 = vset.pattern.permute.xlu0 0
        %445 = vperm.xlu0 %444, %v427
        %v446 = vpop.permute.xlu0 %445
        %449 = vset.pattern.permute.xlu0 0
        %450 = vperm.xlu0 %449, %v428
        %v451 = vpop.permute.xlu0 %450
        %454 = vset.pattern.permute.xlu0 0
        %455 = vperm.xlu0 %454, %v429
        %v456 = vpop.permute.xlu0 %455
        %459 = vset.pattern.permute.xlu0 0
        %460 = vperm.xlu0 %459, %v430
        %v461 = vpop.permute.xlu0 %460
        %v463 = vsub.f32 %v407, %v446
        %v464 = vsub.f32 %v408, %v451
        %v465 = vsub.f32 %v409, %v456
        %v466 = vsub.f32 %v410, %v461
        %v467 = vmul.f32 %v463, 1.442695
        %v468 = vpow.pop %v467
        %v469 = vmul.f32 %v464, 1.442695
        %v470 = vpow.pop %v469
        %v471 = vmul.f32 %v465, 1.442695
        %v472 = vpow.pop %v471
        %v473 = vmul.f32 %v466, 1.442695
        %v474 = vpow.pop %v473
        %v475 = vld [vmem:[#allocation3] sm:$0xff]
        %v476 = vld [vmem:[#allocation3 + $0x8] sm:$0xff]
        %v477 = vld [vmem:[#allocation3 + $0x10] sm:$0xff]
        %v478 = vld [vmem:[#allocation3 + $0x18] sm:$0xff]
        %v479 = vmul.f32 %v436, %v475
        %v480 = vmul.f32 %v438, %v476
        %v481 = vmul.f32 %v440, %v477
        %v482 = vmul.f32 %v442, %v478
        %v483 = vsel %vm330, %v468, 0.0
        %484 = vadd.xlane.f32.xlu0 %v483
        %v485 = vpop.xlane.xlu0 %484
        %v486 = vsel %vm330, %v470, 0.0
        %487 = vadd.xlane.f32.xlu0 %v486
        %v488 = vpop.xlane.xlu0 %487
        %v489 = vsel %vm330, %v472, 0.0
        %490 = vadd.xlane.f32.xlu0 %v489
        %v491 = vpop.xlane.xlu0 %490
        %v492 = vsel %vm330, %v474, 0.0
        %493 = vadd.xlane.f32.xlu0 %v492
        %v494 = vpop.xlane.xlu0 %493
        %v495 = vadd.f32 %v479, %v485
        %v496 = vadd.f32 %v480, %v488
        %v497 = vadd.f32 %v481, %v491
        %v498 = vadd.f32 %v482, %v494
        %vm499 = vcmask 7168
        %500 = vst.msk [vmem:[#allocation3] sm:$0xff] %vm499, %v495
        %501 = vst.msk [vmem:[#allocation3 + $0x8] sm:$0xff] %vm499, %v496
        %502 = vst.msk [vmem:[#allocation3 + $0x10] sm:$0xff] %vm499, %v497
        %503 = vst.msk [vmem:[#allocation3 + $0x18] sm:$0xff] %vm499, %v498
        %v504 = vld [vmem:[#allocation4] sm:$0xff]
        %v505 = vld [vmem:[#allocation4 + $0x8] sm:$0xff]
        %v506 = vld [vmem:[#allocation4 + $0x10] sm:$0xff]
        %v507 = vld [vmem:[#allocation4 + $0x18] sm:$0xff]
        %509 = vset.pattern.permute.xlu0 0
        %510 = vperm.xlu0 %509, %v436
        %v511 = vpop.permute.xlu0 %510
        %514 = vset.pattern.permute.xlu0 0
        %515 = vperm.xlu0 %514, %v438
        %v516 = vpop.permute.xlu0 %515
        %519 = vset.pattern.permute.xlu0 0
        %520 = vperm.xlu0 %519, %v440
        %v521 = vpop.permute.xlu0 %520
        %524 = vset.pattern.permute.xlu0 0
        %525 = vperm.xlu0 %524, %v442
        %v526 = vpop.permute.xlu0 %525
        %v528 = vmul.f32 %v511, %v504
        %v529 = vmul.f32 %v516, %v505
        %v530 = vmul.f32 %v521, %v506
        %v531 = vmul.f32 %v526, %v507
        %v532 = vpack.c.bf16 %v468, %v468
        %v533 = vpack.c.bf16 %v470, %v470
        %v534 = vpack.c.bf16 %v472, %v472
        %v535 = vpack.c.bf16 %v474, %v474
        %v536 = vld [vmem:[%s288] sm:$0xf]
        %v537 = vld [vmem:[%s288 + $0x4] sm:$0xf]
        %v538 = vld [vmem:[%s288 + $0x8] sm:$0xf]
        %v539 = vld [vmem:[%s288 + $0xc] sm:$0xf]
        %v541 = vsel %vm330, %v532, 0
        %vm543 = vcmask 1043456
        %v545 = vsel %vm543, %v536, 0
        %547 = vmatpush.bf16.msra.mxu0 0
        %548 = vmatpush.bf16.msra.mxu0 0
        %549 = vmatpush.bf16.msra.mxu0 0
        %550 = vmatpush.bf16.msra.mxu0 0
        %551 = vmatpush.bf16.msra.mxu0 0
        %552 = vmatpush.bf16.msra.mxu0 0
        %553 = vmatpush.bf16.msra.mxu0 0
        %554 = vmatpush.bf16.msra.mxu0 %v545
        %555 = vmatmul.bf16.gmra.mxu0 %v541
        %v556 = vpop.f32.mrf.mxu0
        %v557 = vadd.f32 0.0, %v556
        %v558 = vpop.f32.mrf.mxu0
        %559 = vdwg.mxu0
        %v561 = vsel %vm330, %v533, 0
        %v564 = vsel %vm543, %v537, 0
        %566 = vmatpush.bf16.msra.mxu0 0
        %567 = vmatpush.bf16.msra.mxu0 0
        %568 = vmatpush.bf16.msra.mxu0 0
        %569 = vmatpush.bf16.msra.mxu0 0
        %570 = vmatpush.bf16.msra.mxu0 0
        %571 = vmatpush.bf16.msra.mxu0 0
        %572 = vmatpush.bf16.msra.mxu0 0
        %573 = vmatpush.bf16.msra.mxu0 %v564
        %574 = vmatmul.bf16.gmra.mxu0 %v561
        %v575 = vpop.f32.mrf.mxu0
        %v576 = vadd.f32 0.0, %v575
        %v577 = vpop.f32.mrf.mxu0
        %578 = vdwg.mxu0
        %v580 = vsel %vm330, %v534, 0
        %v583 = vsel %vm543, %v538, 0
        %585 = vmatpush.bf16.msra.mxu0 0
        %586 = vmatpush.bf16.msra.mxu0 0
        %587 = vmatpush.bf16.msra.mxu0 0
        %588 = vmatpush.bf16.msra.mxu0 0
        %589 = vmatpush.bf16.msra.mxu0 0
        %590 = vmatpush.bf16.msra.mxu0 0
        %591 = vmatpush.bf16.msra.mxu0 0
        %592 = vmatpush.bf16.msra.mxu0 %v583
        %593 = vmatmul.bf16.gmra.mxu0 %v580
        %v594 = vpop.f32.mrf.mxu0
        %v595 = vadd.f32 0.0, %v594
        %v596 = vpop.f32.mrf.mxu0
        %597 = vdwg.mxu0
        %v599 = vsel %vm330, %v535, 0
        %v602 = vsel %vm543, %v539, 0
        %604 = vmatpush.bf16.msra.mxu0 0
        %605 = vmatpush.bf16.msra.mxu0 0
        %606 = vmatpush.bf16.msra.mxu0 0
        %607 = vmatpush.bf16.msra.mxu0 0
        %608 = vmatpush.bf16.msra.mxu0 0
        %609 = vmatpush.bf16.msra.mxu0 0
        %610 = vmatpush.bf16.msra.mxu0 0
        %611 = vmatpush.bf16.msra.mxu0 %v602
        %612 = vmatmul.bf16.gmra.mxu0 %v599
        %v613 = vpop.f32.mrf.mxu0
        %v614 = vadd.f32 0.0, %v613
        %v615 = vpop.f32.mrf.mxu0
        %616 = vdwg.mxu0
        %v617 = vadd.f32 %v528, %v557
        %v618 = vadd.f32 %v529, %v576
        %v619 = vadd.f32 %v530, %v595
        %v620 = vadd.f32 %v531, %v614
        %621 = vst.msk [vmem:[#allocation4] sm:$0xff] %vm330, %v617
        %622 = vst.msk [vmem:[#allocation4 + $0x8] sm:$0xff] %vm330, %v618
        %623 = vst.msk [vmem:[#allocation4 + $0x10] sm:$0xff] %vm330, %v619
        %624 = vst.msk [vmem:[#allocation4 + $0x18] sm:$0xff] %vm330, %v620
        %625 = vst.msk [vmem:[#allocation2] sm:$0xff] %vm499, %v427
        %626 = vst.msk [vmem:[#allocation2 + $0x8] sm:$0xff] %vm499, %v428
        %627 = vst.msk [vmem:[#allocation2 + $0x10] sm:$0xff] %vm499, %v429
        %628 = vst.msk [vmem:[#allocation2 + $0x18] sm:$0xff] %vm499, %v430
      $region40: #{slopgpt_forward.14} parent=31 // pred_fallthru
        _
      %p629 = scmp.eq.s32.totalorder %s21, %s20
      // Predicated region
      $region41: #{slopgpt_forward.14} parent=31 // pred_check
        %p630 = pneg %p629
      $region42: #{slopgpt_forward.14} parent=31 // pred_check_branch
        %632 = sbr.rel (%p630) target = $region44
      $region43: #{slopgpt_forward.14} parent=31 // pred_region
        %v633 = vld [vmem:[%s266] sm:$0xf]
        %v634 = vld [vmem:[%s266 + $0x4] sm:$0xf]
        %v635 = vld [vmem:[%s266 + $0x8] sm:$0xf]
        %v636 = vld [vmem:[%s266 + $0xc] sm:$0xf]
        %v637 = vld [vmem:[%s276] sm:$0xf]
        %v638 = vld [vmem:[%s276 + $0x4] sm:$0xf]
        %v639 = vld [vmem:[%s276 + $0x8] sm:$0xf]
        %v640 = vld [vmem:[%s276 + $0xc] sm:$0xf]
        %vm641 = vcmask 64512
        %v643 = vsel %vm641, %v633, 0
        %v646 = vsel %vm641, %v637, 0
        %648 = vmatpush.bf16.xpose.msra.mxu0 0
        %649 = vmatpush.bf16.xpose.msra.mxu0 0
        %650 = vmatpush.bf16.xpose.msra.mxu0 0
        %651 = vmatpush.bf16.xpose.msra.mxu0 0
        %652 = vmatpush.bf16.xpose.msra.mxu0 0
        %653 = vmatpush.bf16.xpose.msra.mxu0 0
        %654 = vmatpush.bf16.xpose.msra.mxu0 0
        %655 = vmatpush.bf16.xpose.msra.mxu0 %v646
        %656 = vmatmul.bf16.gmra.mxu0 %v643
        %v657 = vpop.f32.mrf.mxu0
        %v658 = vadd.f32 0.0, %v657
        %v659 = vpop.f32.mrf.mxu0
        %660 = vdwg.mxu0
        %v662 = vsel %vm641, %v634, 0
        %v665 = vsel %vm641, %v638, 0
        %667 = vmatpush.bf16.xpose.msra.mxu0 0
        %668 = vmatpush.bf16.xpose.msra.mxu0 0
        %669 = vmatpush.bf16.xpose.msra.mxu0 0
        %670 = vmatpush.bf16.xpose.msra.mxu0 0
        %671 = vmatpush.bf16.xpose.msra.mxu0 0
        %672 = vmatpush.bf16.xpose.msra.mxu0 0
        %673 = vmatpush.bf16.xpose.msra.mxu0 0
        %674 = vmatpush.bf16.xpose.msra.mxu0 %v665
        %675 = vmatmul.bf16.gmra.mxu0 %v662
        %v676 = vpop.f32.mrf.mxu0
        %v677 = vadd.f32 0.0, %v676
        %v678 = vpop.f32.mrf.mxu0
        %679 = vdwg.mxu0
        %v681 = vsel %vm641, %v635, 0
        %v684 = vsel %vm641, %v639, 0
        %686 = vmatpush.bf16.xpose.msra.mxu0 0
        %687 = vmatpush.bf16.xpose.msra.mxu0 0
        %688 = vmatpush.bf16.xpose.msra.mxu0 0
        %689 = vmatpush.bf16.xpose.msra.mxu0 0
        %690 = vmatpush.bf16.xpose.msra.mxu0 0
        %691 = vmatpush.bf16.xpose.msra.mxu0 0
        %692 = vmatpush.bf16.xpose.msra.mxu0 0
        %693 = vmatpush.bf16.xpose.msra.mxu0 %v684
        %694 = vmatmul.bf16.gmra.mxu0 %v681
        %v695 = vpop.f32.mrf.mxu0
        %v696 = vadd.f32 0.0, %v695
        %v697 = vpop.f32.mrf.mxu0
        %698 = vdwg.mxu0
        %v700 = vsel %vm641, %v636, 0
        %v703 = vsel %vm641, %v640, 0
        %705 = vmatpush.bf16.xpose.msra.mxu0 0
        %706 = vmatpush.bf16.xpose.msra.mxu0 0
        %707 = vmatpush.bf16.xpose.msra.mxu0 0
        %708 = vmatpush.bf16.xpose.msra.mxu0 0
        %709 = vmatpush.bf16.xpose.msra.mxu0 0
        %710 = vmatpush.bf16.xpose.msra.mxu0 0
        %711 = vmatpush.bf16.xpose.msra.mxu0 0
        %712 = vmatpush.bf16.xpose.msra.mxu0 %v703
        %713 = vmatmul.bf16.gmra.mxu0 %v700
        %v714 = vpop.f32.mrf.mxu0
        %v715 = vadd.f32 0.0, %v714
        %v716 = vpop.f32.mrf.mxu0
        %717 = vdwg.mxu0
        %v718 = vmul.f32 %v658, 0.35355338
        %v719 = vmul.f32 %v677, 0.35355338
        %v720 = vmul.f32 %v696, 0.35355338
        %v721 = vmul.f32 %v715, 0.35355338
        %s722 = smul.u32 %s20, 8
        %v723 = vlaneseq
        %v724 = vshrl.u32 %v723, 7
        %v725 = vstv %s722
        %v726 = vadd.s32 %v725, %v724
        %s727 = smul.u32 %s21, 8
        %v728 = vlaneseq
        %v729 = vand.u32 %v728, 127
        %v730 = vstv %s727
        %v731 = vadd.s32 %v730, %v729
        %vm732 = vcmp.ge.s32.totalorder %v726, %v731
        %v733 = vsel %vm732, 1, 0
        %vm734 = vcmp.eq.s32.totalorder %v733, 1
        %v735 = vsel %vm734, %v718, -1e+30
        %v736 = vsel %vm734, %v719, -1e+30
        %v737 = vsel %vm734, %v720, -1e+30
        %v738 = vsel %vm734, %v721, -1e+30
        %v739 = vld [vmem:[#allocation2] sm:$0xff]
        %v740 = vld [vmem:[#allocation2 + $0x8] sm:$0xff]
        %v741 = vld [vmem:[#allocation2 + $0x10] sm:$0xff]
        %v742 = vld [vmem:[#allocation2 + $0x18] sm:$0xff]
        %v743 = vsel %vm641, %v735, -inf
        %744 = vmax.xlane.f32.xlu0 %v743
        %v745 = vpop.xlane.xlu0 %744
        %v746 = vsel %vm641, %v736, -inf
        %747 = vmax.xlane.f32.xlu0 %v746
        %v748 = vpop.xlane.xlu0 %747
        %v749 = vsel %vm641, %v737, -inf
        %750 = vmax.xlane.f32.xlu0 %v749
        %v751 = vpop.xlane.xlu0 %750
        %v752 = vsel %vm641, %v738, -inf
        %753 = vmax.xlane.f32.xlu0 %v752
        %v754 = vpop.xlane.xlu0 %753
        %v755 = vmax.f32 %v739, %v745
        %v756 = vmax.f32 %v740, %v748
        %v757 = vmax.f32 %v741, %v751
        %v758 = vmax.f32 %v742, %v754
        %v759 = vsub.f32 %v739, %v755
        %v760 = vsub.f32 %v740, %v756
        %v761 = vsub.f32 %v741, %v757
        %v762 = vsub.f32 %v742, %v758
        %v763 = vmul.f32 %v759, 1.442695
        %v764 = vpow.pop %v763
        %v765 = vmul.f32 %v760, 1.442695
        %v766 = vpow.pop %v765
        %v767 = vmul.f32 %v761, 1.442695
        %v768 = vpow.pop %v767
        %v769 = vmul.f32 %v762, 1.442695
        %v770 = vpow.pop %v769
        %772 = vset.pattern.permute.xlu0 0
        %773 = vperm.xlu0 %772, %v755
        %v774 = vpop.permute.xlu0 %773
        %777 = vset.pattern.permute.xlu0 0
        %778 = vperm.xlu0 %777, %v756
        %v779 = vpop.permute.xlu0 %778
        %782 = vset.pattern.permute.xlu0 0
        %783 = vperm.xlu0 %782, %v757
        %v784 = vpop.permute.xlu0 %783
        %787 = vset.pattern.permute.xlu0 0
        %788 = vperm.xlu0 %787, %v758
        %v789 = vpop.permute.xlu0 %788
        %v791 = vsub.f32 %v735, %v774
        %v792 = vsub.f32 %v736, %v779
        %v793 = vsub.f32 %v737, %v784
        %v794 = vsub.f32 %v738, %v789
        %v795 = vmul.f32 %v791, 1.442695
        %v796 = vpow.pop %v795
        %v797 = vmul.f32 %v792, 1.442695
        %v798 = vpow.pop %v797
        %v799 = vmul.f32 %v793, 1.442695
        %v800 = vpow.pop %v799
        %v801 = vmul.f32 %v794, 1.442695
        %v802 = vpow.pop %v801
        %v803 = vld [vmem:[#allocation3] sm:$0xff]
        %v804 = vld [vmem:[#allocation3 + $0x8] sm:$0xff]
        %v805 = vld [vmem:[#allocation3 + $0x10] sm:$0xff]
        %v806 = vld [vmem:[#allocation3 + $0x18] sm:$0xff]
        %v807 = vmul.f32 %v764, %v803
        %v808 = vmul.f32 %v766, %v804
        %v809 = vmul.f32 %v768, %v805
        %v810 = vmul.f32 %v770, %v806
        %v811 = vsel %vm641, %v796, 0.0
        %812 = vadd.xlane.f32.xlu0 %v811
        %v813 = vpop.xlane.xlu0 %812
        %v814 = vsel %vm641, %v798, 0.0
        %815 = vadd.xlane.f32.xlu0 %v814
        %v816 = vpop.xlane.xlu0 %815
        %v817 = vsel %vm641, %v800, 0.0
        %818 = vadd.xlane.f32.xlu0 %v817
        %v819 = vpop.xlane.xlu0 %818
        %v820 = vsel %vm641, %v802, 0.0
        %821 = vadd.xlane.f32.xlu0 %v820
        %v822 = vpop.xlane.xlu0 %821
        %v823 = vadd.f32 %v807, %v813
        %v824 = vadd.f32 %v808, %v816
        %v825 = vadd.f32 %v809, %v819
        %v826 = vadd.f32 %v810, %v822
        %vm827 = vcmask 7168
        %828 = vst.msk [vmem:[#allocation3] sm:$0xff] %vm827, %v823
        %829 = vst.msk [vmem:[#allocation3 + $0x8] sm:$0xff] %vm827, %v824
        %830 = vst.msk [vmem:[#allocation3 + $0x10] sm:$0xff] %vm827, %v825
        %831 = vst.msk [vmem:[#allocation3 + $0x18] sm:$0xff] %vm827, %v826
        %v832 = vld [vmem:[#allocation4] sm:$0xff]
        %v833 = vld [vmem:[#allocation4 + $0x8] sm:$0xff]
        %v834 = vld [vmem:[#allocation4 + $0x10] sm:$0xff]
        %v835 = vld [vmem:[#allocation4 + $0x18] sm:$0xff]
        %837 = vset.pattern.permute.xlu0 0
        %838 = vperm.xlu0 %837, %v764
        %v839 = vpop.permute.xlu0 %838
        %842 = vset.pattern.permute.xlu0 0
        %843 = vperm.xlu0 %842, %v766
        %v844 = vpop.permute.xlu0 %843
        %847 = vset.pattern.permute.xlu0 0
        %848 = vperm.xlu0 %847, %v768
        %v849 = vpop.permute.xlu0 %848
        %852 = vset.pattern.permute.xlu0 0
        %853 = vperm.xlu0 %852, %v770
        %v854 = vpop.permute.xlu0 %853
        %v856 = vmul.f32 %v839, %v832
        %v857 = vmul.f32 %v844, %v833
        %v858 = vmul.f32 %v849, %v834
        %v859 = vmul.f32 %v854, %v835
        %v860 = vpack.c.bf16 %v796, %v796
        %v861 = vpack.c.bf16 %v798, %v798
        %v862 = vpack.c.bf16 %v800, %v800
        %v863 = vpack.c.bf16 %v802, %v802
        %v864 = vld [vmem:[%s288] sm:$0xf]
        %v865 = vld [vmem:[%s288 + $0x4] sm:$0xf]
        %v866 = vld [vmem:[%s288 + $0x8] sm:$0xf]
        %v867 = vld [vmem:[%s288 + $0xc] sm:$0xf]
        %v869 = vsel %vm641, %v860, 0
        %vm871 = vcmask 1043456
        %v873 = vsel %vm871, %v864, 0
        %875 = vmatpush.bf16.msra.mxu0 0
        %876 = vmatpush.bf16.msra.mxu0 0
        %877 = vmatpush.bf16.msra.mxu0 0
        %878 = vmatpush.bf16.msra.mxu0 0
        %879 = vmatpush.bf16.msra.mxu0 0
        %880 = vmatpush.bf16.msra.mxu0 0
        %881 = vmatpush.bf16.msra.mxu0 0
        %882 = vmatpush.bf16.msra.mxu0 %v873
        %883 = vmatmul.bf16.gmra.mxu0 %v869
        %v884 = vpop.f32.mrf.mxu0
        %v885 = vadd.f32 0.0, %v884
        %v886 = vpop.f32.mrf.mxu0
        %887 = vdwg.mxu0
        %v889 = vsel %vm641, %v861, 0
        %v892 = vsel %vm871, %v865, 0
        %894 = vmatpush.bf16.msra.mxu0 0
        %895 = vmatpush.bf16.msra.mxu0 0
        %896 = vmatpush.bf16.msra.mxu0 0
        %897 = vmatpush.bf16.msra.mxu0 0
        %898 = vmatpush.bf16.msra.mxu0 0
        %899 = vmatpush.bf16.msra.mxu0 0
        %900 = vmatpush.bf16.msra.mxu0 0
        %901 = vmatpush.bf16.msra.mxu0 %v892
        %902 = vmatmul.bf16.gmra.mxu0 %v889
        %v903 = vpop.f32.mrf.mxu0
        %v904 = vadd.f32 0.0, %v903
        %v905 = vpop.f32.mrf.mxu0
        %906 = vdwg.mxu0
        %v908 = vsel %vm641, %v862, 0
        %v911 = vsel %vm871, %v866, 0
        %913 = vmatpush.bf16.msra.mxu0 0
        %914 = vmatpush.bf16.msra.mxu0 0
        %915 = vmatpush.bf16.msra.mxu0 0
        %916 = vmatpush.bf16.msra.mxu0 0
        %917 = vmatpush.bf16.msra.mxu0 0
        %918 = vmatpush.bf16.msra.mxu0 0
        %919 = vmatpush.bf16.msra.mxu0 0
        %920 = vmatpush.bf16.msra.mxu0 %v911
        %921 = vmatmul.bf16.gmra.mxu0 %v908
        %v922 = vpop.f32.mrf.mxu0
        %v923 = vadd.f32 0.0, %v922
        %v924 = vpop.f32.mrf.mxu0
        %925 = vdwg.mxu0
        %v927 = vsel %vm641, %v863, 0
        %v930 = vsel %vm871, %v867, 0
        %932 = vmatpush.bf16.msra.mxu0 0
        %933 = vmatpush.bf16.msra.mxu0 0
        %934 = vmatpush.bf16.msra.mxu0 0
        %935 = vmatpush.bf16.msra.mxu0 0
        %936 = vmatpush.bf16.msra.mxu0 0
        %937 = vmatpush.bf16.msra.mxu0 0
        %938 = vmatpush.bf16.msra.mxu0 0
        %939 = vmatpush.bf16.msra.mxu0 %v930
        %940 = vmatmul.bf16.gmra.mxu0 %v927
        %v941 = vpop.f32.mrf.mxu0
        %v942 = vadd.f32 0.0, %v941
        %v943 = vpop.f32.mrf.mxu0
        %944 = vdwg.mxu0
        %v945 = vadd.f32 %v856, %v885
        %v946 = vadd.f32 %v857, %v904
        %v947 = vadd.f32 %v858, %v923
        %v948 = vadd.f32 %v859, %v942
        %949 = vst.msk [vmem:[#allocation4] sm:$0xff] %vm641, %v945
        %950 = vst.msk [vmem:[#allocation4 + $0x8] sm:$0xff] %vm641, %v946
        %951 = vst.msk [vmem:[#allocation4 + $0x10] sm:$0xff] %vm641, %v947
        %952 = vst.msk [vmem:[#allocation4 + $0x18] sm:$0xff] %vm641, %v948
        %953 = vst.msk [vmem:[#allocation2] sm:$0xff] %vm827, %v755
        %954 = vst.msk [vmem:[#allocation2 + $0x8] sm:$0xff] %vm827, %v756
        %955 = vst.msk [vmem:[#allocation2 + $0x10] sm:$0xff] %vm827, %v757
        %956 = vst.msk [vmem:[#allocation2 + $0x18] sm:$0xff] %vm827, %v758
        %v957 = vld [vmem:[#allocation3] sm:$0xff]
        %v958 = vld [vmem:[#allocation3 + $0x8] sm:$0xff]
        %v959 = vld [vmem:[#allocation3 + $0x10] sm:$0xff]
        %v960 = vld [vmem:[#allocation3 + $0x18] sm:$0xff]
        %v961 = vrcp.pop %v957
        %v962 = vrcp.pop %v958
        %v963 = vrcp.pop %v959
        %v964 = vrcp.pop %v960
        %v965 = vld [vmem:[#allocation4] sm:$0xff]
        %v966 = vld [vmem:[#allocation4 + $0x8] sm:$0xff]
        %v967 = vld [vmem:[#allocation4 + $0x10] sm:$0xff]
        %v968 = vld [vmem:[#allocation4 + $0x18] sm:$0xff]
        %970 = vset.pattern.permute.xlu0 0
        %971 = vperm.xlu0 %970, %v961
        %v972 = vpop.permute.xlu0 %971
        %975 = vset.pattern.permute.xlu0 0
        %976 = vperm.xlu0 %975, %v962
        %v977 = vpop.permute.xlu0 %976
        %980 = vset.pattern.permute.xlu0 0
        %981 = vperm.xlu0 %980, %v963
        %v982 = vpop.permute.xlu0 %981
        %985 = vset.pattern.permute.xlu0 0
        %986 = vperm.xlu0 %985, %v964
        %v987 = vpop.permute.xlu0 %986
        %v989 = vmul.f32 %v965, %v972
        %v990 = vmul.f32 %v966, %v977
        %v991 = vmul.f32 %v967, %v982
        %v992 = vmul.f32 %v968, %v987
        %v993 = vpack.c.bf16 %v989, %v989
        %v994 = vpack.c.bf16 %v990, %v990
        %v995 = vpack.c.bf16 %v991, %v991
        %v996 = vpack.c.bf16 %v992, %v992
        %vm997 = vcmask 60416
        %998 = vst.msk [vmem:[%s298] sm:$0xf] %vm997, %v993
        %999 = vst.msk [vmem:[%s298 + $0x4] sm:$0xf] %vm997, %v994
        %1000 = vst.msk [vmem:[%s298 + $0x8] sm:$0xf] %vm997, %v995
        %1001 = vst.msk [vmem:[%s298 + $0xc] sm:$0xf] %vm997, %v996
      $region44: #{slopgpt_forward.14} parent=31 // pred_fallthru
        _
      %p1002 = scmp.lt.s32.totalorder %s19, 1
      %s1003 = scalar_select %p1002, %s19, 1
      %p1004 = scmp.lt.s32.totalorder %s20, 0
      %s1005 = scalar_select %p1004, %s20, 0
      %s1006 = smul.addr %s1003, 4
      %s1007 = sadd.s32 %s1005, %s1006
      %s1008 = smul.addr %s1007, 4
      %s1009 = scalar_lea.vmem %s3, %s1008
      // Predicated region
      $region45: #{slopgpt_forward.14} parent=31 // pred_check
        %p1010 = pneg %p145
      $region46: #{slopgpt_forward.14} parent=31 // pred_check_branch
        %1012 = sbr.rel (%p1010) target = $region48
      $region47: #{slopgpt_forward.14} parent=31 // pred_region
        _
      $region48: #{slopgpt_forward.14} parent=31 // pred_fallthru
        _
    $region32: #{slopgpt_forward.14} parent=5 // pred_fallthru
      _
    %p1013 = scmp.le.s32.totalorder 2, %s9
    // Predicated region
    $region49: #{slopgpt_forward.14} parent=5 // pred_check
      %p1014 = pneg %p1013
    $region50: #{slopgpt_forward.14} parent=5 // pred_check_branch
      %1016 = sbr.rel (%p1014) target = $region52
    $region51: #{slopgpt_forward.14} parent=5 // pred_region
      %s1017 = ssub.s32 %s9, 2
      // Predicated region
      $region53: #{slopgpt_forward.14} parent=51 // pred_check
        %p1018 = pneg %p151
      $region54: #{slopgpt_forward.14} parent=51 // pred_check_branch
        %1020 = sbr.rel (%p1018) target = $region56
      $region55: #{slopgpt_forward.14} parent=51 // pred_region
        %p1021 = scmp.lt.s32.totalorder %s22, 1
        %s1022 = scalar_select %p1021, %s22, 1
        %p1023 = scmp.lt.s32.totalorder %s23, 0
        %s1024 = scalar_select %p1023, %s23, 0
        %s1025 = smul.addr %s1022, 4
        %s1026 = sadd.s32 %s1024, %s1025
        %s1027 = smul.addr %s1026, 4
        %s1028 = scalar_lea.vmem %s3, %s1027
      $region56: #{slopgpt_forward.14} parent=51 // pred_fallthru
        _
    $region52: #{slopgpt_forward.14} parent=5 // pred_fallthru
      _
  $region6: #{slopgpt_forward.14} parent=0 // loop_footer
    %s13 = sadd.s32 1, %s9
  $region7: #{slopgpt_forward.14} parent=0 // loop_footer_branch
    %8 = sbr.rel target = $region3
  $region8: #{slopgpt_forward.14} parent=0 // loop_exit
    _

// kernel: slopgpt_forward.17
$region0: #{slopgpt_forward.17}
  #allocation0 [shape = 'u32[]', space=smem, size = 0x4, offset = 0x4, fixed_abs, tag = 'smem constant byte address 0x4 - core index']
  #allocation1 [shape = 'u32[72,128]{1,0:T(1,128)}', space=vmem, size = 0x9000, scoped, tag = 'internal scratch']
  #allocation2 [shape = 'f32[16,128]{1,0:T(8,128)}', space=vmem, size = 0x2000, scoped, tag = 'scratch operand']
  %s0 = inlined_call_operand.vmem [shape: bf16[16,128], index: 0, kind: input, shape index: {}, may-alias: {0,3}]
  %s1 = inlined_call_operand.vmem [shape: bf16[128,128], index: 1, kind: input, shape index: {}]
  %s2 = inlined_call_operand.vmem [shape: f32[1,128], index: 2, kind: input, shape index: {}]
  %s3 = inlined_call_operand.vmem [shape: bf16[16,128], index: 3, kind: input, shape index: {}, may-alias: {0,3}]
  %s4 = inlined_call_operand.vmem [shape: bf16[16,128], index: 4, kind: output, shape index: {}]
  %s5 = sld [smem:[#allocation0]]
  $region34: #{slopgpt_forward.17} parent=0
    _
  %s7 = ssub.s32 1, %s5
  %s8 = scalar_select 0, %s7, %s5
  // Predicated region
  $region2: #{slopgpt_forward.17} parent=0 // pred_check
    _
  $region3: #{slopgpt_forward.17} parent=0 // pred_check_branch
    %10 = sbr.rel (0) target = $region5
  $region4: #{slopgpt_forward.17} parent=0 // pred_region
    _
  $region5: #{slopgpt_forward.17} parent=0 // pred_fallthru
    _
  // Predicated region
  $region6: #{slopgpt_forward.17} parent=0 // pred_check
    _
  $region7: #{slopgpt_forward.17} parent=0 // pred_check_branch
    %12 = sbr.rel (0) target = $region9
  $region8: #{slopgpt_forward.17} parent=0 // pred_region
    _
  $region9: #{slopgpt_forward.17} parent=0 // pred_fallthru
    _
  // Predicated region
  $region10: #{slopgpt_forward.17} parent=0 // pred_check
    _
  $region11: #{slopgpt_forward.17} parent=0 // pred_check_branch
    %14 = sbr.rel (0) target = $region13
  $region12: #{slopgpt_forward.17} parent=0 // pred_region
    _
  $region13: #{slopgpt_forward.17} parent=0 // pred_fallthru
    _
  // Predicated region
  $region14: #{slopgpt_forward.17} parent=0 // pred_check
    _
  $region15: #{slopgpt_forward.17} parent=0 // pred_check_branch
    %16 = sbr.rel (0) target = $region17
  $region16: #{slopgpt_forward.17} parent=0 // pred_region
    _
  $region17: #{slopgpt_forward.17} parent=0 // pred_fallthru
    _
  %p17 = scmp.eq.s32.totalorder 0, 0
  // Predicated region
  $region18: #{slopgpt_forward.17} parent=0 // pred_check
    %p18 = pneg %p17
  $region19: #{slopgpt_forward.17} parent=0 // pred_check_branch
    %20 = sbr.rel (%p18) target = $region21
  $region20: #{slopgpt_forward.17} parent=0 // pred_region
    %21 = vst [vmem:[#allocation2] sm:$0xff] 0.0
    %22 = vst [vmem:[#allocation2 + $0x8] sm:$0xff] 0.0
  $region21: #{slopgpt_forward.17} parent=0 // pred_fallthru
    _
  %v23 = vld [vmem:[%s0] sm:$0xf]
  %v24 = vld [vmem:[%s0 + $0x4] sm:$0xf]
  %v25 = vld [vmem:[#allocation2] sm:$0xff]
  %v26 = vld [vmem:[#allocation2 + $0x8] sm:$0xff]
  %v27 = vld [vmem:[%s1] sm:$0xf]
  %v28 = vld [vmem:[%s1 + $0x4] sm:$0xf]
  %v29 = vld [vmem:[%s1 + $0x8] sm:$0xf]
  %v30 = vld [vmem:[%s1 + $0xc] sm:$0xf]
  %v31 = vld [vmem:[%s1 + $0x10] sm:$0xf]
  %v32 = vld [vmem:[%s1 + $0x14] sm:$0xf]
  %v33 = vld [vmem:[%s1 + $0x18] sm:$0xf]
  %v34 = vld [vmem:[%s1 + $0x1c] sm:$0xf]
  %v35 = vld [vmem:[%s1 + $0x20] sm:$0xf]
  %v36 = vld [vmem:[%s1 + $0x24] sm:$0xf]
  %v37 = vld [vmem:[%s1 + $0x28] sm:$0xf]
  %v38 = vld [vmem:[%s1 + $0x2c] sm:$0xf]
  %v39 = vld [vmem:[%s1 + $0x30] sm:$0xf]
  %v40 = vld [vmem:[%s1 + $0x34] sm:$0xf]
  %v41 = vld [vmem:[%s1 + $0x38] sm:$0xf]
  %v42 = vld [vmem:[%s1 + $0x3c] sm:$0xf]
  %v45 = vunpack.c.l.b16 %v23
  %v46 = vunpack.c.l.b16 %v24
  %v47 = vpack.c.b16 %v46, %v45
  %v65 = vunpack.c.l.b16 %v27
  %v66 = vunpack.c.l.b16 %v28
  %v67 = vunpack.c.l.b16 %v29
  %v68 = vunpack.c.l.b16 %v30
  %v69 = vunpack.c.l.b16 %v31
  %v70 = vunpack.c.l.b16 %v32
  %v71 = vunpack.c.l.b16 %v33
  %v72 = vunpack.c.l.b16 %v34
  %v73 = vunpack.c.l.b16 %v35
  %v74 = vunpack.c.l.b16 %v36
  %v75 = vunpack.c.l.b16 %v37
  %v76 = vunpack.c.l.b16 %v38
  %v77 = vunpack.c.l.b16 %v39
  %v78 = vunpack.c.l.b16 %v40
  %v79 = vunpack.c.l.b16 %v41
  %v80 = vunpack.c.l.b16 %v42
  %v81 = vpack.c.b16 %v66, %v65
  %v82 = vpack.c.b16 %v68, %v67
  %v83 = vpack.c.b16 %v70, %v69
  %v84 = vpack.c.b16 %v72, %v71
  %v85 = vpack.c.b16 %v74, %v73
  %v86 = vpack.c.b16 %v76, %v75
  %v87 = vpack.c.b16 %v78, %v77
  %v88 = vpack.c.b16 %v80, %v79
  %97 = vmatpush.bf16.msra.mxu0 %v88
  %98 = vmatpush.bf16.msra.mxu0 %v87
  %99 = vmatpush.bf16.msra.mxu0 %v86
  %100 = vmatpush.bf16.msra.mxu0 %v85
  %101 = vmatpush.bf16.msra.mxu0 %v84
  %102 = vmatpush.bf16.msra.mxu0 %v83
  %103 = vmatpush.bf16.msra.mxu0 %v82
  %104 = vmatpush.bf16.msra.mxu0 %v81
  %105 = vmatmul.bf16.gmra.mxu0 %v47
  %v106 = vpop.f32.mrf.mxu0
  %v107 = vadd.f32 0.0, %v106
  %v108 = vpop.f32.mrf.mxu0
  %v109 = vadd.f32 0.0, %v108
  %110 = vdwg.mxu0
  %v111 = vadd.f32 %v25, %v107
  %v112 = vadd.f32 %v26, %v109
  %113 = vst [vmem:[#allocation2] sm:$0xff] %v111
  %114 = vst [vmem:[#allocation2 + $0x8] sm:$0xff] %v112
  // Predicated region
  $region22: #{slopgpt_forward.17} parent=0 // pred_check
    %p115 = pneg %p17
  $region23: #{slopgpt_forward.17} parent=0 // pred_check_branch
    %117 = sbr.rel (%p115) target = $region25
  $region24: #{slopgpt_forward.17} parent=0 // pred_region
    %v118 = vld [vmem:[#allocation2] sm:$0xff]
    %v119 = vld [vmem:[#allocation2 + $0x8] sm:$0xff]
    %v120 = vld [vmem:[%s2] sm:$0x1]
    %v122 = vperm.slane %v120, 0
    %v124 = vadd.f32 %v118, %v122
    %v125 = vadd.f32 %v119, %v122
    %v126 = vxor.u32 %v124, 2147483648
    %v127 = vxor.u32 %v125, 2147483648
    %v128 = vmul.f32 %v126, 1.442695
    %v129 = vpow.pop %v128
    %v130 = vmul.f32 %v127, 1.442695
    %v131 = vpow.pop %v130
    %v132 = vadd.f32 %v129, 1.0
    %v133 = vadd.f32 %v131, 1.0
    %v134 = vrcp.pop %v132
    %v135 = vmul.f32 %v132, %v134
    %v136 = vsub.f32 1.0, %v135
    %v137 = vmul.f32 %v134, %v136
    %v138 = vadd.f32 %v134, %v137
    %vm139 = vweird.f32 %v132
    %vm140 = vweird.f32 %v134
    %vm141 = vmor %vm139, %vm140
    %v142 = vsel %vm141, %v134, %v138
    %v143 = vand.u32 2147483647, %v132
    %vm144 = vcmp.eq.f32.partialorder %v143, 8.507059e+37
    %v145 = vand.u32 %v132, 2147483648
    %v146 = vor.u32 1.1754944e-38, %v145
    %v147 = vsel %vm144, %v146, %v142
    %v148 = vmul.f32 1.0, %v147
    %v149 = vrcp.pop %v133
    %v150 = vmul.f32 %v133, %v149
    %v151 = vsub.f32 1.0, %v150
    %v152 = vmul.f32 %v149, %v151
    %v153 = vadd.f32 %v149, %v152
    %vm154 = vweird.f32 %v133
    %vm155 = vweird.f32 %v149
    %vm156 = vmor %vm154, %vm155
    %v157 = vsel %vm156, %v149, %v153
    %v158 = vand.u32 2147483647, %v133
    %vm159 = vcmp.eq.f32.partialorder %v158, 8.507059e+37
    %v160 = vand.u32 %v133, 2147483648
    %v161 = vor.u32 1.1754944e-38, %v160
    %v162 = vsel %vm159, %v161, %v157
    %v163 = vmul.f32 1.0, %v162
    %v164 = vmul.f32 %v124, %v148
    %v165 = vmul.f32 %v125, %v163
    %v166 = vld [vmem:[%s3] sm:$0xf]
    %v167 = vld [vmem:[%s3 + $0x4] sm:$0xf]
    %v168 = vunpack.c.l.bf16 %v166
    %v169 = vunpack.c.l.bf16 %v167
    %v170 = vmul.f32 %v164, %v168
    %v171 = vmul.f32 %v165, %v169
    %v172 = vpack.c.bf16 %v170, %v170
    %v173 = vpack.c.bf16 %v171, %v171
    %174 = vst [vmem:[%s4] sm:$0xf] %v172
    %175 = vst [vmem:[%s4 + $0x4] sm:$0xf] %v173
  $region25: #{slopgpt_forward.17} parent=0 // pred_fallthru
    _
  // Predicated region
  $region26: #{slopgpt_forward.17} parent=0 // pred_check
    _
  $region27: #{slopgpt_forward.17} parent=0 // pred_check_branch
    %177 = sbr.rel (0) target = $region29
  $region28: #{slopgpt_forward.17} parent=0 // pred_region
    _
  $region29: #{slopgpt_forward.17} parent=0 // pred_fallthru
    _
  // Predicated region
  $region30: #{slopgpt_forward.17} parent=0 // pred_check
    _
  $region31: #{slopgpt_forward.17} parent=0 // pred_check_branch
    %179 = sbr.rel (0) target = $region33
  $region32: #{slopgpt_forward.17} parent=0 // pred_region
    _
  $region33: #{slopgpt_forward.17} parent=0 // pred_fallthru
    _

// kernel: slopgpt_forward.18
$region0: #{slopgpt_forward.18}
  #allocation0 [shape = 'u32[]', space=smem, size = 0x4, offset = 0x4, fixed_abs, tag = 'smem constant byte address 0x4 - core index']
  #allocation1 [shape = 'u32[72,128]{1,0:T(1,128)}', space=vmem, size = 0x9000, scoped, tag = 'internal scratch']
  #allocation2 [shape = 'f32[16,32]{1,0:T(8,128)}', space=vmem, size = 0x2000, scoped, tag = 'scratch operand']
  %s0 = inlined_call_operand.vmem [shape: bf16[16,128], index: 0, kind: input, shape index: {}]
  %s1 = inlined_call_operand.vmem [shape: bf16[128,32], index: 1, kind: input, shape index: {}]
  %s2 = inlined_call_operand.vmem [shape: f32[1,32], index: 2, kind: input, shape index: {}]
  %s3 = inlined_call_operand.vmem [shape: bf16[16,32], index: 3, kind: input, shape index: {}]
  %s4 = inlined_call_operand.vmem [shape: bf16[16,32], index: 4, kind: output, shape index: {}]
  %s5 = sld [smem:[#allocation0]]
  $region34: #{slopgpt_forward.18} parent=0
    _
  %s7 = ssub.s32 1, %s5
  %s8 = scalar_select 0, %s7, %s5
  // Predicated region
  $region2: #{slopgpt_forward.18} parent=0 // pred_check
    _
  $region3: #{slopgpt_forward.18} parent=0 // pred_check_branch
    %10 = sbr.rel (0) target = $region5
  $region4: #{slopgpt_forward.18} parent=0 // pred_region
    _
  $region5: #{slopgpt_forward.18} parent=0 // pred_fallthru
    _
  // Predicated region
  $region6: #{slopgpt_forward.18} parent=0 // pred_check
    _
  $region7: #{slopgpt_forward.18} parent=0 // pred_check_branch
    %12 = sbr.rel (0) target = $region9
  $region8: #{slopgpt_forward.18} parent=0 // pred_region
    _
  $region9: #{slopgpt_forward.18} parent=0 // pred_fallthru
    _
  // Predicated region
  $region10: #{slopgpt_forward.18} parent=0 // pred_check
    _
  $region11: #{slopgpt_forward.18} parent=0 // pred_check_branch
    %14 = sbr.rel (0) target = $region13
  $region12: #{slopgpt_forward.18} parent=0 // pred_region
    _
  $region13: #{slopgpt_forward.18} parent=0 // pred_fallthru
    _
  // Predicated region
  $region14: #{slopgpt_forward.18} parent=0 // pred_check
    _
  $region15: #{slopgpt_forward.18} parent=0 // pred_check_branch
    %16 = sbr.rel (0) target = $region17
  $region16: #{slopgpt_forward.18} parent=0 // pred_region
    _
  $region17: #{slopgpt_forward.18} parent=0 // pred_fallthru
    _
  %p17 = scmp.eq.s32.totalorder 0, 0
  // Predicated region
  $region18: #{slopgpt_forward.18} parent=0 // pred_check
    %p18 = pneg %p17
  $region19: #{slopgpt_forward.18} parent=0 // pred_check_branch
    %20 = sbr.rel (%p18) target = $region21
  $region20: #{slopgpt_forward.18} parent=0 // pred_region
    %vm21 = vcmask 261120
    %22 = vst.msk [vmem:[#allocation2] sm:$0xff] %vm21, 0.0
    %23 = vst.msk [vmem:[#allocation2 + $0x8] sm:$0xff] %vm21, 0.0
  $region21: #{slopgpt_forward.18} parent=0 // pred_fallthru
    _
  %v24 = vld [vmem:[%s0] sm:$0xf]
  %v25 = vld [vmem:[%s0 + $0x4] sm:$0xf]
  %v26 = vld [vmem:[#allocation2] sm:$0xff]
  %v27 = vld [vmem:[#allocation2 + $0x8] sm:$0xff]
  %v28 = vld [vmem:[%s1] sm:$0xf]
  %v29 = vld [vmem:[%s1 + $0x4] sm:$0xf]
  %v30 = vld [vmem:[%s1 + $0x8] sm:$0xf]
  %v31 = vld [vmem:[%s1 + $0xc] sm:$0xf]
  %v32 = vld [vmem:[%s1 + $0x10] sm:$0xf]
  %v33 = vld [vmem:[%s1 + $0x14] sm:$0xf]
  %v34 = vld [vmem:[%s1 + $0x18] sm:$0xf]
  %v35 = vld [vmem:[%s1 + $0x1c] sm:$0xf]
  %v36 = vld [vmem:[%s1 + $0x20] sm:$0xf]
  %v37 = vld [vmem:[%s1 + $0x24] sm:$0xf]
  %v38 = vld [vmem:[%s1 + $0x28] sm:$0xf]
  %v39 = vld [vmem:[%s1 + $0x2c] sm:$0xf]
  %v40 = vld [vmem:[%s1 + $0x30] sm:$0xf]
  %v41 = vld [vmem:[%s1 + $0x34] sm:$0xf]
  %v42 = vld [vmem:[%s1 + $0x38] sm:$0xf]
  %v43 = vld [vmem:[%s1 + $0x3c] sm:$0xf]
  %v46 = vunpack.c.l.b16 %v24
  %v47 = vunpack.c.l.b16 %v25
  %v48 = vpack.c.b16 %v47, %v46
  %v66 = vunpack.c.l.b16 %v28
  %v67 = vunpack.c.l.b16 %v29
  %v68 = vunpack.c.l.b16 %v30
  %v69 = vunpack.c.l.b16 %v31
  %v70 = vunpack.c.l.b16 %v32
  %v71 = vunpack.c.l.b16 %v33
  %v72 = vunpack.c.l.b16 %v34
  %v73 = vunpack.c.l.b16 %v35
  %v74 = vunpack.c.l.b16 %v36
  %v75 = vunpack.c.l.b16 %v37
  %v76 = vunpack.c.l.b16 %v38
  %v77 = vunpack.c.l.b16 %v39
  %v78 = vunpack.c.l.b16 %v40
  %v79 = vunpack.c.l.b16 %v41
  %v80 = vunpack.c.l.b16 %v42
  %v81 = vunpack.c.l.b16 %v43
  %v82 = vpack.c.b16 %v67, %v66
  %v83 = vpack.c.b16 %v69, %v68
  %v84 = vpack.c.b16 %v71, %v70
  %v85 = vpack.c.b16 %v73, %v72
  %v86 = vpack.c.b16 %v75, %v74
  %v87 = vpack.c.b16 %v77, %v76
  %v88 = vpack.c.b16 %v79, %v78
  %v89 = vpack.c.b16 %v81, %v80
  %98 = vmatpush.bf16.msra.mxu0 %v89
  %99 = vmatpush.bf16.msra.mxu0 %v88
  %100 = vmatpush.bf16.msra.mxu0 %v87
  %101 = vmatpush.bf16.msra.mxu0 %v86
  %102 = vmatpush.bf16.msra.mxu0 %v85
  %103 = vmatpush.bf16.msra.mxu0 %v84
  %104 = vmatpush.bf16.msra.mxu0 %v83
  %105 = vmatpush.bf16.msra.mxu0 %v82
  %106 = vmatmul.bf16.gmra.mxu0 %v48
  %v107 = vpop.f32.mrf.mxu0
  %v108 = vadd.f32 0.0, %v107
  %v109 = vpop.f32.mrf.mxu0
  %v110 = vadd.f32 0.0, %v109
  %111 = vdwg.mxu0
  %v112 = vadd.f32 %v26, %v108
  %v113 = vadd.f32 %v27, %v110
  %vm114 = vcmask 261120
  %115 = vst.msk [vmem:[#allocation2] sm:$0xff] %vm114, %v112
  %116 = vst.msk [vmem:[#allocation2 + $0x8] sm:$0xff] %vm114, %v113
  // Predicated region
  $region22: #{slopgpt_forward.18} parent=0 // pred_check
    %p117 = pneg %p17
  $region23: #{slopgpt_forward.18} parent=0 // pred_check_branch
    %119 = sbr.rel (%p117) target = $region25
  $region24: #{slopgpt_forward.18} parent=0 // pred_region
    %v120 = vld [vmem:[#allocation2] sm:$0xff]
    %v121 = vld [vmem:[#allocation2 + $0x8] sm:$0xff]
    %v122 = vld [vmem:[%s2] sm:$0x1]
    %v124 = vperm.slane %v122, 0
    %v126 = vadd.f32 %v120, %v124
    %v127 = vadd.f32 %v121, %v124
    %v128 = vld [vmem:[%s3] sm:$0xf]
    %v129 = vld [vmem:[%s3 + $0x4] sm:$0xf]
    %v130 = vunpack.c.l.bf16 %v128
    %v131 = vunpack.c.l.bf16 %v129
    %v132 = vadd.f32 %v126, %v130
    %v133 = vadd.f32 %v127, %v131
    %v134 = vpack.c.bf16 %v132, %v132
    %v135 = vpack.c.bf16 %v133, %v133
    %vm136 = vcmask 257024
    %137 = vst.msk [vmem:[%s4] sm:$0xf] %vm136, %v134
    %138 = vst.msk [vmem:[%s4 + $0x4] sm:$0xf] %vm136, %v135
  $region25: #{slopgpt_forward.18} parent=0 // pred_fallthru
    _
  // Predicated region
  $region26: #{slopgpt_forward.18} parent=0 // pred_check
    _
  $region27: #{slopgpt_forward.18} parent=0 // pred_check_branch
    %140 = sbr.rel (0) target = $region29
  $region28: #{slopgpt_forward.18} parent=0 // pred_region
    _
  $region29: #{slopgpt_forward.18} parent=0 // pred_fallthru
    _
  // Predicated region
  $region30: #{slopgpt_forward.18} parent=0 // pred_check
    _
  $region31: #{slopgpt_forward.18} parent=0 // pred_check_branch
    %142 = sbr.rel (0) target = $region33
  $region32: #{slopgpt_forward.18} parent=0 // pred_region
    _
  $region33: #{slopgpt_forward.18} parent=0 // pred_fallthru
    _

// kernel: slopgpt_forward.24
$region0: #{slopgpt_forward.24}
  #allocation0 [shape = 'u32[]', space=smem, size = 0x4, offset = 0x4, fixed_abs, tag = 'smem constant byte address 0x4 - core index']
  #allocation1 [shape = 'u32[72,128]{1,0:T(1,128)}', space=vmem, size = 0x9000, scoped, tag = 'internal scratch']
  #allocation2 [shape = 'f32[16,32]{1,0:T(8,128)}', space=vmem, size = 0x2000, scoped, tag = 'scratch operand']
  %s0 = inlined_call_operand.vmem [shape: bf16[16,128], index: 0, kind: input, shape index: {}]
  %s1 = inlined_call_operand.vmem [shape: bf16[128,32], index: 1, kind: input, shape index: {}]
  %s2 = inlined_call_operand.vmem [shape: f32[1,32], index: 2, kind: input, shape index: {}]
  %s3 = inlined_call_operand.vmem [shape: bf16[16,32], index: 3, kind: input, shape index: {}]
  %s4 = inlined_call_operand.vmem [shape: f32[1,32], index: 4, kind: input, shape index: {}]
  %s5 = inlined_call_operand.vmem [shape: bf16[16,32], index: 5, kind: output, shape index: {}]
  %s6 = sld [smem:[#allocation0]]
  $region38: #{slopgpt_forward.24} parent=0
    _
  %s8 = ssub.s32 1, %s6
  %s9 = scalar_select 0, %s8, %s6
  // Predicated region
  $region2: #{slopgpt_forward.24} parent=0 // pred_check
    _
  $region3: #{slopgpt_forward.24} parent=0 // pred_check_branch
    %11 = sbr.rel (0) target = $region5
  $region4: #{slopgpt_forward.24} parent=0 // pred_region
    _
  $region5: #{slopgpt_forward.24} parent=0 // pred_fallthru
    _
  // Predicated region
  $region6: #{slopgpt_forward.24} parent=0 // pred_check
    _
  $region7: #{slopgpt_forward.24} parent=0 // pred_check_branch
    %13 = sbr.rel (0) target = $region9
  $region8: #{slopgpt_forward.24} parent=0 // pred_region
    _
  $region9: #{slopgpt_forward.24} parent=0 // pred_fallthru
    _
  // Predicated region
  $region10: #{slopgpt_forward.24} parent=0 // pred_check
    _
  $region11: #{slopgpt_forward.24} parent=0 // pred_check_branch
    %15 = sbr.rel (0) target = $region13
  $region12: #{slopgpt_forward.24} parent=0 // pred_region
    _
  $region13: #{slopgpt_forward.24} parent=0 // pred_fallthru
    _
  // Predicated region
  $region14: #{slopgpt_forward.24} parent=0 // pred_check
    _
  $region15: #{slopgpt_forward.24} parent=0 // pred_check_branch
    %17 = sbr.rel (0) target = $region17
  $region16: #{slopgpt_forward.24} parent=0 // pred_region
    _
  $region17: #{slopgpt_forward.24} parent=0 // pred_fallthru
    _
  // Predicated region
  $region18: #{slopgpt_forward.24} parent=0 // pred_check
    _
  $region19: #{slopgpt_forward.24} parent=0 // pred_check_branch
    %19 = sbr.rel (0) target = $region21
  $region20: #{slopgpt_forward.24} parent=0 // pred_region
    _
  $region21: #{slopgpt_forward.24} parent=0 // pred_fallthru
    _
  %p20 = scmp.eq.s32.totalorder 0, 0
  // Predicated region
  $region22: #{slopgpt_forward.24} parent=0 // pred_check
    %p21 = pneg %p20
  $region23: #{slopgpt_forward.24} parent=0 // pred_check_branch
    %23 = sbr.rel (%p21) target = $region25
  $region24: #{slopgpt_forward.24} parent=0 // pred_region
    %vm24 = vcmask 261120
    %25 = vst.msk [vmem:[#allocation2] sm:$0xff] %vm24, 0.0
    %26 = vst.msk [vmem:[#allocation2 + $0x8] sm:$0xff] %vm24, 0.0
  $region25: #{slopgpt_forward.24} parent=0 // pred_fallthru
    _
  %v27 = vld [vmem:[%s0] sm:$0xf]
  %v28 = vld [vmem:[%s0 + $0x4] sm:$0xf]
  %v29 = vld [vmem:[#allocation2] sm:$0xff]
  %v30 = vld [vmem:[#allocation2 + $0x8] sm:$0xff]
  %v31 = vld [vmem:[%s1] sm:$0xf]
  %v32 = vld [vmem:[%s1 + $0x4] sm:$0xf]
  %v33 = vld [vmem:[%s1 + $0x8] sm:$0xf]
  %v34 = vld [vmem:[%s1 + $0xc] sm:$0xf]
  %v35 = vld [vmem:[%s1 + $0x10] sm:$0xf]
  %v36 = vld [vmem:[%s1 + $0x14] sm:$0xf]
  %v37 = vld [vmem:[%s1 + $0x18] sm:$0xf]
  %v38 = vld [vmem:[%s1 + $0x1c] sm:$0xf]
  %v39 = vld [vmem:[%s1 + $0x20] sm:$0xf]
  %v40 = vld [vmem:[%s1 + $0x24] sm:$0xf]
  %v41 = vld [vmem:[%s1 + $0x28] sm:$0xf]
  %v42 = vld [vmem:[%s1 + $0x2c] sm:$0xf]
  %v43 = vld [vmem:[%s1 + $0x30] sm:$0xf]
  %v44 = vld [vmem:[%s1 + $0x34] sm:$0xf]
  %v45 = vld [vmem:[%s1 + $0x38] sm:$0xf]
  %v46 = vld [vmem:[%s1 + $0x3c] sm:$0xf]
  %v49 = vunpack.c.l.b16 %v27
  %v50 = vunpack.c.l.b16 %v28
  %v51 = vpack.c.b16 %v50, %v49
  %v69 = vunpack.c.l.b16 %v31
  %v70 = vunpack.c.l.b16 %v32
  %v71 = vunpack.c.l.b16 %v33
  %v72 = vunpack.c.l.b16 %v34
  %v73 = vunpack.c.l.b16 %v35
  %v74 = vunpack.c.l.b16 %v36
  %v75 = vunpack.c.l.b16 %v37
  %v76 = vunpack.c.l.b16 %v38
  %v77 = vunpack.c.l.b16 %v39
  %v78 = vunpack.c.l.b16 %v40
  %v79 = vunpack.c.l.b16 %v41
  %v80 = vunpack.c.l.b16 %v42
  %v81 = vunpack.c.l.b16 %v43
  %v82 = vunpack.c.l.b16 %v44
  %v83 = vunpack.c.l.b16 %v45
  %v84 = vunpack.c.l.b16 %v46
  %v85 = vpack.c.b16 %v70, %v69
  %v86 = vpack.c.b16 %v72, %v71
  %v87 = vpack.c.b16 %v74, %v73
  %v88 = vpack.c.b16 %v76, %v75
  %v89 = vpack.c.b16 %v78, %v77
  %v90 = vpack.c.b16 %v80, %v79
  %v91 = vpack.c.b16 %v82, %v81
  %v92 = vpack.c.b16 %v84, %v83
  %101 = vmatpush.bf16.msra.mxu0 %v92
  %102 = vmatpush.bf16.msra.mxu0 %v91
  %103 = vmatpush.bf16.msra.mxu0 %v90
  %104 = vmatpush.bf16.msra.mxu0 %v89
  %105 = vmatpush.bf16.msra.mxu0 %v88
  %106 = vmatpush.bf16.msra.mxu0 %v87
  %107 = vmatpush.bf16.msra.mxu0 %v86
  %108 = vmatpush.bf16.msra.mxu0 %v85
  %109 = vmatmul.bf16.gmra.mxu0 %v51
  %v110 = vpop.f32.mrf.mxu0
  %v111 = vadd.f32 0.0, %v110
  %v112 = vpop.f32.mrf.mxu0
  %v113 = vadd.f32 0.0, %v112
  %114 = vdwg.mxu0
  %v115 = vadd.f32 %v29, %v111
  %v116 = vadd.f32 %v30, %v113
  %vm117 = vcmask 261120
  %118 = vst.msk [vmem:[#allocation2] sm:$0xff] %vm117, %v115
  %119 = vst.msk [vmem:[#allocation2 + $0x8] sm:$0xff] %vm117, %v116
  // Predicated region
  $region26: #{slopgpt_forward.24} parent=0 // pred_check
    %p120 = pneg %p20
  $region27: #{slopgpt_forward.24} parent=0 // pred_check_branch
    %122 = sbr.rel (%p120) target = $region29
  $region28: #{slopgpt_forward.24} parent=0 // pred_region
    %v123 = vld [vmem:[#allocation2] sm:$0xff]
    %v124 = vld [vmem:[#allocation2 + $0x8] sm:$0xff]
    %v125 = vld [vmem:[%s2] sm:$0x1]
    %v127 = vperm.slane %v125, 0
    %v129 = vadd.f32 %v123, %v127
    %v130 = vadd.f32 %v124, %v127
    %v131 = vld [vmem:[%s3] sm:$0xf]
    %v132 = vld [vmem:[%s3 + $0x4] sm:$0xf]
    %v133 = vunpack.c.l.bf16 %v131
    %v134 = vunpack.c.l.bf16 %v132
    %v135 = vadd.f32 %v129, %v133
    %v136 = vadd.f32 %v130, %v134
    %v137 = vmul.f32 %v135, %v135
    %v138 = vmul.f32 %v136, %v136
    %v139 = vsel %vm117, %v137, 0.0
    %140 = vadd.xlane.f32.xlu0 %v139
    %v141 = vpop.xlane.xlu0 %140
    %v142 = vsel %vm117, %v138, 0.0
    %143 = vadd.xlane.f32.xlu0 %v142
    %v144 = vpop.xlane.xlu0 %143
    %v145 = vrcp.pop 32.0
    %v146 = vmul.f32 32.0, %v145
    %v147 = vsub.f32 1.0, %v146
    %v148 = vmul.f32 %v145, %v147
    %v149 = vadd.f32 %v145, %v148
    %vm150 = vweird.f32 %v145
    %v151 = vsel %vm150, %v145, %v149
    %v152 = vmul.f32 %v141, %v151
    %v153 = vmul.f32 %v144, %v151
    %v154 = vadd.f32 %v152, 1e-06
    %v155 = vadd.f32 %v153, 1e-06
    %v156 = vrsqrt.pop %v154
    %v157 = vmul.f32 %v156, %v154
    %v158 = vmul.f32 %v157, %v156
    %v159 = vmul.f32 0.5, %v158
    %v160 = vsub.f32 1.5, %v159
    %v161 = vmul.f32 %v156, %v160
    %vm162 = vweird.f32 %v154
    %vm163 = vweird.f32 %v156
    %vm164 = vmor %vm162, %vm163
    %v165 = vsel %vm164, %v156, %v161
    %v166 = vrsqrt.pop %v155
    %v167 = vmul.f32 %v166, %v155
    %v168 = vmul.f32 %v167, %v166
    %v169 = vmul.f32 0.5, %v168
    %v170 = vsub.f32 1.5, %v169
    %v171 = vmul.f32 %v166, %v170
    %vm172 = vweird.f32 %v155
    %vm173 = vweird.f32 %v166
    %vm174 = vmor %vm172, %vm173
    %v175 = vsel %vm174, %v166, %v171
    %v176 = vmul.f32 %v135, %v165
    %v177 = vmul.f32 %v136, %v175
    %v178 = vld [vmem:[%s4] sm:$0x1]
    %v180 = vperm.slane %v178, 0
    %v182 = vmul.f32 %v176, %v180
    %v183 = vmul.f32 %v177, %v180
    %v184 = vpack.c.bf16 %v182, %v182
    %v185 = vpack.c.bf16 %v183, %v183
    %vm186 = vcmask 257024
    %187 = vst.msk [vmem:[%s5] sm:$0xf] %vm186, %v184
    %188 = vst.msk [vmem:[%s5 + $0x4] sm:$0xf] %vm186, %v185
  $region29: #{slopgpt_forward.24} parent=0 // pred_fallthru
    _
  // Predicated region
  $region30: #{slopgpt_forward.24} parent=0 // pred_check
    _
  $region31: #{slopgpt_forward.24} parent=0 // pred_check_branch
    %190 = sbr.rel (0) target = $region33
  $region32: #{slopgpt_forward.24} parent=0 // pred_region
    _
  $region33: #{slopgpt_forward.24} parent=0 // pred_fallthru
    _
  // Predicated region
  $region34: #{slopgpt_forward.24} parent=0 // pred_check
    _
  $region35: #{slopgpt_forward.24} parent=0 // pred_check_branch
    %192 = sbr.rel (0) target = $region37
  $region36: #{slopgpt_forward.24} parent=0 // pred_region
    _
  $region37: #{slopgpt_forward.24} parent=0 // pred_fallthru
    _

// kernel: slopgpt_forward.25
$region0: #{slopgpt_forward.25}
  #allocation0 [shape = 'u32[]', space=smem, size = 0x4, offset = 0x4, fixed_abs, tag = 'smem constant byte address 0x4 - core index']
  #allocation1 [shape = 'u32[72,128]{1,0:T(1,128)}', space=vmem, size = 0x9000, scoped, tag = 'internal scratch']
  #allocation2 [shape = 'f32[16,64]{1,0:T(8,128)}', space=vmem, size = 0x2000, scoped, tag = 'scratch operand']
  %s0 = inlined_call_operand.vmem [shape: bf16[16,32], index: 0, kind: input, shape index: {}]
  %s1 = inlined_call_operand.vmem [shape: bf16[32,64], index: 1, kind: input, shape index: {}]
  %s2 = inlined_call_operand.hbm [shape: f32[16,64], index: 2, kind: output, shape index: {}]
  %s3 = sld [smem:[#allocation0]]
  $region26: #{slopgpt_forward.25} parent=0
    _
  %s5 = ssub.s32 1, %s3
  %s6 = scalar_select 0, %s5, %s3
  $region1: #{slopgpt_forward.25} parent=0
    #allocation3 [shape = 'u8[8192]{0}', space=vmem, size = 0x2000, scoped, tag = 'output window, operand 0, single buffered']
    #allocation4 [shape = 's32[1]{0}', space=sflag, size = 0x4, scoped, tag = 'scoped memory for slopgpt_forward.25']
    %7 = vsyncpa [#allocation4], 0
    // Predicated region
    $region2: #{slopgpt_forward.25} parent=1 // pred_check
      _
    $region3: #{slopgpt_forward.25} parent=1 // pred_check_branch
      %9 = sbr.rel (0) target = $region5
    $region4: #{slopgpt_forward.25} parent=1 // pred_region
      _
    $region5: #{slopgpt_forward.25} parent=1 // pred_fallthru
      _
    // Predicated region
    $region6: #{slopgpt_forward.25} parent=1 // pred_check
      _
    $region7: #{slopgpt_forward.25} parent=1 // pred_check_branch
      %11 = sbr.rel (0) target = $region9
    $region8: #{slopgpt_forward.25} parent=1 // pred_region
      _
    $region9: #{slopgpt_forward.25} parent=1 // pred_fallthru
      _
    %p13 = scmp.eq.s32.totalorder 0, 0
    // Predicated region
    $region10: #{slopgpt_forward.25} parent=1 // pred_check
      %p14 = pneg %p13
    $region11: #{slopgpt_forward.25} parent=1 // pred_check_branch
      %16 = sbr.rel (%p14) target = $region13
    $region12: #{slopgpt_forward.25} parent=1 // pred_region
      %vm17 = vcmask 523264
      %18 = vst.msk [vmem:[#allocation2] sm:$0xff] %vm17, 0.0
      %19 = vst.msk [vmem:[#allocation2 + $0x8] sm:$0xff] %vm17, 0.0
    $region13: #{slopgpt_forward.25} parent=1 // pred_fallthru
      _
    %v20 = vld [vmem:[%s0] sm:$0xf]
    %v21 = vld [vmem:[%s0 + $0x4] sm:$0xf]
    %v22 = vld [vmem:[#allocation2] sm:$0xff]
    %v23 = vld [vmem:[#allocation2 + $0x8] sm:$0xff]
    %v24 = vld [vmem:[%s1] sm:$0xf]
    %v25 = vld [vmem:[%s1 + $0x4] sm:$0xf]
    %v26 = vld [vmem:[%s1 + $0x8] sm:$0xf]
    %v27 = vld [vmem:[%s1 + $0xc] sm:$0xf]
    %v30 = vunpack.c.l.b16 %v20
    %v31 = vunpack.c.l.b16 %v21
    %v32 = vpack.c.b16 %v31, %v30
    %v37 = vunpack.c.l.b16 %v24
    %v38 = vunpack.c.l.b16 %v25
    %v39 = vunpack.c.l.b16 %v26
    %v40 = vunpack.c.l.b16 %v27
    %v41 = vpack.c.b16 %v38, %v37
    %v42 = vpack.c.b16 %v40, %v39
    %vm45 = vcmask 261120
    %v47 = vsel %vm45, %v32, 0
    %49 = vmatpush.bf16.msra.mxu0 0
    %50 = vmatpush.bf16.msra.mxu0 0
    %51 = vmatpush.bf16.msra.mxu0 0
    %52 = vmatpush.bf16.msra.mxu0 0
    %53 = vmatpush.bf16.msra.mxu0 0
    %54 = vmatpush.bf16.msra.mxu0 0
    %55 = vmatpush.bf16.msra.mxu0 %v42
    %56 = vmatpush.bf16.msra.mxu0 %v41
    %57 = vmatmul.bf16.gmra.mxu0 %v47
    %v58 = vpop.f32.mrf.mxu0
    %v59 = vadd.f32 0.0, %v58
    %v60 = vpop.f32.mrf.mxu0
    %v61 = vadd.f32 0.0, %v60
    %62 = vdwg.mxu0
    %v63 = vadd.f32 %v22, %v59
    %v64 = vadd.f32 %v23, %v61
    %vm65 = vcmask 523264
    %66 = vst.msk [vmem:[#allocation2] sm:$0xff] %vm65, %v63
    %67 = vst.msk [vmem:[#allocation2 + $0x8] sm:$0xff] %vm65, %v64
    // Predicated region
    $region14: #{slopgpt_forward.25} parent=1 // pred_check
      %p68 = pneg %p13
    $region15: #{slopgpt_forward.25} parent=1 // pred_check_branch
      %70 = sbr.rel (%p68) target = $region17
    $region16: #{slopgpt_forward.25} parent=1 // pred_region
      %v71 = vld [vmem:[#allocation2] sm:$0xff]
      %v72 = vld [vmem:[#allocation2 + $0x8] sm:$0xff]
      %73 = vst.msk [vmem:[#allocation3] sm:$0xff] %vm65, %v71
      %74 = vst.msk [vmem:[#allocation3 + $0x8] sm:$0xff] %vm65, %v72
    $region17: #{slopgpt_forward.25} parent=1 // pred_fallthru
      _
    // Predicated region
    $region18: #{slopgpt_forward.25} parent=1 // pred_check
      _
    $region19: #{slopgpt_forward.25} parent=1 // pred_check_branch
      %76 = sbr.rel (0) target = $region21
    $region20: #{slopgpt_forward.25} parent=1 // pred_region
      %78 = vsyncadd [#allocation4], 0
      %s79 = sshll.u32 [#allocation3], 4
      %s80 = int_to_ptr.vmem [resolvable:$true] %s79
      %s81 = sshll.u32 %s2, 4
      %s82 = int_to_ptr.hbm [resolvable:$true] %s81
      %87 = dma.vmem_to_hbm [thread:$0]  %s80, 256, %s82, [#allocation4], 128, 128, 8
    $region21: #{slopgpt_forward.25} parent=1 // pred_fallthru
      _
    // Predicated region
    $region22: #{slopgpt_forward.25} parent=1 // pred_check
      _
    $region23: #{slopgpt_forward.25} parent=1 // pred_check_branch
      %89 = sbr.rel (0) target = $region25
    $region24: #{slopgpt_forward.25} parent=1 // pred_region
      %91 = dma.done [#allocation4], 256
    $region25: #{slopgpt_forward.25} parent=1 // pred_fallthru
      _
    %92 = vsyncpa [#allocation4], 1

</llo_original>
